<compile_context>
chip_gen: v7x
topology: tpu7x:2x2x1
jax: 0.10.0
libtpu: 0.0.40
codegen_flags: <defaults>
</compile_context>

<pallas_src>
import math
import functools

import jax
import jax.numpy as jnp
from jax.experimental import pallas as pl
from jax.experimental.pallas import tpu as pltpu


# --------------------------------------------------------------------------------------
# Helpers
# --------------------------------------------------------------------------------------
def _layernorm(z, gamma, beta, eps=1e-5):
    mu = jnp.mean(z, axis=-1, keepdims=True)
    var = jnp.mean((z - mu) ** 2, axis=-1, keepdims=True)
    return (z - mu) * jax.lax.rsqrt(var + eps) * gamma + beta


def _largest_divisor_leq(n, cap):
    for d in range(min(n, cap), 0, -1):
        if n % d == 0:
            return d
    return 1


def _vmem_limit_bytes():
    # Raise the scoped-VMEM ceiling (defaults: 16 MiB v5e / 32 MiB v6e,v7x), leaving
    # headroom below the physical capacity (128 MiB v5e/v6e, 64 MiB v7x).
    try:
        cap = pltpu.get_tpu_info().vmem_capacity_bytes
        return int(min(100 << 20, cap - (8 << 20)))
    except Exception:
        return 64 << 20


# --------------------------------------------------------------------------------------
# Pallas kernels
# --------------------------------------------------------------------------------------
def fused_decoder_kernel(x_ref, wqkv_ref, wproj_ref, bproj_ref,
                         w1_ref, b1_ref, w2_ref, b2_ref,
                         g1_ref, be1_ref, g2_ref, be2_ref,
                         y_ref, attn_ref, head_buf,
                         *, n_head, hs_pad):
    l = pl.program_id(1)

    # Layer 0 seeds the resident activation.  The y block index is constant along
    # the (arbitrary) layer axis, so the (Bt, T, C) activation lives in VMEM across
    # all layer iterations for this batch block and is written to HBM once.
    @pl.when(l == 0)
    def _():
        y_ref[...] = x_ref[...]

    x = y_ref[...]                                   # (Bt, T, C) f32 residual stream
    Bt, T, C = x.shape
    Hp = n_head * hs_pad

    x2 = x.reshape(Bt * T, C)

    # Fused QKV: one wide bf16 MXU matmul (scale already folded into Q columns).
    qkv = jnp.dot(x2.astype(jnp.bfloat16), wqkv_ref[...],
                  preferred_element_type=jnp.float32)          # (Bt*T, 3*Hp) f32
    qkv = qkv.reshape(Bt, T, 3 * Hp).astype(jnp.bfloat16)

    # Additive causal mask built in-kernel (finite -1e30; causal rows are never
    # fully masked, so exp/normalize cannot produce NaN/garbage rows).
    row = jax.lax.broadcasted_iota(jnp.int32, (T, T), 0)
    col = jax.lax.broadcasted_iota(jnp.int32, (T, T), 1)
    neg_mask = jnp.where(col <= row, 0.0, -1e30).astype(jnp.float32)

    for h in range(n_head):                          # n_head static -> unrolled
        off = h * hs_pad                             # 128-aligned lane offsets
        q = qkv[:, :, off:off + hs_pad]
        k = qkv[:, :, Hp + off:Hp + off + hs_pad]
        v = qkv[:, :, 2 * Hp + off:2 * Hp + off + hs_pad]

        # Contract the head dim of q and k directly (no explicit k.T transpose).
        s = jnp.einsum('bqd,bkd->bqk', q, k,
                       preferred_element_type=jnp.float32) + neg_mask[None]
        s = s - jnp.max(s, axis=-1, keepdims=True)
        p = jnp.exp(s)
        p = p / jnp.sum(p, axis=-1, keepdims=True)   # exact softmax (torch parity)

        # Stream this head's probabilities straight to the output (full-lane store).
        attn_ref[:, h] = p

        pv = jnp.einsum('bqk,bkd->bqd', p.astype(jnp.bfloat16), v,
                        preferred_element_type=jnp.float32)    # (Bt, T, hs_pad)
        # Stage the head output at its lane offset; single projection matmul later.
        head_buf[:, :, off:off + hs_pad] = pv.astype(jnp.bfloat16)

    # One full-depth output projection for all heads (padded rows of wproj are zero).
    attn_out = jnp.dot(head_buf[...].reshape(Bt * T, Hp), wproj_ref[...],
                       preferred_element_type=jnp.float32) + bproj_ref[...]

    # residual + layernorm1
    h1 = _layernorm(x2 + attn_out, g1_ref[...], be1_ref[...])

    # feed-forward: relu(h1 @ W1 + b1) @ W2 + b2 (bf16 MXU inputs, f32 accumulation)
    f = jnp.maximum(jnp.dot(h1.astype(jnp.bfloat16), w1_ref[...],
                            preferred_element_type=jnp.float32) + b1_ref[...], 0.0)
    f = jnp.dot(f.astype(jnp.bfloat16), w2_ref[...],
                preferred_element_type=jnp.float32) + b2_ref[...]

    # residual + layernorm2 -> write back into the resident activation
    y_ref[...] = _layernorm(h1 + f, g2_ref[...], be2_ref[...]).reshape(Bt, T, C)


def lm_head_kernel(x_ref, w_ref, b_ref, o_ref):
    o_ref[...] = jnp.dot(x_ref[...], w_ref[...],
                         preferred_element_type=jnp.float32) + b_ref[...]


# --------------------------------------------------------------------------------------
# Wrappers around pallas_call
# --------------------------------------------------------------------------------------
def run_decoder_stack(x, sp, n_head, hs_pad, block_b=None):
    """All decoder layers in one pallas_call. grid = (B/Bt, n_layer)."""
    B, T, C = x.shape
    n_layer = sp["wqkv"].shape[0]
    Bt = block_b if block_b is not None else _largest_divisor_leq(B, 8)
    assert B % Bt == 0

    kernel = functools.partial(fused_decoder_kernel, n_head=n_head, hs_pad=hs_pad)

    def layer_spec(a):
        nd = a.ndim
        # select one layer slab; leading layer dim squeezed out of the kernel ref
        return pl.BlockSpec((None,) + a.shape[1:],
                            lambda b, l, _n=nd: (l,) + (0,) * (_n - 1))

    in_specs = [
        pl.BlockSpec((Bt, T, C), lambda b, l: (b, 0, 0)),    # x (seeds layer 0)
        layer_spec(sp["wqkv"]), layer_spec(sp["wproj"]), layer_spec(sp["bproj"]),
        layer_spec(sp["w1"]), layer_spec(sp["b1"]),
        layer_spec(sp["w2"]), layer_spec(sp["b2"]),
        layer_spec(sp["g1"]), layer_spec(sp["be1"]),
        layer_spec(sp["g2"]), layer_spec(sp["be2"]),
    ]
    out_specs = (
        # resident across the (arbitrary) layer axis -> activation stays in VMEM
        pl.BlockSpec((Bt, T, C), lambda b, l: (b, 0, 0)),
        # per-(b,l) attention-probability slab; per-head stores hit full (T,T) planes
        pl.BlockSpec((Bt, None, n_head, T, T), lambda b, l: (b, l, 0, 0, 0)),
    )
    out_shape = (
        jax.ShapeDtypeStruct((B, T, C), jnp.float32),
        # TODO(synk): on v7x store the probabilities in bf16 to halve VMEM/HBM
        # write traffic (kept f32 here for parity with the torch-returned weights).
        jax.ShapeDtypeStruct((B, n_layer, n_head, T, T), jnp.float32),
    )
    return pl.pallas_call(
        kernel,
        out_shape=out_shape,
        grid=(B // Bt, n_layer),
        in_specs=in_specs,
        out_specs=out_specs,
        scratch_shapes=[pltpu.VMEM((Bt, T, n_head * hs_pad), jnp.bfloat16)],
        compiler_params=pltpu.CompilerParams(
            dimension_semantics=("parallel", "arbitrary"),
            vmem_limit_bytes=_vmem_limit_bytes()),
    )(x, sp["wqkv"], sp["wproj"], sp["bproj"],
      sp["w1"], sp["b1"], sp["w2"], sp["b2"],
      sp["g1"], sp["be1"], sp["g2"], sp["be2"])


def run_lm_head(x, lm, tile_v=512):
    """Vocab-tiled lm_head; vocab pre-padded in fuse_params to a multiple of 512."""
    B, T, C = x.shape
    w, b, V = lm["w"], lm["b"], lm["vocab"]
    Vp = w.shape[1]
    tile_v = min(tile_v, Vp)
    x_bf = x.astype(jnp.bfloat16)
    logits = pl.pallas_call(
        lm_head_kernel,
        out_shape=jax.ShapeDtypeStruct((B, T, Vp), jnp.float32),
        grid=(B, Vp // tile_v),
        in_specs=[
            pl.BlockSpec((None, T, C), lambda i, j: (i, 0, 0)),
            pl.BlockSpec((C, tile_v), lambda i, j: (0, j)),
            pl.BlockSpec((1, tile_v), lambda i, j: (0, j)),
        ],
        out_specs=pl.BlockSpec((None, T, tile_v), lambda i, j: (i, 0, j)),
        compiler_params=pltpu.CompilerParams(
            dimension_semantics=("parallel", "parallel"),
            vmem_limit_bytes=_vmem_limit_bytes()),
    )(x_bf, w, b)
    return logits[..., :V]


# --------------------------------------------------------------------------------------
# Parameter init (torch-like layout) + one-time fusion into stacked kernel layout
# --------------------------------------------------------------------------------------
def init_params(key, n_layer, n_embd, n_head, vocab_size, block_size):
    head_size = n_embd // n_head
    keys = iter(jax.random.split(key, 8 + 16 * n_layer))

    def nrm(shape, scale=0.02):
        return (scale * jax.random.normal(next(keys), shape)).astype(jnp.float32)

    params = {
        "tok_emb": nrm((vocab_size, n_embd), 1.0),
        "pos_emb": nrm((block_size, n_embd), 1.0),
        "lm_w": nrm((n_embd, vocab_size)),
        "lm_b": nrm((1, vocab_size)),
        "layers": [],
    }
    for _ in range(n_layer):
        params["layers"].append({
            "wq": nrm((n_head, n_embd, head_size)),
            "wk": nrm((n_head, n_embd, head_size)),
            "wv": nrm((n_head, n_embd, head_size)),
            "wproj": nrm((n_embd, n_embd)),
            "bproj": nrm((1, n_embd)),
            "w1": nrm((n_embd, 4 * n_embd)),
            "b1": nrm((1, 4 * n_embd)),
            "w2": nrm((4 * n_embd, n_embd)),
            "b2": nrm((1, n_embd)),
            "g1": jnp.ones((1, n_embd), jnp.float32),
            "be1": jnp.zeros((1, n_embd), jnp.float32),
            "g2": jnp.ones((1, n_embd), jnp.float32),
            "be2": jnp.zeros((1, n_embd), jnp.float32),
        })
    return params


def fuse_params(params, n_head):
    """Stack per-layer weights; fuse QKV; pad heads to 128 lanes; fold softmax scale;
    pre-pad the vocab; bf16 matmul weights."""
    C = params["tok_emb"].shape[1]
    hs = C // n_head
    hs_pad = 128 * ((hs + 127) // 128)          # per-head width -> lane multiple
    Hp = n_head * hs_pad
    scale = 1.0 / math.sqrt(hs)
    layers = params["layers"]

    def pad_heads(w, s=1.0):                    # (n_head, C, hs) -> (C, Hp)
        wp = jnp.zeros((n_head, C, hs_pad), jnp.float32).at[:, :, :hs].set(w * s)
        return jnp.transpose(wp, (1, 0, 2)).reshape(C, Hp)

    def pack_qkv(lp):                           # scale folded into Q columns
        return jnp.concatenate([pad_heads(lp["wq"], scale),
                                pad_heads(lp["wk"]),
                                pad_heads(lp["wv"])], axis=-1)      # (C, 3*Hp)

    def pack_proj(lp):                          # (n_head*hs, C) -> (Hp, C), zero pad rows
        w = lp["wproj"].reshape(n_head, hs, C)
        wp = jnp.zeros((n_head, hs_pad, C), jnp.float32).at[:, :hs, :].set(w)
        return wp.reshape(Hp, C)

    stack = {
        "wqkv": jnp.stack([pack_qkv(lp) for lp in layers]).astype(jnp.bfloat16),
        "wproj": jnp.stack([pack_proj(lp) for lp in layers]).astype(jnp.bfloat16),
        "bproj": jnp.stack([lp["bproj"] for lp in layers]),
        "w1": jnp.stack([lp["w1"] for lp in layers]).astype(jnp.bfloat16),
        "b1": jnp.stack([lp["b1"] for lp in layers]),
        "w2": jnp.stack([lp["w2"] for lp in layers]).astype(jnp.bfloat16),
        "b2": jnp.stack([lp["b2"] for lp in layers]),
        "g1": jnp.stack([lp["g1"] for lp in layers]),
        "be1": jnp.stack([lp["be1"] for lp in layers]),
        "g2": jnp.stack([lp["g2"] for lp in layers]),
        "be2": jnp.stack([lp["be2"] for lp in layers]),
    }

    V = params["lm_w"].shape[1]
    Vp = 512 * ((V + 511) // 512)
    lm = {
        "w": jnp.zeros((C, Vp), jnp.bfloat16).at[:, :V].set(
            params["lm_w"].astype(jnp.bfloat16)),
        "b": jnp.zeros((1, Vp), jnp.float32).at[:, :V].set(
            params["lm_b"].astype(jnp.float32)),
        "vocab": V,
    }
    return {"tok_emb": params["tok_emb"], "pos_emb": params["pos_emb"],
            "stack": stack, "lm": lm, "hs_pad": hs_pad}


# --------------------------------------------------------------------------------------
# Full forward (matches torch Decoder.forward semantics)
# --------------------------------------------------------------------------------------
def decoder_forward(params, idx, targets, n_head):
    B, T = idx.shape
    sp = params["stack"]
    n_layer = sp["wqkv"].shape[0]

    # Embedding lookups (glue: dynamic gather stays in plain JAX).
    tok_emb = jnp.take(params["tok_emb"], idx, axis=0)          # (B, T, C)
    pos_emb = params["pos_emb"][:T]                             # (T, C)
    x = (tok_emb + pos_emb[None, :, :]).astype(jnp.float32)

    y, attn = run_decoder_stack(x, sp, n_head, params["hs_pad"])

    # Per-head attention weights, torch order: layer-major then head order.
    w_all = jnp.transpose(attn, (1, 2, 0, 3, 4))                # (L, H, B, T, T)
    weights = [w_all[l, h] for l in range(n_layer) for h in range(n_head)]

    logits = run_lm_head(y, params["lm"])                       # (B, T, V)

    if targets is None:
        loss = None
    else:
        V = logits.shape[-1]
        lg = logits.reshape(B * T, V)
        tg = targets.reshape(B * T)
        # TODO(synk): cross-entropy reduction kept in plain JAX (tiny glue reduction).
        logz = jax.nn.logsumexp(lg, axis=-1)
        picked = jnp.take_along_axis(lg, tg[:, None], axis=-1)[:, 0]
        loss = jnp.mean(logz - picked)
    return loss, weights


# --------------------------------------------------------------------------------------
if __name__ == "__main__":
    B, T = 2, 8
    n_layer, n_embd, n_head = 2, 32, 4
    vocab_size, block_size = 50, 16
    # NOTE: perf tuning only matters once T, C, head_size are multiples of (8, 128);
    # these toy shapes are for functional verification only.

    key = jax.random.PRNGKey(0)
    k_param, k_idx, k_tgt = jax.random.split(key, 3)

    params = fuse_params(
        init_params(k_param, n_layer, n_embd, n_head, vocab_size, block_size), n_head)
    idx = jax.random.randint(k_idx, (B, T), 0, vocab_size, dtype=jnp.int32)
    targets = jax.random.randint(k_tgt, (B, T), 0, vocab_size, dtype=jnp.int32)

    loss, weights = decoder_forward(params, idx, targets, n_head)
    jax.block_until_ready(loss)
    jax.block_until_ready(weights)

    assert loss.shape == ()
    assert len(weights) == n_layer * n_head
    assert all(w.shape == (B, T, T) for w in weights)
    print("KERNEL_OK")
</pallas_src>

<mosaic_0001>
module attributes {stable_mosaic.version = 11 : i64} {
  func.func @fused_decoder_kernel(%arg0: i32, %arg1: i32, %arg2: memref<2x8x32xf32, #tpu.memory_space<vmem>>, %arg3: memref<1x32x1536xbf16, #tpu.memory_space<vmem>>, %arg4: memref<1x512x32xbf16, #tpu.memory_space<vmem>>, %arg5: memref<1x1x32xf32, #tpu.memory_space<vmem>>, %arg6: memref<1x32x128xbf16, #tpu.memory_space<vmem>>, %arg7: memref<1x1x128xf32, #tpu.memory_space<vmem>>, %arg8: memref<1x128x32xbf16, #tpu.memory_space<vmem>>, %arg9: memref<1x1x32xf32, #tpu.memory_space<vmem>>, %arg10: memref<1x1x32xf32, #tpu.memory_space<vmem>>, %arg11: memref<1x1x32xf32, #tpu.memory_space<vmem>>, %arg12: memref<1x1x32xf32, #tpu.memory_space<vmem>>, %arg13: memref<1x1x32xf32, #tpu.memory_space<vmem>>, %arg14: memref<2x8x32xf32, #tpu.memory_space<vmem>>, %arg15: memref<2x1x4x8x8xf32, #tpu.memory_space<vmem>>, %arg16: memref<2x8x512xbf16, #tpu.memory_space<vmem>>) attributes {dimension_semantics = [#tpu.dimension_semantics<parallel>, #tpu.dimension_semantics<arbitrary>], iteration_bounds = array<i64: 1, 2>, scalar_prefetch = 0 : i64, scratch_operands = 1 : i64, tpu.core_type = #tpu.core_type<tc>, window_params = [{transform_indices = @transform_0, window_bounds = array<i64: 2, 8, 32>}, {transform_indices = @transform_1, window_bounds = array<i64: 1, 32, 1536>}, {transform_indices = @transform_2, window_bounds = array<i64: 1, 512, 32>}, {transform_indices = @transform_3, window_bounds = array<i64: 1, 1, 32>}, {transform_indices = @transform_4, window_bounds = array<i64: 1, 32, 128>}, {transform_indices = @transform_5, window_bounds = array<i64: 1, 1, 128>}, {transform_indices = @transform_6, window_bounds = array<i64: 1, 128, 32>}, {transform_indices = @transform_7, window_bounds = array<i64: 1, 1, 32>}, {transform_indices = @transform_8, window_bounds = array<i64: 1, 1, 32>}, {transform_indices = @transform_9, window_bounds = array<i64: 1, 1, 32>}, {transform_indices = @transform_10, window_bounds = array<i64: 1, 1, 32>}, {transform_indices = @transform_11, window_bounds = array<i64: 1, 1, 32>}, {transform_indices = @transform_12, window_bounds = array<i64: 2, 8, 32>}, {transform_indices = @transform_13, window_bounds = array<i64: 2, 1, 4, 8, 8>}]} {
    %c0_i32 = arith.constant 0 : i32
    %0 = arith.cmpi eq, %arg1, %c0_i32 : i32
    %1 = arith.extui %0 : i1 to i32
    %c0_i32_0 = arith.constant 0 : i32
    %2 = arith.cmpi ne, %1, %c0_i32_0 : i32
    scf.if %2 {
      %c0_100 = arith.constant 0 : index
      %c0_101 = arith.constant 0 : index
      %c0_102 = arith.constant 0 : index
      %192 = vector.load %arg2[%c0_100, %c0_101, %c0_102] : memref<2x8x32xf32, #tpu.memory_space<vmem>>, vector<2x8x32xf32>
      %c0_103 = arith.constant 0 : index
      %c0_104 = arith.constant 0 : index
      %c0_105 = arith.constant 0 : index
      %193 = vector.load %arg14[%c0_103, %c0_104, %c0_105] : memref<2x8x32xf32, #tpu.memory_space<vmem>>, vector<2x8x32xf32>
      tpu.vector_store %arg14[%c0_103, %c0_104, %c0_105], %192 {strides = array<i32>} : memref<2x8x32xf32, #tpu.memory_space<vmem>>, vector<2x8x32xf32>,
    } else {
    }
    %c0 = arith.constant 0 : index
    %c0_1 = arith.constant 0 : index
    %c0_2 = arith.constant 0 : index
    %3 = vector.load %arg14[%c0, %c0_1, %c0_2] : memref<2x8x32xf32, #tpu.memory_space<vmem>>, vector<2x8x32xf32>
    %4 = vector.shape_cast %3 : vector<2x8x32xf32> to vector<16x32xf32>
    %5 = arith.truncf %4 : vector<16x32xf32> to vector<16x32xbf16>
    %c0_3 = arith.constant 0 : index
    %c0_4 = arith.constant 0 : index
    %c0_5 = arith.constant 0 : index
    %6 = vector.load %arg3[%c0_3, %c0_4, %c0_5] : memref<1x32x1536xbf16, #tpu.memory_space<vmem>>, vector<1x32x1536xbf16>
    %7 = vector.shape_cast %6 : vector<1x32x1536xbf16> to vector<32x1536xbf16>
    %cst = arith.constant dense<0.000000e+00> : vector<16x1536xf32>
    %8 = tpu.matmul %5, %7, %cst {dimension_numbers = #tpu.dot_dimension_numbers<[1], [0], [0], [1], [0, 0, 1, 1], [], []>} : vector<16x32xbf16>, vector<32x1536xbf16>, vector<16x1536xf32> -> vector<16x1536xf32>
    %9 = vector.shape_cast %8 : vector<16x1536xf32> to vector<2x8x1536xf32>
    %10 = arith.truncf %9 : vector<2x8x1536xf32> to vector<2x8x1536xbf16>
    %11 = tpu.iota {dimensions = array<i32: 0>} : vector<8x8xi32>
    %12 = tpu.iota {dimensions = array<i32: 1>} : vector<8x8xi32>
    %13 = arith.cmpi sle, %12, %11 : vector<8x8xi32>
    %cst_6 = arith.constant 0.000000e+00 : f32
    %cst_7 = arith.constant -1.000000e+30 : f32
    %14 = vector.broadcast %cst_6 : f32 to vector<8x8xf32>
    %15 = vector.broadcast %cst_7 : f32 to vector<8x8xf32>
    %16 = arith.select %13, %14, %15 : vector<8x8xi1>, vector<8x8xf32>
    %17 = vector.extract_strided_slice %10 {offsets = [0, 0, 0], sizes = [2, 8, 128], strides = [1, 1, 1]} : vector<2x8x1536xbf16> to vector<2x8x128xbf16>
    %18 = vector.extract_strided_slice %10 {offsets = [0, 0, 512], sizes = [2, 8, 128], strides = [1, 1, 1]} : vector<2x8x1536xbf16> to vector<2x8x128xbf16>
    %19 = vector.extract_strided_slice %10 {offsets = [0, 0, 1024], sizes = [2, 8, 128], strides = [1, 1, 1]} : vector<2x8x1536xbf16> to vector<2x8x128xbf16>
    "tpu.trace_start"() <{level = 10 : i32, message = "bqd,bkd->bqk"}> : () -> ()
    %cst_8 = arith.constant dense<0.000000e+00> : vector<2x8x8xf32>
    %20 = tpu.matmul %17, %18, %cst_8 {dimension_numbers = #tpu.dot_dimension_numbers<[2], [2], [1], [1], [0, 0, 0, 1, 1, 1], [0], [0]>} : vector<2x8x128xbf16>, vector<2x8x128xbf16>, vector<2x8x8xf32> -> vector<2x8x8xf32>
    "tpu.trace_stop"() : () -> ()
    %21 = vector.shape_cast %16 : vector<8x8xf32> to vector<1x8x8xf32>
    %22 = vector.broadcast %21 : vector<1x8x8xf32> to vector<2x8x8xf32>
    %23 = arith.addf %20, %22 : vector<2x8x8xf32>
    %cst_9 = arith.constant dense<0xFF800000> : vector<2x8xf32>
    %24 = vector.multi_reduction <maximumf>, %23, %cst_9 [2] : vector<2x8x8xf32> to vector<2x8xf32>
    %25 = vector.shape_cast %24 : vector<2x8xf32> to vector<2x8x1xf32>
    %26 = vector.broadcast %25 : vector<2x8x1xf32> to vector<2x8x8xf32>
    %27 = arith.subf %23, %26 : vector<2x8x8xf32>
    %28 = math.exp %27 : vector<2x8x8xf32>
    %cst_10 = arith.constant dense<0.000000e+00> : vector<2x8xf32>
    %29 = vector.multi_reduction <add>, %28, %cst_10 [2] : vector<2x8x8xf32> to vector<2x8xf32>
    %30 = vector.shape_cast %29 : vector<2x8xf32> to vector<2x8x1xf32>
    %31 = vector.broadcast %30 : vector<2x8x1xf32> to vector<2x8x8xf32>
    %32 = arith.divf %28, %31 : vector<2x8x8xf32>
    %c0_11 = arith.constant 0 : index
    %c0_12 = arith.constant 0 : index
    %c0_13 = arith.constant 0 : index
    %c0_14 = arith.constant 0 : index
    %c0_15 = arith.constant 0 : index
    %33 = vector.load %arg15[%c0_11, %c0_12, %c0_13, %c0_14, %c0_15] : memref<2x1x4x8x8xf32, #tpu.memory_space<vmem>>, vector<2x1x1x8x8xf32>
    %34 = vector.shape_cast %33 : vector<2x1x1x8x8xf32> to vector<2x8x8xf32>
    %35 = vector.shape_cast %32 : vector<2x8x8xf32> to vector<2x1x1x8x8xf32>
    tpu.vector_store %arg15[%c0_11, %c0_12, %c0_13, %c0_14, %c0_15], %35 {strides = array<i32>} : memref<2x1x4x8x8xf32, #tpu.memory_space<vmem>>, vector<2x1x1x8x8xf32>,
    %36 = arith.truncf %32 : vector<2x8x8xf32> to vector<2x8x8xbf16>
    "tpu.trace_start"() <{level = 10 : i32, message = "bqk,bkd->bqd"}> : () -> ()
    %cst_16 = arith.constant dense<0.000000e+00> : vector<2x8x128xf32>
    %37 = tpu.matmul %36, %19, %cst_16 {dimension_numbers = #tpu.dot_dimension_numbers<[2], [1], [1], [2], [0, 0, 0, 1, 1, 2], [0], [0]>} : vector<2x8x8xbf16>, vector<2x8x128xbf16>, vector<2x8x128xf32> -> vector<2x8x128xf32>
    "tpu.trace_stop"() : () -> ()
    %38 = arith.truncf %37 : vector<2x8x128xf32> to vector<2x8x128xbf16>
    %c0_17 = arith.constant 0 : index
    %c0_18 = arith.constant 0 : index
    %c0_19 = arith.constant 0 : index
    %39 = vector.load %arg16[%c0_17, %c0_18, %c0_19] : memref<2x8x512xbf16, #tpu.memory_space<vmem>>, vector<2x8x128xbf16>
    tpu.vector_store %arg16[%c0_17, %c0_18, %c0_19], %38 {strides = array<i32>} : memref<2x8x512xbf16, #tpu.memory_space<vmem>>, vector<2x8x128xbf16>,
    %40 = vector.extract_strided_slice %10 {offsets = [0, 0, 128], sizes = [2, 8, 128], strides = [1, 1, 1]} : vector<2x8x1536xbf16> to vector<2x8x128xbf16>
    %41 = vector.extract_strided_slice %10 {offsets = [0, 0, 640], sizes = [2, 8, 128], strides = [1, 1, 1]} : vector<2x8x1536xbf16> to vector<2x8x128xbf16>
    %42 = vector.extract_strided_slice %10 {offsets = [0, 0, 1152], sizes = [2, 8, 128], strides = [1, 1, 1]} : vector<2x8x1536xbf16> to vector<2x8x128xbf16>
    "tpu.trace_start"() <{level = 10 : i32, message = "bqd,bkd->bqk"}> : () -> ()
    %cst_20 = arith.constant dense<0.000000e+00> : vector<2x8x8xf32>
    %43 = tpu.matmul %40, %41, %cst_20 {dimension_numbers = #tpu.dot_dimension_numbers<[2], [2], [1], [1], [0, 0, 0, 1, 1, 1], [0], [0]>} : vector<2x8x128xbf16>, vector<2x8x128xbf16>, vector<2x8x8xf32> -> vector<2x8x8xf32>
    "tpu.trace_stop"() : () -> ()
    %44 = vector.shape_cast %16 : vector<8x8xf32> to vector<1x8x8xf32>
    %45 = vector.broadcast %44 : vector<1x8x8xf32> to vector<2x8x8xf32>
    %46 = arith.addf %43, %45 : vector<2x8x8xf32>
    %cst_21 = arith.constant dense<0xFF800000> : vector<2x8xf32>
    %47 = vector.multi_reduction <maximumf>, %46, %cst_21 [2] : vector<2x8x8xf32> to vector<2x8xf32>
    %48 = vector.shape_cast %47 : vector<2x8xf32> to vector<2x8x1xf32>
    %49 = vector.broadcast %48 : vector<2x8x1xf32> to vector<2x8x8xf32>
    %50 = arith.subf %46, %49 : vector<2x8x8xf32>
    %51 = math.exp %50 : vector<2x8x8xf32>
    %cst_22 = arith.constant dense<0.000000e+00> : vector<2x8xf32>
    %52 = vector.multi_reduction <add>, %51, %cst_22 [2] : vector<2x8x8xf32> to vector<2x8xf32>
    %53 = vector.shape_cast %52 : vector<2x8xf32> to vector<2x8x1xf32>
    %54 = vector.broadcast %53 : vector<2x8x1xf32> to vector<2x8x8xf32>
    %55 = arith.divf %51, %54 : vector<2x8x8xf32>
    %c0_23 = arith.constant 0 : index
    %c0_24 = arith.constant 0 : index
    %c1 = arith.constant 1 : index
    %c0_25 = arith.constant 0 : index
    %c0_26 = arith.constant 0 : index
    %56 = vector.load %arg15[%c0_23, %c0_24, %c1, %c0_25, %c0_26] : memref<2x1x4x8x8xf32, #tpu.memory_space<vmem>>, vector<2x1x1x8x8xf32>
    %57 = vector.shape_cast %56 : vector<2x1x1x8x8xf32> to vector<2x8x8xf32>
    %58 = vector.shape_cast %55 : vector<2x8x8xf32> to vector<2x1x1x8x8xf32>
    tpu.vector_store %arg15[%c0_23, %c0_24, %c1, %c0_25, %c0_26], %58 {strides = array<i32>} : memref<2x1x4x8x8xf32, #tpu.memory_space<vmem>>, vector<2x1x1x8x8xf32>,
    %59 = arith.truncf %55 : vector<2x8x8xf32> to vector<2x8x8xbf16>
    "tpu.trace_start"() <{level = 10 : i32, message = "bqk,bkd->bqd"}> : () -> ()
    %cst_27 = arith.constant dense<0.000000e+00> : vector<2x8x128xf32>
    %60 = tpu.matmul %59, %42, %cst_27 {dimension_numbers = #tpu.dot_dimension_numbers<[2], [1], [1], [2], [0, 0, 0, 1, 1, 2], [0], [0]>} : vector<2x8x8xbf16>, vector<2x8x128xbf16>, vector<2x8x128xf32> -> vector<2x8x128xf32>
    "tpu.trace_stop"() : () -> ()
    %61 = arith.truncf %60 : vector<2x8x128xf32> to vector<2x8x128xbf16>
    %c0_28 = arith.constant 0 : index
    %c0_29 = arith.constant 0 : index
    %c128 = arith.constant 128 : index
    %62 = vector.load %arg16[%c0_28, %c0_29, %c128] : memref<2x8x512xbf16, #tpu.memory_space<vmem>>, vector<2x8x128xbf16>
    tpu.vector_store %arg16[%c0_28, %c0_29, %c128], %61 {strides = array<i32>} : memref<2x8x512xbf16, #tpu.memory_space<vmem>>, vector<2x8x128xbf16>,
    %63 = vector.extract_strided_slice %10 {offsets = [0, 0, 256], sizes = [2, 8, 128], strides = [1, 1, 1]} : vector<2x8x1536xbf16> to vector<2x8x128xbf16>
    %64 = vector.extract_strided_slice %10 {offsets = [0, 0, 768], sizes = [2, 8, 128], strides = [1, 1, 1]} : vector<2x8x1536xbf16> to vector<2x8x128xbf16>
    %65 = vector.extract_strided_slice %10 {offsets = [0, 0, 1280], sizes = [2, 8, 128], strides = [1, 1, 1]} : vector<2x8x1536xbf16> to vector<2x8x128xbf16>
    "tpu.trace_start"() <{level = 10 : i32, message = "bqd,bkd->bqk"}> : () -> ()
    %cst_30 = arith.constant dense<0.000000e+00> : vector<2x8x8xf32>
    %66 = tpu.matmul %63, %64, %cst_30 {dimension_numbers = #tpu.dot_dimension_numbers<[2], [2], [1], [1], [0, 0, 0, 1, 1, 1], [0], [0]>} : vector<2x8x128xbf16>, vector<2x8x128xbf16>, vector<2x8x8xf32> -> vector<2x8x8xf32>
    "tpu.trace_stop"() : () -> ()
    %67 = vector.shape_cast %16 : vector<8x8xf32> to vector<1x8x8xf32>
    %68 = vector.broadcast %67 : vector<1x8x8xf32> to vector<2x8x8xf32>
    %69 = arith.addf %66, %68 : vector<2x8x8xf32>
    %cst_31 = arith.constant dense<0xFF800000> : vector<2x8xf32>
    %70 = vector.multi_reduction <maximumf>, %69, %cst_31 [2] : vector<2x8x8xf32> to vector<2x8xf32>
    %71 = vector.shape_cast %70 : vector<2x8xf32> to vector<2x8x1xf32>
    %72 = vector.broadcast %71 : vector<2x8x1xf32> to vector<2x8x8xf32>
    %73 = arith.subf %69, %72 : vector<2x8x8xf32>
    %74 = math.exp %73 : vector<2x8x8xf32>
    %cst_32 = arith.constant dense<0.000000e+00> : vector<2x8xf32>
    %75 = vector.multi_reduction <add>, %74, %cst_32 [2] : vector<2x8x8xf32> to vector<2x8xf32>
    %76 = vector.shape_cast %75 : vector<2x8xf32> to vector<2x8x1xf32>
    %77 = vector.broadcast %76 : vector<2x8x1xf32> to vector<2x8x8xf32>
    %78 = arith.divf %74, %77 : vector<2x8x8xf32>
    %c0_33 = arith.constant 0 : index
    %c0_34 = arith.constant 0 : index
    %c2 = arith.constant 2 : index
    %c0_35 = arith.constant 0 : index
    %c0_36 = arith.constant 0 : index
    %79 = vector.load %arg15[%c0_33, %c0_34, %c2, %c0_35, %c0_36] : memref<2x1x4x8x8xf32, #tpu.memory_space<vmem>>, vector<2x1x1x8x8xf32>
    %80 = vector.shape_cast %79 : vector<2x1x1x8x8xf32> to vector<2x8x8xf32>
    %81 = vector.shape_cast %78 : vector<2x8x8xf32> to vector<2x1x1x8x8xf32>
    tpu.vector_store %arg15[%c0_33, %c0_34, %c2, %c0_35, %c0_36], %81 {strides = array<i32>} : memref<2x1x4x8x8xf32, #tpu.memory_space<vmem>>, vector<2x1x1x8x8xf32>,
    %82 = arith.truncf %78 : vector<2x8x8xf32> to vector<2x8x8xbf16>
    "tpu.trace_start"() <{level = 10 : i32, message = "bqk,bkd->bqd"}> : () -> ()
    %cst_37 = arith.constant dense<0.000000e+00> : vector<2x8x128xf32>
    %83 = tpu.matmul %82, %65, %cst_37 {dimension_numbers = #tpu.dot_dimension_numbers<[2], [1], [1], [2], [0, 0, 0, 1, 1, 2], [0], [0]>} : vector<2x8x8xbf16>, vector<2x8x128xbf16>, vector<2x8x128xf32> -> vector<2x8x128xf32>
    "tpu.trace_stop"() : () -> ()
    %84 = arith.truncf %83 : vector<2x8x128xf32> to vector<2x8x128xbf16>
    %c0_38 = arith.constant 0 : index
    %c0_39 = arith.constant 0 : index
    %c256 = arith.constant 256 : index
    %85 = vector.load %arg16[%c0_38, %c0_39, %c256] : memref<2x8x512xbf16, #tpu.memory_space<vmem>>, vector<2x8x128xbf16>
    tpu.vector_store %arg16[%c0_38, %c0_39, %c256], %84 {strides = array<i32>} : memref<2x8x512xbf16, #tpu.memory_space<vmem>>, vector<2x8x128xbf16>,
    %86 = vector.extract_strided_slice %10 {offsets = [0, 0, 384], sizes = [2, 8, 128], strides = [1, 1, 1]} : vector<2x8x1536xbf16> to vector<2x8x128xbf16>
    %87 = vector.extract_strided_slice %10 {offsets = [0, 0, 896], sizes = [2, 8, 128], strides = [1, 1, 1]} : vector<2x8x1536xbf16> to vector<2x8x128xbf16>
    %88 = vector.extract_strided_slice %10 {offsets = [0, 0, 1408], sizes = [2, 8, 128], strides = [1, 1, 1]} : vector<2x8x1536xbf16> to vector<2x8x128xbf16>
    "tpu.trace_start"() <{level = 10 : i32, message = "bqd,bkd->bqk"}> : () -> ()
    %cst_40 = arith.constant dense<0.000000e+00> : vector<2x8x8xf32>
    %89 = tpu.matmul %86, %87, %cst_40 {dimension_numbers = #tpu.dot_dimension_numbers<[2], [2], [1], [1], [0, 0, 0, 1, 1, 1], [0], [0]>} : vector<2x8x128xbf16>, vector<2x8x128xbf16>, vector<2x8x8xf32> -> vector<2x8x8xf32>
    "tpu.trace_stop"() : () -> ()
    %90 = vector.shape_cast %16 : vector<8x8xf32> to vector<1x8x8xf32>
    %91 = vector.broadcast %90 : vector<1x8x8xf32> to vector<2x8x8xf32>
    %92 = arith.addf %89, %91 : vector<2x8x8xf32>
    %cst_41 = arith.constant dense<0xFF800000> : vector<2x8xf32>
    %93 = vector.multi_reduction <maximumf>, %92, %cst_41 [2] : vector<2x8x8xf32> to vector<2x8xf32>
    %94 = vector.shape_cast %93 : vector<2x8xf32> to vector<2x8x1xf32>
    %95 = vector.broadcast %94 : vector<2x8x1xf32> to vector<2x8x8xf32>
    %96 = arith.subf %92, %95 : vector<2x8x8xf32>
    %97 = math.exp %96 : vector<2x8x8xf32>
    %cst_42 = arith.constant dense<0.000000e+00> : vector<2x8xf32>
    %98 = vector.multi_reduction <add>, %97, %cst_42 [2] : vector<2x8x8xf32> to vector<2x8xf32>
    %99 = vector.shape_cast %98 : vector<2x8xf32> to vector<2x8x1xf32>
    %100 = vector.broadcast %99 : vector<2x8x1xf32> to vector<2x8x8xf32>
    %101 = arith.divf %97, %100 : vector<2x8x8xf32>
    %c0_43 = arith.constant 0 : index
    %c0_44 = arith.constant 0 : index
    %c3 = arith.constant 3 : index
    %c0_45 = arith.constant 0 : index
    %c0_46 = arith.constant 0 : index
    %102 = vector.load %arg15[%c0_43, %c0_44, %c3, %c0_45, %c0_46] : memref<2x1x4x8x8xf32, #tpu.memory_space<vmem>>, vector<2x1x1x8x8xf32>
    %103 = vector.shape_cast %102 : vector<2x1x1x8x8xf32> to vector<2x8x8xf32>
    %104 = vector.shape_cast %101 : vector<2x8x8xf32> to vector<2x1x1x8x8xf32>
    tpu.vector_store %arg15[%c0_43, %c0_44, %c3, %c0_45, %c0_46], %104 {strides = array<i32>} : memref<2x1x4x8x8xf32, #tpu.memory_space<vmem>>, vector<2x1x1x8x8xf32>,
    %105 = arith.truncf %101 : vector<2x8x8xf32> to vector<2x8x8xbf16>
    "tpu.trace_start"() <{level = 10 : i32, message = "bqk,bkd->bqd"}> : () -> ()
    %cst_47 = arith.constant dense<0.000000e+00> : vector<2x8x128xf32>
    %106 = tpu.matmul %105, %88, %cst_47 {dimension_numbers = #tpu.dot_dimension_numbers<[2], [1], [1], [2], [0, 0, 0, 1, 1, 2], [0], [0]>} : vector<2x8x8xbf16>, vector<2x8x128xbf16>, vector<2x8x128xf32> -> vector<2x8x128xf32>
    "tpu.trace_stop"() : () -> ()
    %107 = arith.truncf %106 : vector<2x8x128xf32> to vector<2x8x128xbf16>
    %c0_48 = arith.constant 0 : index
    %c0_49 = arith.constant 0 : index
    %c384 = arith.constant 384 : index
    %108 = vector.load %arg16[%c0_48, %c0_49, %c384] : memref<2x8x512xbf16, #tpu.memory_space<vmem>>, vector<2x8x128xbf16>
    tpu.vector_store %arg16[%c0_48, %c0_49, %c384], %107 {strides = array<i32>} : memref<2x8x512xbf16, #tpu.memory_space<vmem>>, vector<2x8x128xbf16>,
    %c0_50 = arith.constant 0 : index
    %c0_51 = arith.constant 0 : index
    %c0_52 = arith.constant 0 : index
    %109 = vector.load %arg16[%c0_50, %c0_51, %c0_52] : memref<2x8x512xbf16, #tpu.memory_space<vmem>>, vector<2x8x512xbf16>
    %110 = vector.shape_cast %109 : vector<2x8x512xbf16> to vector<16x512xbf16>
    %c0_53 = arith.constant 0 : index
    %c0_54 = arith.constant 0 : index
    %c0_55 = arith.constant 0 : index
    %111 = vector.load %arg4[%c0_53, %c0_54, %c0_55] : memref<1x512x32xbf16, #tpu.memory_space<vmem>>, vector<1x512x32xbf16>
    %112 = vector.shape_cast %111 : vector<1x512x32xbf16> to vector<512x32xbf16>
    %cst_56 = arith.constant dense<0.000000e+00> : vector<16x32xf32>
    %113 = tpu.matmul %110, %112, %cst_56 {dimension_numbers = #tpu.dot_dimension_numbers<[1], [0], [0], [1], [0, 0, 1, 1], [], []>} : vector<16x512xbf16>, vector<512x32xbf16>, vector<16x32xf32> -> vector<16x32xf32>
    %c0_57 = arith.constant 0 : index
    %c0_58 = arith.constant 0 : index
    %c0_59 = arith.constant 0 : index
    %114 = vector.load %arg5[%c0_57, %c0_58, %c0_59] : memref<1x1x32xf32, #tpu.memory_space<vmem>>, vector<1x1x32xf32>
    %115 = vector.shape_cast %114 : vector<1x1x32xf32> to vector<1x32xf32>
    %116 = vector.broadcast %115 : vector<1x32xf32> to vector<16x32xf32>
    %117 = arith.addf %113, %116 : vector<16x32xf32>
    %118 = arith.addf %4, %117 : vector<16x32xf32>
    %c0_60 = arith.constant 0 : index
    %c0_61 = arith.constant 0 : index
    %c0_62 = arith.constant 0 : index
    %119 = vector.load %arg10[%c0_60, %c0_61, %c0_62] : memref<1x1x32xf32, #tpu.memory_space<vmem>>, vector<1x1x32xf32>
    %120 = vector.shape_cast %119 : vector<1x1x32xf32> to vector<1x32xf32>
    %c0_63 = arith.constant 0 : index
    %c0_64 = arith.constant 0 : index
    %c0_65 = arith.constant 0 : index
    %121 = vector.load %arg11[%c0_63, %c0_64, %c0_65] : memref<1x1x32xf32, #tpu.memory_space<vmem>>, vector<1x1x32xf32>
    %122 = vector.shape_cast %121 : vector<1x1x32xf32> to vector<1x32xf32>
    %cst_66 = arith.constant dense<0.000000e+00> : vector<16xf32>
    %123 = vector.multi_reduction <add>, %118, %cst_66 [1] : vector<16x32xf32> to vector<16xf32>
    %124 = vector.shape_cast %123 : vector<16xf32> to vector<16x1xf32>
    %cst_67 = arith.constant 3.200000e+01 : f32
    %125 = vector.broadcast %cst_67 : f32 to vector<16x1xf32>
    %126 = arith.divf %124, %125 : vector<16x1xf32>
    %127 = vector.broadcast %126 : vector<16x1xf32> to vector<16x32xf32>
    %128 = arith.subf %118, %127 : vector<16x32xf32>
    %129 = arith.mulf %128, %128 : vector<16x32xf32>
    %cst_68 = arith.constant dense<0.000000e+00> : vector<16xf32>
    %130 = vector.multi_reduction <add>, %129, %cst_68 [1] : vector<16x32xf32> to vector<16xf32>
    %131 = vector.shape_cast %130 : vector<16xf32> to vector<16x1xf32>
    %cst_69 = arith.constant 3.200000e+01 : f32
    %132 = vector.broadcast %cst_69 : f32 to vector<16x1xf32>
    %133 = arith.divf %131, %132 : vector<16x1xf32>
    %134 = vector.broadcast %126 : vector<16x1xf32> to vector<16x32xf32>
    %135 = arith.subf %118, %134 : vector<16x32xf32>
    %cst_70 = arith.constant 9.99999974E-6 : f32
    %136 = vector.broadcast %cst_70 : f32 to vector<16x1xf32>
    %137 = arith.addf %133, %136 : vector<16x1xf32>
    %138 = math.rsqrt %137 : vector<16x1xf32>
    %139 = vector.broadcast %138 : vector<16x1xf32> to vector<16x32xf32>
    %140 = arith.mulf %135, %139 : vector<16x32xf32>
    %141 = vector.broadcast %120 : vector<1x32xf32> to vector<16x32xf32>
    %142 = arith.mulf %140, %141 : vector<16x32xf32>
    %143 = vector.broadcast %122 : vector<1x32xf32> to vector<16x32xf32>
    %144 = arith.addf %142, %143 : vector<16x32xf32>
    %145 = arith.truncf %144 : vector<16x32xf32> to vector<16x32xbf16>
    %c0_71 = arith.constant 0 : index
    %c0_72 = arith.constant 0 : index
    %c0_73 = arith.constant 0 : index
    %146 = vector.load %arg6[%c0_71, %c0_72, %c0_73] : memref<1x32x128xbf16, #tpu.memory_space<vmem>>, vector<1x32x128xbf16>
    %147 = vector.shape_cast %146 : vector<1x32x128xbf16> to vector<32x128xbf16>
    %cst_74 = arith.constant dense<0.000000e+00> : vector<16x128xf32>
    %148 = tpu.matmul %145, %147, %cst_74 {dimension_numbers = #tpu.dot_dimension_numbers<[1], [0], [0], [1], [0, 0, 1, 1], [], []>} : vector<16x32xbf16>, vector<32x128xbf16>, vector<16x128xf32> -> vector<16x128xf32>
    %c0_75 = arith.constant 0 : index
    %c0_76 = arith.constant 0 : index
    %c0_77 = arith.constant 0 : index
    %149 = vector.load %arg7[%c0_75, %c0_76, %c0_77] : memref<1x1x128xf32, #tpu.memory_space<vmem>>, vector<1x1x128xf32>
    %150 = vector.shape_cast %149 : vector<1x1x128xf32> to vector<1x128xf32>
    %151 = vector.broadcast %150 : vector<1x128xf32> to vector<16x128xf32>
    %152 = arith.addf %148, %151 : vector<16x128xf32>
    %cst_78 = arith.constant 0.000000e+00 : f32
    %153 = vector.broadcast %cst_78 : f32 to vector<16x128xf32>
    %154 = arith.maximumf %152, %153 : vector<16x128xf32>
    %155 = arith.truncf %154 : vector<16x128xf32> to vector<16x128xbf16>
    %c0_79 = arith.constant 0 : index
    %c0_80 = arith.constant 0 : index
    %c0_81 = arith.constant 0 : index
    %156 = vector.load %arg8[%c0_79, %c0_80, %c0_81] : memref<1x128x32xbf16, #tpu.memory_space<vmem>>, vector<1x128x32xbf16>
    %157 = vector.shape_cast %156 : vector<1x128x32xbf16> to vector<128x32xbf16>
    %cst_82 = arith.constant dense<0.000000e+00> : vector<16x32xf32>
    %158 = tpu.matmul %155, %157, %cst_82 {dimension_numbers = #tpu.dot_dimension_numbers<[1], [0], [0], [1], [0, 0, 1, 1], [], []>} : vector<16x128xbf16>, vector<128x32xbf16>, vector<16x32xf32> -> vector<16x32xf32>
    %c0_83 = arith.constant 0 : index
    %c0_84 = arith.constant 0 : index
    %c0_85 = arith.constant 0 : index
    %159 = vector.load %arg9[%c0_83, %c0_84, %c0_85] : memref<1x1x32xf32, #tpu.memory_space<vmem>>, vector<1x1x32xf32>
    %160 = vector.shape_cast %159 : vector<1x1x32xf32> to vector<1x32xf32>
    %161 = vector.broadcast %160 : vector<1x32xf32> to vector<16x32xf32>
    %162 = arith.addf %158, %161 : vector<16x32xf32>
    %163 = arith.addf %144, %162 : vector<16x32xf32>
    %c0_86 = arith.constant 0 : index
    %c0_87 = arith.constant 0 : index
    %c0_88 = arith.constant 0 : index
    %164 = vector.load %arg12[%c0_86, %c0_87, %c0_88] : memref<1x1x32xf32, #tpu.memory_space<vmem>>, vector<1x1x32xf32>
    %165 = vector.shape_cast %164 : vector<1x1x32xf32> to vector<1x32xf32>
    %c0_89 = arith.constant 0 : index
    %c0_90 = arith.constant 0 : index
    %c0_91 = arith.constant 0 : index
    %166 = vector.load %arg13[%c0_89, %c0_90, %c0_91] : memref<1x1x32xf32, #tpu.memory_space<vmem>>, vector<1x1x32xf32>
    %167 = vector.shape_cast %166 : vector<1x1x32xf32> to vector<1x32xf32>
    %cst_92 = arith.constant dense<0.000000e+00> : vector<16xf32>
    %168 = vector.multi_reduction <add>, %163, %cst_92 [1] : vector<16x32xf32> to vector<16xf32>
    %169 = vector.shape_cast %168 : vector<16xf32> to vector<16x1xf32>
    %cst_93 = arith.constant 3.200000e+01 : f32
    %170 = vector.broadcast %cst_93 : f32 to vector<16x1xf32>
    %171 = arith.divf %169, %170 : vector<16x1xf32>
    %172 = vector.broadcast %171 : vector<16x1xf32> to vector<16x32xf32>
    %173 = arith.subf %163, %172 : vector<16x32xf32>
    %174 = arith.mulf %173, %173 : vector<16x32xf32>
    %cst_94 = arith.constant dense<0.000000e+00> : vector<16xf32>
    %175 = vector.multi_reduction <add>, %174, %cst_94 [1] : vector<16x32xf32> to vector<16xf32>
    %176 = vector.shape_cast %175 : vector<16xf32> to vector<16x1xf32>
    %cst_95 = arith.constant 3.200000e+01 : f32
    %177 = vector.broadcast %cst_95 : f32 to vector<16x1xf32>
    %178 = arith.divf %176, %177 : vector<16x1xf32>
    %179 = vector.broadcast %171 : vector<16x1xf32> to vector<16x32xf32>
    %180 = arith.subf %163, %179 : vector<16x32xf32>
    %cst_96 = arith.constant 9.99999974E-6 : f32
    %181 = vector.broadcast %cst_96 : f32 to vector<16x1xf32>
    %182 = arith.addf %178, %181 : vector<16x1xf32>
    %183 = math.rsqrt %182 : vector<16x1xf32>
    %184 = vector.broadcast %183 : vector<16x1xf32> to vector<16x32xf32>
    %185 = arith.mulf %180, %184 : vector<16x32xf32>
    %186 = vector.broadcast %165 : vector<1x32xf32> to vector<16x32xf32>
    %187 = arith.mulf %185, %186 : vector<16x32xf32>
    %188 = vector.broadcast %167 : vector<1x32xf32> to vector<16x32xf32>
    %189 = arith.addf %187, %188 : vector<16x32xf32>
    %190 = vector.shape_cast %189 : vector<16x32xf32> to vector<2x8x32xf32>
    %c0_97 = arith.constant 0 : index
    %c0_98 = arith.constant 0 : index
    %c0_99 = arith.constant 0 : index
    %191 = vector.load %arg14[%c0_97, %c0_98, %c0_99] : memref<2x8x32xf32, #tpu.memory_space<vmem>>, vector<2x8x32xf32>
    tpu.vector_store %arg14[%c0_97, %c0_98, %c0_99], %190 {strides = array<i32>} : memref<2x8x32xf32, #tpu.memory_space<vmem>>, vector<2x8x32xf32>,
    return
  }
  func.func @transform_0(%arg0: i32, %arg1: i32) -> (i32, i32, i32) {
    %c0_i32 = arith.constant 0 : i32
    %c0_i32_0 = arith.constant 0 : i32
    %c0_i32_1 = arith.constant 0 : i32
    return %arg0, %c0_i32, %c0_i32_0 : i32, i32, i32
  }
  func.func @transform_1(%arg0: i32, %arg1: i32) -> (i32, i32, i32) {
    %c0_i32 = arith.constant 0 : i32
    %c0_i32_0 = arith.constant 0 : i32
    %c0_i32_1 = arith.constant 0 : i32
    return %arg1, %c0_i32, %c0_i32_0 : i32, i32, i32
  }
  func.func @transform_2(%arg0: i32, %arg1: i32) -> (i32, i32, i32) {
    %c0_i32 = arith.constant 0 : i32
    %c0_i32_0 = arith.constant 0 : i32
    %c0_i32_1 = arith.constant 0 : i32
    return %arg1, %c0_i32, %c0_i32_0 : i32, i32, i32
  }
  func.func @transform_3(%arg0: i32, %arg1: i32) -> (i32, i32, i32) {
    %c0_i32 = arith.constant 0 : i32
    %c0_i32_0 = arith.constant 0 : i32
    %c0_i32_1 = arith.constant 0 : i32
    return %arg1, %c0_i32, %c0_i32_0 : i32, i32, i32
  }
  func.func @transform_4(%arg0: i32, %arg1: i32) -> (i32, i32, i32) {
    %c0_i32 = arith.constant 0 : i32
    %c0_i32_0 = arith.constant 0 : i32
    %c0_i32_1 = arith.constant 0 : i32
    return %arg1, %c0_i32, %c0_i32_0 : i32, i32, i32
  }
  func.func @transform_5(%arg0: i32, %arg1: i32) -> (i32, i32, i32) {
    %c0_i32 = arith.constant 0 : i32
    %c0_i32_0 = arith.constant 0 : i32
    %c0_i32_1 = arith.constant 0 : i32
    return %arg1, %c0_i32, %c0_i32_0 : i32, i32, i32
  }
  func.func @transform_6(%arg0: i32, %arg1: i32) -> (i32, i32, i32) {
    %c0_i32 = arith.constant 0 : i32
    %c0_i32_0 = arith.constant 0 : i32
    %c0_i32_1 = arith.constant 0 : i32
    return %arg1, %c0_i32, %c0_i32_0 : i32, i32, i32
  }
  func.func @transform_7(%arg0: i32, %arg1: i32) -> (i32, i32, i32) {
    %c0_i32 = arith.constant 0 : i32
    %c0_i32_0 = arith.constant 0 : i32
    %c0_i32_1 = arith.constant 0 : i32
    return %arg1, %c0_i32, %c0_i32_0 : i32, i32, i32
  }
  func.func @transform_8(%arg0: i32, %arg1: i32) -> (i32, i32, i32) {
    %c0_i32 = arith.constant 0 : i32
    %c0_i32_0 = arith.constant 0 : i32
    %c0_i32_1 = arith.constant 0 : i32
    return %arg1, %c0_i32, %c0_i32_0 : i32, i32, i32
  }
  func.func @transform_9(%arg0: i32, %arg1: i32) -> (i32, i32, i32) {
    %c0_i32 = arith.constant 0 : i32
    %c0_i32_0 = arith.constant 0 : i32
    %c0_i32_1 = arith.constant 0 : i32
    return %arg1, %c0_i32, %c0_i32_0 : i32, i32, i32
  }
  func.func @transform_10(%arg0: i32, %arg1: i32) -> (i32, i32, i32) {
    %c0_i32 = arith.constant 0 : i32
    %c0_i32_0 = arith.constant 0 : i32
    %c0_i32_1 = arith.constant 0 : i32
    return %arg1, %c0_i32, %c0_i32_0 : i32, i32, i32
  }
  func.func @transform_11(%arg0: i32, %arg1: i32) -> (i32, i32, i32) {
    %c0_i32 = arith.constant 0 : i32
    %c0_i32_0 = arith.constant 0 : i32
    %c0_i32_1 = arith.constant 0 : i32
    return %arg1, %c0_i32, %c0_i32_0 : i32, i32, i32
  }
  func.func @transform_12(%arg0: i32, %arg1: i32) -> (i32, i32, i32) {
    %c0_i32 = arith.constant 0 : i32
    %c0_i32_0 = arith.constant 0 : i32
    %c0_i32_1 = arith.constant 0 : i32
    return %arg0, %c0_i32, %c0_i32_0 : i32, i32, i32
  }
  func.func @transform_13(%arg0: i32, %arg1: i32) -> (i32, i32, i32, i32, i32) {
    %c0_i32 = arith.constant 0 : i32
    %c0_i32_0 = arith.constant 0 : i32
    %c0_i32_1 = arith.constant 0 : i32
    %c0_i32_2 = arith.constant 0 : i32
    return %arg0, %arg1, %c0_i32, %c0_i32_0, %c0_i32_1 : i32, i32, i32, i32, i32
  }
}

</mosaic_0001>

<llo_original>
// kernel: tpu_custom_call.1
$region0: #{tpu_custom_call.1}
  #allocation0 [shape = 'u32[]', space=smem, size = 0x4, offset = 0x4, fixed_abs, tag = 'smem constant byte address 0x4 - core index']
  #allocation1 [shape = 'u32[144,128]{1,0:T(1,128)}', space=vmem, size = 0x12000, scoped, tag = 'internal scratch']
  #allocation2 [shape = 'bf16[2,8,512]{2,1,0:T(8,128)(2,1)}', space=vmem, size = 0x4000, scoped, tag = 'scratch operand']
  #allocation26 [shape = 's32[]', space=sflag, size = 0x4, offset = 0, fixed_abs, tag = 'sflag constant byte address 0x0 - dummy sync flag']
  %s0 = inlined_call_operand.hbm [shape: f32[2,8,32], index: 0, kind: input, shape index: {}]
  %s1 = inlined_call_operand.hbm [shape: bf16[2,32,1536], index: 1, kind: input, shape index: {}]
  %s2 = inlined_call_operand.hbm [shape: bf16[2,512,32], index: 2, kind: input, shape index: {}]
  %s3 = inlined_call_operand.hbm [shape: f32[2,1,32], index: 3, kind: input, shape index: {}]
  %s4 = inlined_call_operand.hbm [shape: bf16[2,32,128], index: 4, kind: input, shape index: {}]
  %s5 = inlined_call_operand.hbm [shape: f32[2,1,128], index: 5, kind: input, shape index: {}]
  %s6 = inlined_call_operand.hbm [shape: bf16[2,128,32], index: 6, kind: input, shape index: {}]
  %s7 = inlined_call_operand.hbm [shape: f32[2,1,32], index: 7, kind: input, shape index: {}]
  %s8 = inlined_call_operand.hbm [shape: f32[2,1,32], index: 8, kind: input, shape index: {}]
  %s9 = inlined_call_operand.hbm [shape: f32[2,1,32], index: 9, kind: input, shape index: {}]
  %s10 = inlined_call_operand.hbm [shape: f32[2,1,32], index: 10, kind: input, shape index: {}]
  %s11 = inlined_call_operand.hbm [shape: f32[2,1,32], index: 11, kind: input, shape index: {}]
  %s12 = inlined_call_operand.hbm [shape: f32[2,8,32], index: 12, kind: output, shape index: {0}]
  %s13 = inlined_call_operand.hbm [shape: f32[2,2,4,8,8], index: 13, kind: output, shape index: {1}]
  %14 = xla_tuple %s12, %s13
  %s15 = sld [smem:[#allocation0]]
  $region141: #{tpu_custom_call.1} parent=0
    _
  %s17 = ssub.s32 1, %s15
  %s18 = scalar_select 0, %s17, %s15
  $region1: #{tpu_custom_call.1} parent=0
    #allocation3 [shape = 'u8[8192]{0}', space=vmem, size = 0x2000, scoped, tag = 'input window, operand 0, single buffered']
    #allocation4 [shape = 's32[2]{0}', space=sflag, size = 0x8, scoped, tag = 'scoped memory for tpu_custom_call.1']
    #allocation5 [shape = 's32[2]{0}', space=sflag, size = 0x8, scoped, tag = 'scoped memory for tpu_custom_call.1']
    #allocation6 [shape = 'u8[196608]{0}', space=vmem, size = 0x30000, scoped, tag = 'input window, operand 1']
    #allocation7 [shape = 's32[2]{0}', space=sflag, size = 0x8, scoped, tag = 'scoped memory for tpu_custom_call.1']
    #allocation8 [shape = 'u8[262144]{0}', space=vmem, size = 0x40000, scoped, tag = 'input window, operand 2']
    #allocation9 [shape = 'u8[1024]{0}', space=vmem, size = 0x400, scoped, tag = 'input window, operand 3']
    #allocation10 [shape = 's32[2]{0}', space=sflag, size = 0x8, scoped, tag = 'scoped memory for tpu_custom_call.1']
    #allocation11 [shape = 'u8[16384]{0}', space=vmem, size = 0x4000, scoped, tag = 'input window, operand 4']
    #allocation12 [shape = 'u8[1024]{0}', space=vmem, size = 0x400, scoped, tag = 'input window, operand 5']
    #allocation13 [shape = 's32[2]{0}', space=sflag, size = 0x8, scoped, tag = 'scoped memory for tpu_custom_call.1']
    #allocation14 [shape = 'u8[65536]{0}', space=vmem, size = 0x10000, scoped, tag = 'input window, operand 6']
    #allocation15 [shape = 'u8[1024]{0}', space=vmem, size = 0x400, scoped, tag = 'input window, operand 7']
    #allocation16 [shape = 's32[2]{0}', space=sflag, size = 0x8, scoped, tag = 'scoped memory for tpu_custom_call.1']
    #allocation17 [shape = 'u8[1024]{0}', space=vmem, size = 0x400, scoped, tag = 'input window, operand 8']
    #allocation18 [shape = 'u8[1024]{0}', space=vmem, size = 0x400, scoped, tag = 'input window, operand 9']
    #allocation19 [shape = 's32[2]{0}', space=sflag, size = 0x8, scoped, tag = 'scoped memory for tpu_custom_call.1']
    #allocation20 [shape = 'u8[1024]{0}', space=vmem, size = 0x400, scoped, tag = 'input window, operand 10']
    #allocation21 [shape = 'u8[1024]{0}', space=vmem, size = 0x400, scoped, tag = 'input window, operand 11']
    #allocation22 [shape = 's32[2]{0}', space=sflag, size = 0x8, scoped, tag = 'scoped memory for tpu_custom_call.1']
    #allocation23 [shape = 'u8[8192]{0}', space=vmem, size = 0x2000, scoped, tag = 'output window, operand 0, single buffered']
    #allocation24 [shape = 'u8[65536]{0}', space=vmem, size = 0x10000, scoped, tag = 'output window, operand 1']
    #allocation25 [shape = 's32[2]{0}', space=sflag, size = 0x8, scoped, tag = 'scoped memory for tpu_custom_call.1']
    %19 = vsyncpa [#allocation4], 0
    %20 = vsyncpa [#allocation7], 0
    %s21 = scalar_lea.sflag [#allocation7], 1
    %22 = vsyncpa %s21, 0
    %23 = vsyncpa [#allocation10], 0
    %s24 = scalar_lea.sflag [#allocation10], 1
    %25 = vsyncpa %s24, 0
    %26 = vsyncpa [#allocation13], 0
    %s27 = scalar_lea.sflag [#allocation13], 1
    %28 = vsyncpa %s27, 0
    %29 = vsyncpa [#allocation16], 0
    %s30 = scalar_lea.sflag [#allocation16], 1
    %31 = vsyncpa %s30, 0
    %32 = vsyncpa [#allocation19], 0
    %s33 = scalar_lea.sflag [#allocation19], 1
    %34 = vsyncpa %s33, 0
    %35 = vsyncpa [#allocation22], 0
    %s36 = scalar_lea.sflag [#allocation22], 1
    %37 = vsyncpa %s36, 0
    %38 = vsyncpa [#allocation5], 0
    %39 = vsyncpa [#allocation25], 0
    %s40 = scalar_lea.sflag [#allocation25], 1
    %41 = vsyncpa %s40, 0
    loop: start=0, step=1, limit=4
    $region2: #{tpu_custom_call.1} parent=1 // loop_pre_header
      _
    $region3: #{tpu_custom_call.1} parent=1 // loop_header
      %s43 = sphi 0, %s47
      %p44 = scmp.ge.s32.totalorder %s43, 4
      %s50 = sphi 0, %s62
      %s51 = sphi 0, %s58
      %s52 = sphi 0, %s50
      %s53 = sphi 0, %s51
      %s54 = sphi 0, %s52
      %s55 = sphi 0, %s53
      %s65 = sphi 0, %s67
      %s68 = sphi 0, %s65
      %s69 = sphi 0, %s68
      %s85 = sphi 0, %s69
      %s91 = sphi 0, %s93
      %s94 = sphi 0, %s91
      %s95 = sphi 0, %s94
      %s111 = sphi 0, %s95
      %s117 = sphi 0, %s119
      %s120 = sphi 0, %s117
      %s121 = sphi 0, %s120
      %s137 = sphi 0, %s121
      %s143 = sphi 0, %s145
      %s146 = sphi 0, %s143
      %s147 = sphi 0, %s146
      %s163 = sphi 0, %s147
      %s169 = sphi 0, %s171
      %s172 = sphi 0, %s169
      %s173 = sphi 0, %s172
      %s189 = sphi 0, %s173
      %s195 = sphi 0, %s197
      %s198 = sphi 0, %s195
      %s199 = sphi 0, %s198
      %s215 = sphi 0, %s199
      %s221 = sphi 0, %s223
      %s224 = sphi 0, %s221
      %s225 = sphi 0, %s224
      %s241 = sphi 0, %s225
      %s247 = sphi 0, %s249
      %s250 = sphi 0, %s247
      %s251 = sphi 0, %s250
      %s267 = sphi 0, %s251
      %s273 = sphi 0, %s275
      %s276 = sphi 0, %s273
      %s277 = sphi 0, %s276
      %s293 = sphi 0, %s277
      %s299 = sphi 0, %s301
      %s302 = sphi 0, %s299
      %s303 = sphi 0, %s302
      %s319 = sphi 0, %s303
      %s325 = sphi 0, %s327
      %s328 = sphi 0, %s325
      %s329 = sphi 0, %s328
      %s345 = sphi 0, %s329
      %s351 = sphi 0, %s353
      %s354 = sphi 0, %s351
      %s355 = sphi 0, %s354
      %s371 = sphi 0, %s355
      %s377 = sphi 0, %s379
      %s380 = sphi 0, %s377
      %s381 = sphi 0, %s380
      %s397 = sphi 0, %s381
      %s405 = sphi 0, %s407
      %s408 = sphi 0, %s405
      %s409 = sphi 0, %s408
      %s425 = sphi 0, %s409
    $region4: #{tpu_custom_call.1} parent=1 // loop_header_branch
      %46 = sbr.rel (%p44) target = $region8
    $region5: #{tpu_custom_call.1} parent=1 // loop_body
      %s48 = ssub.s32 %s43, 1
      %s49 = ssub.s32 %s43, 2
      %s56 = sadd.s32 1, %s51
      %p57 = scmp.ge.s32.totalorder %s56, 2
      %s58 = scalar_select %p57, 0, %s56
      %s59 = sadd.s32 1, %s50
      %s60 = scalar_select %p57, %s59, %s50
      %p61 = scmp.ge.s32.totalorder %s60, 1
      %s62 = scalar_select %p61, 0, %s60
      %s63 = ssub.s32 %s50, %s62
      %p64 = scmp.eq.s32.totalorder %s63, 0
      %s66 = sadd.s32 %s65, 1
      %s67 = scalar_select %p64, %s65, %s66
      %p70 = pneg %p64
      %p71 = scmp.eq.s32.totalorder %s43, 1
      %p72 = por %p70, %p71
      %p73 = scmp.ne.s32.totalorder %s65, %s68
      %p74 = scmp.eq.s32.totalorder %s43, 0
      %p75 = por %p73, %p74
      %p76 = scmp.ne.s32.totalorder %s65, %s68
      %p77 = scmp.eq.s32.totalorder %s48, 1
      %p78 = por %p76, %p77
      %p79 = scmp.ne.s32.totalorder %s68, %s69
      %p80 = scmp.eq.s32.totalorder %s48, 0
      %p81 = por %p79, %p80
      %p82 = scmp.ne.s32.totalorder %s68, %s69
      %p83 = scmp.eq.s32.totalorder %s49, 1
      %p84 = por %p82, %p83
      %p86 = scmp.ne.s32.totalorder %s69, %s85
      %p87 = scmp.eq.s32.totalorder %s49, 0
      %p88 = por %p86, %p87
      %s89 = ssub.s32 %s51, %s58
      %p90 = scmp.eq.s32.totalorder %s89, 0
      %s92 = sadd.s32 %s91, 1
      %s93 = scalar_select %p90, %s91, %s92
      %p96 = pneg %p90
      %p97 = scmp.eq.s32.totalorder %s43, 1
      %p98 = por %p96, %p97
      %p99 = scmp.ne.s32.totalorder %s91, %s94
      %p100 = scmp.eq.s32.totalorder %s43, 0
      %p101 = por %p99, %p100
      %p102 = scmp.ne.s32.totalorder %s91, %s94
      %p103 = scmp.eq.s32.totalorder %s48, 1
      %p104 = por %p102, %p103
      %p105 = scmp.ne.s32.totalorder %s94, %s95
      %p106 = scmp.eq.s32.totalorder %s48, 0
      %p107 = por %p105, %p106
      %p108 = scmp.ne.s32.totalorder %s94, %s95
      %p109 = scmp.eq.s32.totalorder %s49, 1
      %p110 = por %p108, %p109
      %p112 = scmp.ne.s32.totalorder %s95, %s111
      %p113 = scmp.eq.s32.totalorder %s49, 0
      %p114 = por %p112, %p113
      %s115 = ssub.s32 %s51, %s58
      %p116 = scmp.eq.s32.totalorder %s115, 0
      %s118 = sadd.s32 %s117, 1
      %s119 = scalar_select %p116, %s117, %s118
      %p122 = pneg %p116
      %p123 = scmp.eq.s32.totalorder %s43, 1
      %p124 = por %p122, %p123
      %p125 = scmp.ne.s32.totalorder %s117, %s120
      %p126 = scmp.eq.s32.totalorder %s43, 0
      %p127 = por %p125, %p126
      %p128 = scmp.ne.s32.totalorder %s117, %s120
      %p129 = scmp.eq.s32.totalorder %s48, 1
      %p130 = por %p128, %p129
      %p131 = scmp.ne.s32.totalorder %s120, %s121
      %p132 = scmp.eq.s32.totalorder %s48, 0
      %p133 = por %p131, %p132
      %p134 = scmp.ne.s32.totalorder %s120, %s121
      %p135 = scmp.eq.s32.totalorder %s49, 1
      %p136 = por %p134, %p135
      %p138 = scmp.ne.s32.totalorder %s121, %s137
      %p139 = scmp.eq.s32.totalorder %s49, 0
      %p140 = por %p138, %p139
      %s141 = ssub.s32 %s51, %s58
      %p142 = scmp.eq.s32.totalorder %s141, 0
      %s144 = sadd.s32 %s143, 1
      %s145 = scalar_select %p142, %s143, %s144
      %p148 = pneg %p142
      %p149 = scmp.eq.s32.totalorder %s43, 1
      %p150 = por %p148, %p149
      %p151 = scmp.ne.s32.totalorder %s143, %s146
      %p152 = scmp.eq.s32.totalorder %s43, 0
      %p153 = por %p151, %p152
      %p154 = scmp.ne.s32.totalorder %s143, %s146
      %p155 = scmp.eq.s32.totalorder %s48, 1
      %p156 = por %p154, %p155
      %p157 = scmp.ne.s32.totalorder %s146, %s147
      %p158 = scmp.eq.s32.totalorder %s48, 0
      %p159 = por %p157, %p158
      %p160 = scmp.ne.s32.totalorder %s146, %s147
      %p161 = scmp.eq.s32.totalorder %s49, 1
      %p162 = por %p160, %p161
      %p164 = scmp.ne.s32.totalorder %s147, %s163
      %p165 = scmp.eq.s32.totalorder %s49, 0
      %p166 = por %p164, %p165
      %s167 = ssub.s32 %s51, %s58
      %p168 = scmp.eq.s32.totalorder %s167, 0
      %s170 = sadd.s32 %s169, 1
      %s171 = scalar_select %p168, %s169, %s170
      %p174 = pneg %p168
      %p175 = scmp.eq.s32.totalorder %s43, 1
      %p176 = por %p174, %p175
      %p177 = scmp.ne.s32.totalorder %s169, %s172
      %p178 = scmp.eq.s32.totalorder %s43, 0
      %p179 = por %p177, %p178
      %p180 = scmp.ne.s32.totalorder %s169, %s172
      %p181 = scmp.eq.s32.totalorder %s48, 1
      %p182 = por %p180, %p181
      %p183 = scmp.ne.s32.totalorder %s172, %s173
      %p184 = scmp.eq.s32.totalorder %s48, 0
      %p185 = por %p183, %p184
      %p186 = scmp.ne.s32.totalorder %s172, %s173
      %p187 = scmp.eq.s32.totalorder %s49, 1
      %p188 = por %p186, %p187
      %p190 = scmp.ne.s32.totalorder %s173, %s189
      %p191 = scmp.eq.s32.totalorder %s49, 0
      %p192 = por %p190, %p191
      %s193 = ssub.s32 %s51, %s58
      %p194 = scmp.eq.s32.totalorder %s193, 0
      %s196 = sadd.s32 %s195, 1
      %s197 = scalar_select %p194, %s195, %s196
      %p200 = pneg %p194
      %p201 = scmp.eq.s32.totalorder %s43, 1
      %p202 = por %p200, %p201
      %p203 = scmp.ne.s32.totalorder %s195, %s198
      %p204 = scmp.eq.s32.totalorder %s43, 0
      %p205 = por %p203, %p204
      %p206 = scmp.ne.s32.totalorder %s195, %s198
      %p207 = scmp.eq.s32.totalorder %s48, 1
      %p208 = por %p206, %p207
      %p209 = scmp.ne.s32.totalorder %s198, %s199
      %p210 = scmp.eq.s32.totalorder %s48, 0
      %p211 = por %p209, %p210
      %p212 = scmp.ne.s32.totalorder %s198, %s199
      %p213 = scmp.eq.s32.totalorder %s49, 1
      %p214 = por %p212, %p213
      %p216 = scmp.ne.s32.totalorder %s199, %s215
      %p217 = scmp.eq.s32.totalorder %s49, 0
      %p218 = por %p216, %p217
      %s219 = ssub.s32 %s51, %s58
      %p220 = scmp.eq.s32.totalorder %s219, 0
      %s222 = sadd.s32 %s221, 1
      %s223 = scalar_select %p220, %s221, %s222
      %p226 = pneg %p220
      %p227 = scmp.eq.s32.totalorder %s43, 1
      %p228 = por %p226, %p227
      %p229 = scmp.ne.s32.totalorder %s221, %s224
      %p230 = scmp.eq.s32.totalorder %s43, 0
      %p231 = por %p229, %p230
      %p232 = scmp.ne.s32.totalorder %s221, %s224
      %p233 = scmp.eq.s32.totalorder %s48, 1
      %p234 = por %p232, %p233
      %p235 = scmp.ne.s32.totalorder %s224, %s225
      %p236 = scmp.eq.s32.totalorder %s48, 0
      %p237 = por %p235, %p236
      %p238 = scmp.ne.s32.totalorder %s224, %s225
      %p239 = scmp.eq.s32.totalorder %s49, 1
      %p240 = por %p238, %p239
      %p242 = scmp.ne.s32.totalorder %s225, %s241
      %p243 = scmp.eq.s32.totalorder %s49, 0
      %p244 = por %p242, %p243
      %s245 = ssub.s32 %s51, %s58
      %p246 = scmp.eq.s32.totalorder %s245, 0
      %s248 = sadd.s32 %s247, 1
      %s249 = scalar_select %p246, %s247, %s248
      %p252 = pneg %p246
      %p253 = scmp.eq.s32.totalorder %s43, 1
      %p254 = por %p252, %p253
      %p255 = scmp.ne.s32.totalorder %s247, %s250
      %p256 = scmp.eq.s32.totalorder %s43, 0
      %p257 = por %p255, %p256
      %p258 = scmp.ne.s32.totalorder %s247, %s250
      %p259 = scmp.eq.s32.totalorder %s48, 1
      %p260 = por %p258, %p259
      %p261 = scmp.ne.s32.totalorder %s250, %s251
      %p262 = scmp.eq.s32.totalorder %s48, 0
      %p263 = por %p261, %p262
      %p264 = scmp.ne.s32.totalorder %s250, %s251
      %p265 = scmp.eq.s32.totalorder %s49, 1
      %p266 = por %p264, %p265
      %p268 = scmp.ne.s32.totalorder %s251, %s267
      %p269 = scmp.eq.s32.totalorder %s49, 0
      %p270 = por %p268, %p269
      %s271 = ssub.s32 %s51, %s58
      %p272 = scmp.eq.s32.totalorder %s271, 0
      %s274 = sadd.s32 %s273, 1
      %s275 = scalar_select %p272, %s273, %s274
      %p278 = pneg %p272
      %p279 = scmp.eq.s32.totalorder %s43, 1
      %p280 = por %p278, %p279
      %p281 = scmp.ne.s32.totalorder %s273, %s276
      %p282 = scmp.eq.s32.totalorder %s43, 0
      %p283 = por %p281, %p282
      %p284 = scmp.ne.s32.totalorder %s273, %s276
      %p285 = scmp.eq.s32.totalorder %s48, 1
      %p286 = por %p284, %p285
      %p287 = scmp.ne.s32.totalorder %s276, %s277
      %p288 = scmp.eq.s32.totalorder %s48, 0
      %p289 = por %p287, %p288
      %p290 = scmp.ne.s32.totalorder %s276, %s277
      %p291 = scmp.eq.s32.totalorder %s49, 1
      %p292 = por %p290, %p291
      %p294 = scmp.ne.s32.totalorder %s277, %s293
      %p295 = scmp.eq.s32.totalorder %s49, 0
      %p296 = por %p294, %p295
      %s297 = ssub.s32 %s51, %s58
      %p298 = scmp.eq.s32.totalorder %s297, 0
      %s300 = sadd.s32 %s299, 1
      %s301 = scalar_select %p298, %s299, %s300
      %p304 = pneg %p298
      %p305 = scmp.eq.s32.totalorder %s43, 1
      %p306 = por %p304, %p305
      %p307 = scmp.ne.s32.totalorder %s299, %s302
      %p308 = scmp.eq.s32.totalorder %s43, 0
      %p309 = por %p307, %p308
      %p310 = scmp.ne.s32.totalorder %s299, %s302
      %p311 = scmp.eq.s32.totalorder %s48, 1
      %p312 = por %p310, %p311
      %p313 = scmp.ne.s32.totalorder %s302, %s303
      %p314 = scmp.eq.s32.totalorder %s48, 0
      %p315 = por %p313, %p314
      %p316 = scmp.ne.s32.totalorder %s302, %s303
      %p317 = scmp.eq.s32.totalorder %s49, 1
      %p318 = por %p316, %p317
      %p320 = scmp.ne.s32.totalorder %s303, %s319
      %p321 = scmp.eq.s32.totalorder %s49, 0
      %p322 = por %p320, %p321
      %s323 = ssub.s32 %s51, %s58
      %p324 = scmp.eq.s32.totalorder %s323, 0
      %s326 = sadd.s32 %s325, 1
      %s327 = scalar_select %p324, %s325, %s326
      %p330 = pneg %p324
      %p331 = scmp.eq.s32.totalorder %s43, 1
      %p332 = por %p330, %p331
      %p333 = scmp.ne.s32.totalorder %s325, %s328
      %p334 = scmp.eq.s32.totalorder %s43, 0
      %p335 = por %p333, %p334
      %p336 = scmp.ne.s32.totalorder %s325, %s328
      %p337 = scmp.eq.s32.totalorder %s48, 1
      %p338 = por %p336, %p337
      %p339 = scmp.ne.s32.totalorder %s328, %s329
      %p340 = scmp.eq.s32.totalorder %s48, 0
      %p341 = por %p339, %p340
      %p342 = scmp.ne.s32.totalorder %s328, %s329
      %p343 = scmp.eq.s32.totalorder %s49, 1
      %p344 = por %p342, %p343
      %p346 = scmp.ne.s32.totalorder %s329, %s345
      %p347 = scmp.eq.s32.totalorder %s49, 0
      %p348 = por %p346, %p347
      %s349 = ssub.s32 %s51, %s58
      %p350 = scmp.eq.s32.totalorder %s349, 0
      %s352 = sadd.s32 %s351, 1
      %s353 = scalar_select %p350, %s351, %s352
      %p356 = pneg %p350
      %p357 = scmp.eq.s32.totalorder %s43, 1
      %p358 = por %p356, %p357
      %p359 = scmp.ne.s32.totalorder %s351, %s354
      %p360 = scmp.eq.s32.totalorder %s43, 0
      %p361 = por %p359, %p360
      %p362 = scmp.ne.s32.totalorder %s351, %s354
      %p363 = scmp.eq.s32.totalorder %s48, 1
      %p364 = por %p362, %p363
      %p365 = scmp.ne.s32.totalorder %s354, %s355
      %p366 = scmp.eq.s32.totalorder %s48, 0
      %p367 = por %p365, %p366
      %p368 = scmp.ne.s32.totalorder %s354, %s355
      %p369 = scmp.eq.s32.totalorder %s49, 1
      %p370 = por %p368, %p369
      %p372 = scmp.ne.s32.totalorder %s355, %s371
      %p373 = scmp.eq.s32.totalorder %s49, 0
      %p374 = por %p372, %p373
      %s375 = ssub.s32 %s50, %s62
      %p376 = scmp.eq.s32.totalorder %s375, 0
      %s378 = sadd.s32 %s377, 1
      %s379 = scalar_select %p376, %s377, %s378
      %p382 = pneg %p376
      %p383 = scmp.eq.s32.totalorder %s43, 1
      %p384 = por %p382, %p383
      %p385 = scmp.ne.s32.totalorder %s377, %s380
      %p386 = scmp.eq.s32.totalorder %s43, 0
      %p387 = por %p385, %p386
      %p388 = scmp.ne.s32.totalorder %s377, %s380
      %p389 = scmp.eq.s32.totalorder %s48, 1
      %p390 = por %p388, %p389
      %p391 = scmp.ne.s32.totalorder %s380, %s381
      %p392 = scmp.eq.s32.totalorder %s48, 0
      %p393 = por %p391, %p392
      %p394 = scmp.ne.s32.totalorder %s380, %s381
      %p395 = scmp.eq.s32.totalorder %s49, 1
      %p396 = por %p394, %p395
      %p398 = scmp.ne.s32.totalorder %s381, %s397
      %p399 = scmp.eq.s32.totalorder %s49, 0
      %p400 = por %p398, %p399
      %s401 = ssub.s32 %s50, %s62
      %s402 = ssub.s32 %s51, %s58
      %s403 = sor.u32 %s401, %s402
      %p404 = scmp.eq.s32.totalorder %s403, 0
      %s406 = sadd.s32 %s405, 1
      %s407 = scalar_select %p404, %s405, %s406
      %p410 = pneg %p404
      %p411 = scmp.eq.s32.totalorder %s43, 1
      %p412 = por %p410, %p411
      %p413 = scmp.ne.s32.totalorder %s405, %s408
      %p414 = scmp.eq.s32.totalorder %s43, 0
      %p415 = por %p413, %p414
      %p416 = scmp.ne.s32.totalorder %s405, %s408
      %p417 = scmp.eq.s32.totalorder %s48, 1
      %p418 = por %p416, %p417
      %p419 = scmp.ne.s32.totalorder %s408, %s409
      %p420 = scmp.eq.s32.totalorder %s48, 0
      %p421 = por %p419, %p420
      %p422 = scmp.ne.s32.totalorder %s408, %s409
      %p423 = scmp.eq.s32.totalorder %s49, 1
      %p424 = por %p422, %p423
      %p426 = scmp.ne.s32.totalorder %s409, %s425
      %p427 = scmp.eq.s32.totalorder %s49, 0
      %p428 = por %p426, %p427
      %p429 = scmp.le.s32.totalorder 1, %s43
      %p430 = scmp.lt.s32.totalorder %s43, 3
      %p431 = pnand %p429, %p430
      %p432 = pneg %p431
      // Predicated region
      $region9: #{tpu_custom_call.1} parent=5 // pred_check
        _
      $region10: #{tpu_custom_call.1} parent=5 // pred_check_branch
        %434 = sbr.rel (%p431) target = $region12
      $region11: #{tpu_custom_call.1} parent=5 // pred_region
        %s435 = ssub.s32 %s43, 1
        // Predicated region
        $region13: #{tpu_custom_call.1} parent=11 // pred_check
          %p436 = pneg %p81
        $region14: #{tpu_custom_call.1} parent=11 // pred_check_branch
          %438 = sbr.rel (%p436) target = $region16
        $region15: #{tpu_custom_call.1} parent=11 // pred_region
          %s439 = smul.u32 2, %s52
          %s441 = ssub.s32 256, 256
          %442 = vsyncadd [#allocation4], %s441
          %s443 = smul.addr %s439, 128
          %s444 = scalar_lea.hbm %s0, %s443
          %s445 = sshll.u32 [#allocation3], 4
          %s446 = int_to_ptr.vmem [resolvable:$true] %s445
          %451 = dma.hbm_to_vmem [thread:$0]  %s444, 256, %s446, [#allocation4], 128, 128, 8
        $region16: #{tpu_custom_call.1} parent=11 // pred_fallthru
          _
      $region12: #{tpu_custom_call.1} parent=5 // pred_fallthru
        _
      %p452 = scmp.lt.s32.totalorder %s43, 2
      // Predicated region
      $region17: #{tpu_custom_call.1} parent=5 // pred_check
        %p453 = pneg %p452
      $region18: #{tpu_custom_call.1} parent=5 // pred_check_branch
        %455 = sbr.rel (%p453) target = $region20
      $region19: #{tpu_custom_call.1} parent=5 // pred_region
        // Predicated region
        $region21: #{tpu_custom_call.1} parent=19 // pred_check
          %p456 = pneg %p101
        $region22: #{tpu_custom_call.1} parent=19 // pred_check_branch
          %458 = sbr.rel (%p456) target = $region24
        $region23: #{tpu_custom_call.1} parent=19 // pred_region
          %s459 = sand.u32 %s43, 1
          %s460 = scalar_lea.sflag [#allocation7], %s459
          %s461 = sand.u32 %s91, 1
          %s462 = smul.addr %s461, 192
          %s463 = scalar_lea.vmem [#allocation6], %s462
          %s465 = ssub.s32 3072, 3072
          %466 = vsyncadd %s460, %s465
          %s467 = smul.addr %s51, 48
          %s468 = smul.addr %s467, 64
          %s469 = scalar_lea.hbm %s1, %s468
          %s470 = sshll.u32 %s463, 4
          %s471 = int_to_ptr.vmem [resolvable:$true] %s470
          %476 = dma.hbm_to_vmem [thread:$0]  %s469, 3072, %s471, %s460, 768, 768, 48
        $region24: #{tpu_custom_call.1} parent=19 // pred_fallthru
          _
        // Predicated region
        $region25: #{tpu_custom_call.1} parent=19 // pred_check
          %p477 = pneg %p127
        $region26: #{tpu_custom_call.1} parent=19 // pred_check_branch
          %479 = sbr.rel (%p477) target = $region28
        $region27: #{tpu_custom_call.1} parent=19 // pred_region
          %s480 = sand.u32 %s43, 1
          %s481 = scalar_lea.sflag [#allocation7], %s480
          %s482 = sand.u32 %s117, 1
          %s483 = smul.addr %s482, 256
          %s484 = scalar_lea.vmem [#allocation8], %s483
          %s486 = ssub.s32 4096, 4096
          %487 = vsyncadd %s481, %s486
          %s488 = smul.addr %s51, 64
          %s489 = smul.addr %s488, 64
          %s490 = scalar_lea.hbm %s2, %s489
          %s491 = sshll.u32 %s484, 4
          %s492 = int_to_ptr.vmem [resolvable:$true] %s491
          %497 = dma.hbm_to_vmem [thread:$0]  %s490, 4096, %s492, %s481, 64, 64, 4
        $region28: #{tpu_custom_call.1} parent=19 // pred_fallthru
          _
        // Predicated region
        $region29: #{tpu_custom_call.1} parent=19 // pred_check
          %p498 = pneg %p153
        $region30: #{tpu_custom_call.1} parent=19 // pred_check_branch
          %500 = sbr.rel (%p498) target = $region32
        $region31: #{tpu_custom_call.1} parent=19 // pred_region
          %s501 = sand.u32 %s43, 1
          %s502 = scalar_lea.sflag [#allocation10], %s501
          %s503 = sand.u32 %s143, 1
          %s504 = scalar_lea.vmem [#allocation9], %s503
          %s506 = ssub.s32 16, 16
          %507 = vsyncadd %s502, %s506
          %s508 = smul.addr %s51, 16
          %s509 = scalar_lea.hbm %s3, %s508
          %s511 = sshll.u32 %s504, 4
          %s512 = int_to_ptr.vmem [resolvable:$true] %s511
          %514 = dma.hbm_to_vmem [thread:$0]  %s509, 16, %s512, %s502
        $region32: #{tpu_custom_call.1} parent=19 // pred_fallthru
          _
        // Predicated region
        $region33: #{tpu_custom_call.1} parent=19 // pred_check
          %p515 = pneg %p179
        $region34: #{tpu_custom_call.1} parent=19 // pred_check_branch
          %517 = sbr.rel (%p515) target = $region36
        $region35: #{tpu_custom_call.1} parent=19 // pred_region
          %s518 = sand.u32 %s43, 1
          %s519 = scalar_lea.sflag [#allocation10], %s518
          %s520 = sand.u32 %s169, 1
          %s521 = smul.addr %s520, 16
          %s522 = scalar_lea.vmem [#allocation11], %s521
          %s524 = ssub.s32 256, 256
          %525 = vsyncadd %s519, %s524
          %s526 = smul.addr %s51, 4
          %s527 = smul.addr %s526, 64
          %s528 = scalar_lea.hbm %s4, %s527
          %s529 = sshll.u32 %s522, 4
          %s530 = int_to_ptr.vmem [resolvable:$true] %s529
          %535 = dma.hbm_to_vmem [thread:$0]  %s528, 256, %s530, %s519, 64, 64, 4
        $region36: #{tpu_custom_call.1} parent=19 // pred_fallthru
          _
        // Predicated region
        $region37: #{tpu_custom_call.1} parent=19 // pred_check
          %p536 = pneg %p205
        $region38: #{tpu_custom_call.1} parent=19 // pred_check_branch
          %538 = sbr.rel (%p536) target = $region40
        $region39: #{tpu_custom_call.1} parent=19 // pred_region
          %s539 = sand.u32 %s43, 1
          %s540 = scalar_lea.sflag [#allocation13], %s539
          %s541 = sand.u32 %s195, 1
          %s542 = scalar_lea.vmem [#allocation12], %s541
          %s544 = ssub.s32 16, 16
          %545 = vsyncadd %s540, %s544
          %s546 = smul.addr %s51, 16
          %s547 = scalar_lea.hbm %s5, %s546
          %s549 = sshll.u32 %s542, 4
          %s550 = int_to_ptr.vmem [resolvable:$true] %s549
          %552 = dma.hbm_to_vmem [thread:$0]  %s547, 16, %s550, %s540
        $region40: #{tpu_custom_call.1} parent=19 // pred_fallthru
          _
        // Predicated region
        $region41: #{tpu_custom_call.1} parent=19 // pred_check
          %p553 = pneg %p231
        $region42: #{tpu_custom_call.1} parent=19 // pred_check_branch
          %555 = sbr.rel (%p553) target = $region44
        $region43: #{tpu_custom_call.1} parent=19 // pred_region
          %s556 = sand.u32 %s43, 1
          %s557 = scalar_lea.sflag [#allocation13], %s556
          %s558 = sand.u32 %s221, 1
          %s559 = smul.addr %s558, 64
          %s560 = scalar_lea.vmem [#allocation14], %s559
          %s562 = ssub.s32 1024, 1024
          %563 = vsyncadd %s557, %s562
          %s564 = smul.addr %s51, 16
          %s565 = smul.addr %s564, 64
          %s566 = scalar_lea.hbm %s6, %s565
          %s567 = sshll.u32 %s560, 4
          %s568 = int_to_ptr.vmem [resolvable:$true] %s567
          %573 = dma.hbm_to_vmem [thread:$0]  %s566, 1024, %s568, %s557, 64, 64, 4
        $region44: #{tpu_custom_call.1} parent=19 // pred_fallthru
          _
        // Predicated region
        $region45: #{tpu_custom_call.1} parent=19 // pred_check
          %p574 = pneg %p257
        $region46: #{tpu_custom_call.1} parent=19 // pred_check_branch
          %576 = sbr.rel (%p574) target = $region48
        $region47: #{tpu_custom_call.1} parent=19 // pred_region
          %s577 = sand.u32 %s43, 1
          %s578 = scalar_lea.sflag [#allocation16], %s577
          %s579 = sand.u32 %s247, 1
          %s580 = scalar_lea.vmem [#allocation15], %s579
          %s582 = ssub.s32 16, 16
          %583 = vsyncadd %s578, %s582
          %s584 = smul.addr %s51, 16
          %s585 = scalar_lea.hbm %s7, %s584
          %s587 = sshll.u32 %s580, 4
          %s588 = int_to_ptr.vmem [resolvable:$true] %s587
          %590 = dma.hbm_to_vmem [thread:$0]  %s585, 16, %s588, %s578
        $region48: #{tpu_custom_call.1} parent=19 // pred_fallthru
          _
        // Predicated region
        $region49: #{tpu_custom_call.1} parent=19 // pred_check
          %p591 = pneg %p283
        $region50: #{tpu_custom_call.1} parent=19 // pred_check_branch
          %593 = sbr.rel (%p591) target = $region52
        $region51: #{tpu_custom_call.1} parent=19 // pred_region
          %s594 = sand.u32 %s43, 1
          %s595 = scalar_lea.sflag [#allocation16], %s594
          %s596 = sand.u32 %s273, 1
          %s597 = scalar_lea.vmem [#allocation17], %s596
          %s599 = ssub.s32 16, 16
          %600 = vsyncadd %s595, %s599
          %s601 = smul.addr %s51, 16
          %s602 = scalar_lea.hbm %s8, %s601
          %s604 = sshll.u32 %s597, 4
          %s605 = int_to_ptr.vmem [resolvable:$true] %s604
          %607 = dma.hbm_to_vmem [thread:$0]  %s602, 16, %s605, %s595
        $region52: #{tpu_custom_call.1} parent=19 // pred_fallthru
          _
        // Predicated region
        $region53: #{tpu_custom_call.1} parent=19 // pred_check
          %p608 = pneg %p309
        $region54: #{tpu_custom_call.1} parent=19 // pred_check_branch
          %610 = sbr.rel (%p608) target = $region56
        $region55: #{tpu_custom_call.1} parent=19 // pred_region
          %s611 = sand.u32 %s43, 1
          %s612 = scalar_lea.sflag [#allocation19], %s611
          %s613 = sand.u32 %s299, 1
          %s614 = scalar_lea.vmem [#allocation18], %s613
          %s616 = ssub.s32 16, 16
          %617 = vsyncadd %s612, %s616
          %s618 = smul.addr %s51, 16
          %s619 = scalar_lea.hbm %s9, %s618
          %s621 = sshll.u32 %s614, 4
          %s622 = int_to_ptr.vmem [resolvable:$true] %s621
          %624 = dma.hbm_to_vmem [thread:$0]  %s619, 16, %s622, %s612
        $region56: #{tpu_custom_call.1} parent=19 // pred_fallthru
          _
        // Predicated region
        $region57: #{tpu_custom_call.1} parent=19 // pred_check
          %p625 = pneg %p335
        $region58: #{tpu_custom_call.1} parent=19 // pred_check_branch
          %627 = sbr.rel (%p625) target = $region60
        $region59: #{tpu_custom_call.1} parent=19 // pred_region
          %s628 = sand.u32 %s43, 1
          %s629 = scalar_lea.sflag [#allocation19], %s628
          %s630 = sand.u32 %s325, 1
          %s631 = scalar_lea.vmem [#allocation20], %s630
          %s633 = ssub.s32 16, 16
          %634 = vsyncadd %s629, %s633
          %s635 = smul.addr %s51, 16
          %s636 = scalar_lea.hbm %s10, %s635
          %s638 = sshll.u32 %s631, 4
          %s639 = int_to_ptr.vmem [resolvable:$true] %s638
          %641 = dma.hbm_to_vmem [thread:$0]  %s636, 16, %s639, %s629
        $region60: #{tpu_custom_call.1} parent=19 // pred_fallthru
          _
        // Predicated region
        $region61: #{tpu_custom_call.1} parent=19 // pred_check
          %p642 = pneg %p361
        $region62: #{tpu_custom_call.1} parent=19 // pred_check_branch
          %644 = sbr.rel (%p642) target = $region64
        $region63: #{tpu_custom_call.1} parent=19 // pred_region
          %s645 = sand.u32 %s351, 1
          %s646 = scalar_lea.sflag [#allocation22], %s645
          %s647 = sand.u32 %s351, 1
          %s648 = scalar_lea.vmem [#allocation21], %s647
          %s650 = ssub.s32 16, 16
          %651 = vsyncadd %s646, %s650
          %s652 = smul.addr %s51, 16
          %s653 = scalar_lea.hbm %s11, %s652
          %s655 = sshll.u32 %s648, 4
          %s656 = int_to_ptr.vmem [resolvable:$true] %s655
          %658 = dma.hbm_to_vmem [thread:$0]  %s653, 16, %s656, %s646
        $region64: #{tpu_custom_call.1} parent=19 // pred_fallthru
          _
      $region20: #{tpu_custom_call.1} parent=5 // pred_fallthru
        _
      %p659 = scmp.le.s32.totalorder 1, %s43
      %p660 = scmp.lt.s32.totalorder %s43, 3
      %p661 = pnand %p659, %p660
      %p662 = pneg %p661
      // Predicated region
      $region65: #{tpu_custom_call.1} parent=5 // pred_check
        _
      $region66: #{tpu_custom_call.1} parent=5 // pred_check_branch
        %664 = sbr.rel (%p661) target = $region68
      $region67: #{tpu_custom_call.1} parent=5 // pred_region
        %s665 = ssub.s32 %s43, 1
        // Predicated region
        $region69: #{tpu_custom_call.1} parent=67 // pred_check
          %p666 = pneg %p81
        $region70: #{tpu_custom_call.1} parent=67 // pred_check_branch
          %668 = sbr.rel (%p666) target = $region72
        $region71: #{tpu_custom_call.1} parent=67 // pred_region
          %669 = dma.done [#allocation4], 256
        $region72: #{tpu_custom_call.1} parent=67 // pred_fallthru
          _
        %s670 = sand.u32 %s48, 1
        %s671 = scalar_lea.sflag [#allocation7], %s670
        %s672 = sand.u32 %s94, 1
        %s673 = smul.addr %s672, 192
        %s674 = scalar_lea.vmem [#allocation6], %s673
        // Predicated region
        $region73: #{tpu_custom_call.1} parent=67 // pred_check
          %p675 = pneg %p107
        $region74: #{tpu_custom_call.1} parent=67 // pred_check_branch
          %677 = sbr.rel (%p675) target = $region76
        $region75: #{tpu_custom_call.1} parent=67 // pred_region
          %678 = dma.done %s671, 3072
        $region76: #{tpu_custom_call.1} parent=67 // pred_fallthru
          _
        %s679 = sand.u32 %s48, 1
        %s680 = scalar_lea.sflag [#allocation7], %s679
        %s681 = sand.u32 %s120, 1
        %s682 = smul.addr %s681, 256
        %s683 = scalar_lea.vmem [#allocation8], %s682
        // Predicated region
        $region77: #{tpu_custom_call.1} parent=67 // pred_check
          %p684 = pneg %p133
        $region78: #{tpu_custom_call.1} parent=67 // pred_check_branch
          %686 = sbr.rel (%p684) target = $region80
        $region79: #{tpu_custom_call.1} parent=67 // pred_region
          %687 = dma.done %s680, 4096
        $region80: #{tpu_custom_call.1} parent=67 // pred_fallthru
          _
        %s688 = sand.u32 %s48, 1
        %s689 = scalar_lea.sflag [#allocation10], %s688
        %s690 = sand.u32 %s146, 1
        %s691 = scalar_lea.vmem [#allocation9], %s690
        // Predicated region
        $region81: #{tpu_custom_call.1} parent=67 // pred_check
          %p692 = pneg %p159
        $region82: #{tpu_custom_call.1} parent=67 // pred_check_branch
          %694 = sbr.rel (%p692) target = $region84
        $region83: #{tpu_custom_call.1} parent=67 // pred_region
          %695 = dma.done %s689, 16
        $region84: #{tpu_custom_call.1} parent=67 // pred_fallthru
          _
        %s696 = sand.u32 %s48, 1
        %s697 = scalar_lea.sflag [#allocation10], %s696
        %s698 = sand.u32 %s172, 1
        %s699 = smul.addr %s698, 16
        %s700 = scalar_lea.vmem [#allocation11], %s699
        // Predicated region
        $region85: #{tpu_custom_call.1} parent=67 // pred_check
          %p701 = pneg %p185
        $region86: #{tpu_custom_call.1} parent=67 // pred_check_branch
          %703 = sbr.rel (%p701) target = $region88
        $region87: #{tpu_custom_call.1} parent=67 // pred_region
          %704 = dma.done %s697, 256
        $region88: #{tpu_custom_call.1} parent=67 // pred_fallthru
          _
        %s705 = sand.u32 %s48, 1
        %s706 = scalar_lea.sflag [#allocation13], %s705
        %s707 = sand.u32 %s198, 1
        %s708 = scalar_lea.vmem [#allocation12], %s707
        // Predicated region
        $region89: #{tpu_custom_call.1} parent=67 // pred_check
          %p709 = pneg %p211
        $region90: #{tpu_custom_call.1} parent=67 // pred_check_branch
          %711 = sbr.rel (%p709) target = $region92
        $region91: #{tpu_custom_call.1} parent=67 // pred_region
          %712 = dma.done %s706, 16
        $region92: #{tpu_custom_call.1} parent=67 // pred_fallthru
          _
        %s713 = sand.u32 %s48, 1
        %s714 = scalar_lea.sflag [#allocation13], %s713
        %s715 = sand.u32 %s224, 1
        %s716 = smul.addr %s715, 64
        %s717 = scalar_lea.vmem [#allocation14], %s716
        // Predicated region
        $region93: #{tpu_custom_call.1} parent=67 // pred_check
          %p718 = pneg %p237
        $region94: #{tpu_custom_call.1} parent=67 // pred_check_branch
          %720 = sbr.rel (%p718) target = $region96
        $region95: #{tpu_custom_call.1} parent=67 // pred_region
          %721 = dma.done %s714, 1024
        $region96: #{tpu_custom_call.1} parent=67 // pred_fallthru
          _
        %s722 = sand.u32 %s48, 1
        %s723 = scalar_lea.sflag [#allocation16], %s722
        %s724 = sand.u32 %s250, 1
        %s725 = scalar_lea.vmem [#allocation15], %s724
        // Predicated region
        $region97: #{tpu_custom_call.1} parent=67 // pred_check
          %p726 = pneg %p263
        $region98: #{tpu_custom_call.1} parent=67 // pred_check_branch
          %728 = sbr.rel (%p726) target = $region100
        $region99: #{tpu_custom_call.1} parent=67 // pred_region
          %729 = dma.done %s723, 16
        $region100: #{tpu_custom_call.1} parent=67 // pred_fallthru
          _
        %s730 = sand.u32 %s48, 1
        %s731 = scalar_lea.sflag [#allocation16], %s730
        %s732 = sand.u32 %s276, 1
        %s733 = scalar_lea.vmem [#allocation17], %s732
        // Predicated region
        $region101: #{tpu_custom_call.1} parent=67 // pred_check
          %p734 = pneg %p289
        $region102: #{tpu_custom_call.1} parent=67 // pred_check_branch
          %736 = sbr.rel (%p734) target = $region104
        $region103: #{tpu_custom_call.1} parent=67 // pred_region
          %737 = dma.done %s731, 16
        $region104: #{tpu_custom_call.1} parent=67 // pred_fallthru
          _
        %s738 = sand.u32 %s48, 1
        %s739 = scalar_lea.sflag [#allocation19], %s738
        %s740 = sand.u32 %s302, 1
        %s741 = scalar_lea.vmem [#allocation18], %s740
        // Predicated region
        $region105: #{tpu_custom_call.1} parent=67 // pred_check
          %p742 = pneg %p315
        $region106: #{tpu_custom_call.1} parent=67 // pred_check_branch
          %744 = sbr.rel (%p742) target = $region108
        $region107: #{tpu_custom_call.1} parent=67 // pred_region
          %745 = dma.done %s739, 16
        $region108: #{tpu_custom_call.1} parent=67 // pred_fallthru
          _
        %s746 = sand.u32 %s48, 1
        %s747 = scalar_lea.sflag [#allocation19], %s746
        %s748 = sand.u32 %s328, 1
        %s749 = scalar_lea.vmem [#allocation20], %s748
        // Predicated region
        $region109: #{tpu_custom_call.1} parent=67 // pred_check
          %p750 = pneg %p341
        $region110: #{tpu_custom_call.1} parent=67 // pred_check_branch
          %752 = sbr.rel (%p750) target = $region112
        $region111: #{tpu_custom_call.1} parent=67 // pred_region
          %753 = dma.done %s747, 16
        $region112: #{tpu_custom_call.1} parent=67 // pred_fallthru
          _
        %s754 = sand.u32 %s354, 1
        %s755 = scalar_lea.sflag [#allocation22], %s754
        %s756 = sand.u32 %s354, 1
        %s757 = scalar_lea.vmem [#allocation21], %s756
        // Predicated region
        $region113: #{tpu_custom_call.1} parent=67 // pred_check
          %p758 = pneg %p367
        $region114: #{tpu_custom_call.1} parent=67 // pred_check_branch
          %760 = sbr.rel (%p758) target = $region116
        $region115: #{tpu_custom_call.1} parent=67 // pred_region
          %761 = dma.done %s755, 16
        $region116: #{tpu_custom_call.1} parent=67 // pred_fallthru
          _
        %p762 = pneg %p81
        %p763 = pneg %p78
        %s764 = sand.u32 %s48, 1
        %s765 = scalar_lea.sflag [#allocation7], %s764
        %s766 = sand.u32 %s94, 1
        %s767 = smul.addr %s766, 192
        %s768 = scalar_lea.vmem [#allocation6], %s767
        %p769 = pneg %p107
        %p770 = pneg %p104
        %s771 = sand.u32 %s48, 1
        %s772 = scalar_lea.sflag [#allocation7], %s771
        %s773 = sand.u32 %s120, 1
        %s774 = smul.addr %s773, 256
        %s775 = scalar_lea.vmem [#allocation8], %s774
        %p776 = pneg %p133
        %p777 = pneg %p130
        %s778 = sand.u32 %s48, 1
        %s779 = scalar_lea.sflag [#allocation10], %s778
        %s780 = sand.u32 %s146, 1
        %s781 = scalar_lea.vmem [#allocation9], %s780
        %p782 = pneg %p159
        %p783 = pneg %p156
        %s784 = sand.u32 %s48, 1
        %s785 = scalar_lea.sflag [#allocation10], %s784
        %s786 = sand.u32 %s172, 1
        %s787 = smul.addr %s786, 16
        %s788 = scalar_lea.vmem [#allocation11], %s787
        %p789 = pneg %p185
        %p790 = pneg %p182
        %s791 = sand.u32 %s48, 1
        %s792 = scalar_lea.sflag [#allocation13], %s791
        %s793 = sand.u32 %s198, 1
        %s794 = scalar_lea.vmem [#allocation12], %s793
        %p795 = pneg %p211
        %p796 = pneg %p208
        %s797 = sand.u32 %s48, 1
        %s798 = scalar_lea.sflag [#allocation13], %s797
        %s799 = sand.u32 %s224, 1
        %s800 = smul.addr %s799, 64
        %s801 = scalar_lea.vmem [#allocation14], %s800
        %p802 = pneg %p237
        %p803 = pneg %p234
        %s804 = sand.u32 %s48, 1
        %s805 = scalar_lea.sflag [#allocation16], %s804
        %s806 = sand.u32 %s250, 1
        %s807 = scalar_lea.vmem [#allocation15], %s806
        %p808 = pneg %p263
        %p809 = pneg %p260
        %s810 = sand.u32 %s48, 1
        %s811 = scalar_lea.sflag [#allocation16], %s810
        %s812 = sand.u32 %s276, 1
        %s813 = scalar_lea.vmem [#allocation17], %s812
        %p814 = pneg %p289
        %p815 = pneg %p286
        %s816 = sand.u32 %s48, 1
        %s817 = scalar_lea.sflag [#allocation19], %s816
        %s818 = sand.u32 %s302, 1
        %s819 = scalar_lea.vmem [#allocation18], %s818
        %p820 = pneg %p315
        %p821 = pneg %p312
        %s822 = sand.u32 %s48, 1
        %s823 = scalar_lea.sflag [#allocation19], %s822
        %s824 = sand.u32 %s328, 1
        %s825 = scalar_lea.vmem [#allocation20], %s824
        %p826 = pneg %p341
        %p827 = pneg %p338
        %s828 = sand.u32 %s354, 1
        %s829 = scalar_lea.sflag [#allocation22], %s828
        %s830 = sand.u32 %s354, 1
        %s831 = scalar_lea.vmem [#allocation21], %s830
        %p832 = pneg %p367
        %p833 = pneg %p364
        %p834 = pneg %p393
        %p835 = pneg %p390
        %p836 = pneg %p421
        %p837 = pneg %p418
        %s838 = sand.u32 %s408, 1
        %s839 = scalar_lea.sflag [#allocation25], %s838
        %s840 = sand.u32 %s408, 1
        %s841 = smul.addr %s840, 64
        %s842 = scalar_lea.vmem [#allocation24], %s841
        %s843 = smul.u32 2, %s52
        %s844 = smul.u32 2, %s52
        %s845 = smul.u32 2, %s52
        %p847 = scmp.eq.s32.totalorder %s53, 0
        // Predicated region
        $region117: #{tpu_custom_call.1} parent=67 // pred_check
          %p848 = pneg %p847
        $region118: #{tpu_custom_call.1} parent=67 // pred_check_branch
          %850 = sbr.rel (%p848) target = $region120
        $region119: #{tpu_custom_call.1} parent=67 // pred_region
          %v851 = vld [vmem:[#allocation3] sm:$0xff]
          %v852 = vld [vmem:[#allocation3 + $0x8] sm:$0xff]
          %vm853 = vcmask 261120
          %854 = vst.msk [vmem:[#allocation23] sm:$0xff] %vm853, %v851
          %855 = vst.msk [vmem:[#allocation23 + $0x8] sm:$0xff] %vm853, %v852
        $region120: #{tpu_custom_call.1} parent=67 // pred_fallthru
          _
        %v856 = vld [vmem:[#allocation23] sm:$0xff]
        %v857 = vld [vmem:[#allocation23 + $0x8] sm:$0xff]
        %v858 = vpack.c.bf16 %v857, %v856
        %v859 = vld [vmem:[%s674] sm:$0xff]
        %v860 = vld [vmem:[%s674 + $0x8] sm:$0xff]
        %v861 = vld [vmem:[%s674 + $0x10] sm:$0xff]
        %v862 = vld [vmem:[%s674 + $0x18] sm:$0xff]
        %v863 = vld [vmem:[%s674 + $0x20] sm:$0xff]
        %v864 = vld [vmem:[%s674 + $0x28] sm:$0xff]
        %v865 = vld [vmem:[%s674 + $0x30] sm:$0xff]
        %v866 = vld [vmem:[%s674 + $0x38] sm:$0xff]
        %v867 = vld [vmem:[%s674 + $0x40] sm:$0xff]
        %v868 = vld [vmem:[%s674 + $0x48] sm:$0xff]
        %v869 = vld [vmem:[%s674 + $0x50] sm:$0xff]
        %v870 = vld [vmem:[%s674 + $0x58] sm:$0xff]
        %v871 = vld [vmem:[%s674 + $0x60] sm:$0xff]
        %v872 = vld [vmem:[%s674 + $0x68] sm:$0xff]
        %v873 = vld [vmem:[%s674 + $0x70] sm:$0xff]
        %v874 = vld [vmem:[%s674 + $0x78] sm:$0xff]
        %v875 = vld [vmem:[%s674 + $0x80] sm:$0xff]
        %v876 = vld [vmem:[%s674 + $0x88] sm:$0xff]
        %v877 = vld [vmem:[%s674 + $0x90] sm:$0xff]
        %v878 = vld [vmem:[%s674 + $0x98] sm:$0xff]
        %v879 = vld [vmem:[%s674 + $0xa0] sm:$0xff]
        %v880 = vld [vmem:[%s674 + $0xa8] sm:$0xff]
        %v881 = vld [vmem:[%s674 + $0xb0] sm:$0xff]
        %v882 = vld [vmem:[%s674 + $0xb8] sm:$0xff]
        %v907 = vunpack.c.l.b16 %v859
        %v908 = vunpack.c.h.b16 %v859
        %v909 = vunpack.c.l.b16 %v860
        %v910 = vunpack.c.h.b16 %v860
        %v911 = vunpack.c.l.b16 %v861
        %v912 = vunpack.c.h.b16 %v861
        %v913 = vunpack.c.l.b16 %v862
        %v914 = vunpack.c.h.b16 %v862
        %v915 = vunpack.c.l.b16 %v863
        %v916 = vunpack.c.h.b16 %v863
        %v917 = vunpack.c.l.b16 %v864
        %v918 = vunpack.c.h.b16 %v864
        %v919 = vunpack.c.l.b16 %v865
        %v920 = vunpack.c.h.b16 %v865
        %v921 = vunpack.c.l.b16 %v866
        %v922 = vunpack.c.h.b16 %v866
        %v923 = vunpack.c.l.b16 %v867
        %v924 = vunpack.c.h.b16 %v867
        %v925 = vunpack.c.l.b16 %v868
        %v926 = vunpack.c.h.b16 %v868
        %v927 = vunpack.c.l.b16 %v869
        %v928 = vunpack.c.h.b16 %v869
        %v929 = vunpack.c.l.b16 %v870
        %v930 = vunpack.c.h.b16 %v870
        %v931 = vunpack.c.l.b16 %v871
        %v932 = vunpack.c.h.b16 %v871
        %v933 = vunpack.c.l.b16 %v872
        %v934 = vunpack.c.h.b16 %v872
        %v935 = vunpack.c.l.b16 %v873
        %v936 = vunpack.c.h.b16 %v873
        %v937 = vunpack.c.l.b16 %v874
        %v938 = vunpack.c.h.b16 %v874
        %v939 = vunpack.c.l.b16 %v875
        %v940 = vunpack.c.h.b16 %v875
        %v941 = vunpack.c.l.b16 %v876
        %v942 = vunpack.c.h.b16 %v876
        %v943 = vunpack.c.l.b16 %v877
        %v944 = vunpack.c.h.b16 %v877
        %v945 = vunpack.c.l.b16 %v878
        %v946 = vunpack.c.h.b16 %v878
        %v947 = vunpack.c.l.b16 %v879
        %v948 = vunpack.c.h.b16 %v879
        %v949 = vunpack.c.l.b16 %v880
        %v950 = vunpack.c.h.b16 %v880
        %v951 = vunpack.c.l.b16 %v881
        %v952 = vunpack.c.h.b16 %v881
        %v953 = vunpack.c.l.b16 %v882
        %v954 = vunpack.c.h.b16 %v882
        %v955 = vpack.c.b16 %v919, %v907
        %v956 = vpack.c.b16 %v920, %v908
        %v957 = vpack.c.b16 %v921, %v909
        %v958 = vpack.c.b16 %v922, %v910
        %v959 = vpack.c.b16 %v923, %v911
        %v960 = vpack.c.b16 %v924, %v912
        %v961 = vpack.c.b16 %v925, %v913
        %v962 = vpack.c.b16 %v926, %v914
        %v963 = vpack.c.b16 %v927, %v915
        %v964 = vpack.c.b16 %v928, %v916
        %v965 = vpack.c.b16 %v929, %v917
        %v966 = vpack.c.b16 %v930, %v918
        %v967 = vpack.c.b16 %v943, %v931
        %v968 = vpack.c.b16 %v944, %v932
        %v969 = vpack.c.b16 %v945, %v933
        %v970 = vpack.c.b16 %v946, %v934
        %v971 = vpack.c.b16 %v947, %v935
        %v972 = vpack.c.b16 %v948, %v936
        %v973 = vpack.c.b16 %v949, %v937
        %v974 = vpack.c.b16 %v950, %v938
        %v975 = vpack.c.b16 %v951, %v939
        %v976 = vpack.c.b16 %v952, %v940
        %v977 = vpack.c.b16 %v953, %v941
        %v978 = vpack.c.b16 %v954, %v942
        %vm1003 = vcmask 261120
        %v1005 = vsel %vm1003, %v858, 0
        %1007 = vmatprep.subr.bf16.mxu0 %v956
        %1008 = vmatpush1.bf16.msra.mxu0 %v955
        %1009 = vmatprep.subr.bf16.mxu0 %v968
        %1010 = vmatpush1.bf16.msra.mxu0 %v967
        %1011 = vmatprep.subr.bf16.mxu0 0
        %1012 = vmatpush1.bf16.msra.mxu0 0
        %1013 = vmatprep.subr.bf16.mxu0 0
        %1014 = vmatpush1.bf16.msra.mxu0 0
        %1015 = vmatprep.subr.bf16.mxu0 0
        %1016 = vmatpush1.bf16.msra.mxu0 0
        %1017 = vmatprep.subr.bf16.mxu0 0
        %1018 = vmatpush1.bf16.msra.mxu0 0
        %1019 = vmatprep.subr.bf16.mxu0 0
        %1020 = vmatpush1.bf16.msra.mxu0 0
        %1021 = vmatprep.subr.bf16.mxu0 0
        %1022 = vmatpush1.bf16.msra.mxu0 0
        %1023 = vmatprep.subr.bf16.mxu0 0
        %1024 = vmatpush1.bf16.msra.mxu0 0
        %1025 = vmatprep.subr.bf16.mxu0 0
        %1026 = vmatpush1.bf16.msra.mxu0 0
        %1027 = vmatprep.subr.bf16.mxu0 0
        %1028 = vmatpush1.bf16.msra.mxu0 0
        %1029 = vmatprep.subr.bf16.mxu0 0
        %1030 = vmatpush1.bf16.msra.mxu0 0
        %1031 = vmatprep.subr.bf16.mxu0 0
        %1032 = vmatpush1.bf16.msra.mxu0 0
        %1033 = vmatprep.subr.bf16.mxu0 0
        %1034 = vmatpush1.bf16.msra.mxu0 0
        %1035 = vmatprep.subr.bf16.mxu0 0
        %1036 = vmatpush1.bf16.msra.mxu0 0
        %1037 = vmatprep.subr.bf16.mxu0 0
        %1038 = vmatpush1.bf16.msra.mxu0 0
        %1039 = vmatprep.mubr.bf16.mxu0 0
        %1040 = vmatmul.mubr.bf16.gmra.mrb[0].mxu0 %v1005
        %v1041 = vpop.f32.mrb[0].mxu0
        %v1042 = vadd.f32 0.0, %v1041
        %v1043 = vpop.f32.mrb[0].mxu0
        %v1044 = vadd.f32 0.0, %v1043
        %v1045 = vpop.f32.mrb[0].mxu0
        %v1046 = vadd.f32 0.0, %v1045
        %v1047 = vpop.f32.mrb[0].mxu0
        %v1048 = vadd.f32 0.0, %v1047
        %1049 = vdwg.mxu0
        %1050 = vmatprep.subr.bf16.mxu0 %v958
        %1051 = vmatpush1.bf16.msra.mxu0 %v957
        %1052 = vmatprep.subr.bf16.mxu0 %v970
        %1053 = vmatpush1.bf16.msra.mxu0 %v969
        %1054 = vmatprep.subr.bf16.mxu0 0
        %1055 = vmatpush1.bf16.msra.mxu0 0
        %1056 = vmatprep.subr.bf16.mxu0 0
        %1057 = vmatpush1.bf16.msra.mxu0 0
        %1058 = vmatprep.subr.bf16.mxu0 0
        %1059 = vmatpush1.bf16.msra.mxu0 0
        %1060 = vmatprep.subr.bf16.mxu0 0
        %1061 = vmatpush1.bf16.msra.mxu0 0
        %1062 = vmatprep.subr.bf16.mxu0 0
        %1063 = vmatpush1.bf16.msra.mxu0 0
        %1064 = vmatprep.subr.bf16.mxu0 0
        %1065 = vmatpush1.bf16.msra.mxu0 0
        %1066 = vmatprep.subr.bf16.mxu0 0
        %1067 = vmatpush1.bf16.msra.mxu0 0
        %1068 = vmatprep.subr.bf16.mxu0 0
        %1069 = vmatpush1.bf16.msra.mxu0 0
        %1070 = vmatprep.subr.bf16.mxu0 0
        %1071 = vmatpush1.bf16.msra.mxu0 0
        %1072 = vmatprep.subr.bf16.mxu0 0
        %1073 = vmatpush1.bf16.msra.mxu0 0
        %1074 = vmatprep.subr.bf16.mxu0 0
        %1075 = vmatpush1.bf16.msra.mxu0 0
        %1076 = vmatprep.subr.bf16.mxu0 0
        %1077 = vmatpush1.bf16.msra.mxu0 0
        %1078 = vmatprep.subr.bf16.mxu0 0
        %1079 = vmatpush1.bf16.msra.mxu0 0
        %1080 = vmatprep.subr.bf16.mxu0 0
        %1081 = vmatpush1.bf16.msra.mxu0 0
        %1082 = vmatprep.mubr.bf16.mxu0 0
        %1083 = vmatmul.mubr.bf16.gmra.mrb[0].mxu0 %v1005
        %v1084 = vpop.f32.mrb[0].mxu0
        %v1085 = vadd.f32 0.0, %v1084
        %v1086 = vpop.f32.mrb[0].mxu0
        %v1087 = vadd.f32 0.0, %v1086
        %v1088 = vpop.f32.mrb[0].mxu0
        %v1089 = vadd.f32 0.0, %v1088
        %v1090 = vpop.f32.mrb[0].mxu0
        %v1091 = vadd.f32 0.0, %v1090
        %1092 = vdwg.mxu0
        %1093 = vmatprep.subr.bf16.mxu0 %v960
        %1094 = vmatpush1.bf16.msra.mxu0 %v959
        %1095 = vmatprep.subr.bf16.mxu0 %v972
        %1096 = vmatpush1.bf16.msra.mxu0 %v971
        %1097 = vmatprep.subr.bf16.mxu0 0
        %1098 = vmatpush1.bf16.msra.mxu0 0
        %1099 = vmatprep.subr.bf16.mxu0 0
        %1100 = vmatpush1.bf16.msra.mxu0 0
        %1101 = vmatprep.subr.bf16.mxu0 0
        %1102 = vmatpush1.bf16.msra.mxu0 0
        %1103 = vmatprep.subr.bf16.mxu0 0
        %1104 = vmatpush1.bf16.msra.mxu0 0
        %1105 = vmatprep.subr.bf16.mxu0 0
        %1106 = vmatpush1.bf16.msra.mxu0 0
        %1107 = vmatprep.subr.bf16.mxu0 0
        %1108 = vmatpush1.bf16.msra.mxu0 0
        %1109 = vmatprep.subr.bf16.mxu0 0
        %1110 = vmatpush1.bf16.msra.mxu0 0
        %1111 = vmatprep.subr.bf16.mxu0 0
        %1112 = vmatpush1.bf16.msra.mxu0 0
        %1113 = vmatprep.subr.bf16.mxu0 0
        %1114 = vmatpush1.bf16.msra.mxu0 0
        %1115 = vmatprep.subr.bf16.mxu0 0
        %1116 = vmatpush1.bf16.msra.mxu0 0
        %1117 = vmatprep.subr.bf16.mxu0 0
        %1118 = vmatpush1.bf16.msra.mxu0 0
        %1119 = vmatprep.subr.bf16.mxu0 0
        %1120 = vmatpush1.bf16.msra.mxu0 0
        %1121 = vmatprep.subr.bf16.mxu0 0
        %1122 = vmatpush1.bf16.msra.mxu0 0
        %1123 = vmatprep.subr.bf16.mxu0 0
        %1124 = vmatpush1.bf16.msra.mxu0 0
        %1125 = vmatprep.mubr.bf16.mxu0 0
        %1126 = vmatmul.mubr.bf16.gmra.mrb[0].mxu0 %v1005
        %v1127 = vpop.f32.mrb[0].mxu0
        %v1128 = vadd.f32 0.0, %v1127
        %v1129 = vpop.f32.mrb[0].mxu0
        %v1130 = vadd.f32 0.0, %v1129
        %v1131 = vpop.f32.mrb[0].mxu0
        %v1132 = vadd.f32 0.0, %v1131
        %v1133 = vpop.f32.mrb[0].mxu0
        %v1134 = vadd.f32 0.0, %v1133
        %1135 = vdwg.mxu0
        %1136 = vmatprep.subr.bf16.mxu0 %v962
        %1137 = vmatpush1.bf16.msra.mxu0 %v961
        %1138 = vmatprep.subr.bf16.mxu0 %v974
        %1139 = vmatpush1.bf16.msra.mxu0 %v973
        %1140 = vmatprep.subr.bf16.mxu0 0
        %1141 = vmatpush1.bf16.msra.mxu0 0
        %1142 = vmatprep.subr.bf16.mxu0 0
        %1143 = vmatpush1.bf16.msra.mxu0 0
        %1144 = vmatprep.subr.bf16.mxu0 0
        %1145 = vmatpush1.bf16.msra.mxu0 0
        %1146 = vmatprep.subr.bf16.mxu0 0
        %1147 = vmatpush1.bf16.msra.mxu0 0
        %1148 = vmatprep.subr.bf16.mxu0 0
        %1149 = vmatpush1.bf16.msra.mxu0 0
        %1150 = vmatprep.subr.bf16.mxu0 0
        %1151 = vmatpush1.bf16.msra.mxu0 0
        %1152 = vmatprep.subr.bf16.mxu0 0
        %1153 = vmatpush1.bf16.msra.mxu0 0
        %1154 = vmatprep.subr.bf16.mxu0 0
        %1155 = vmatpush1.bf16.msra.mxu0 0
        %1156 = vmatprep.subr.bf16.mxu0 0
        %1157 = vmatpush1.bf16.msra.mxu0 0
        %1158 = vmatprep.subr.bf16.mxu0 0
        %1159 = vmatpush1.bf16.msra.mxu0 0
        %1160 = vmatprep.subr.bf16.mxu0 0
        %1161 = vmatpush1.bf16.msra.mxu0 0
        %1162 = vmatprep.subr.bf16.mxu0 0
        %1163 = vmatpush1.bf16.msra.mxu0 0
        %1164 = vmatprep.subr.bf16.mxu0 0
        %1165 = vmatpush1.bf16.msra.mxu0 0
        %1166 = vmatprep.subr.bf16.mxu0 0
        %1167 = vmatpush1.bf16.msra.mxu0 0
        %1168 = vmatprep.mubr.bf16.mxu0 0
        %1169 = vmatmul.mubr.bf16.gmra.mrb[0].mxu0 %v1005
        %v1170 = vpop.f32.mrb[0].mxu0
        %v1171 = vadd.f32 0.0, %v1170
        %v1172 = vpop.f32.mrb[0].mxu0
        %v1173 = vadd.f32 0.0, %v1172
        %v1174 = vpop.f32.mrb[0].mxu0
        %v1175 = vadd.f32 0.0, %v1174
        %v1176 = vpop.f32.mrb[0].mxu0
        %v1177 = vadd.f32 0.0, %v1176
        %1178 = vdwg.mxu0
        %1179 = vmatprep.subr.bf16.mxu0 %v964
        %1180 = vmatpush1.bf16.msra.mxu0 %v963
        %1181 = vmatprep.subr.bf16.mxu0 %v976
        %1182 = vmatpush1.bf16.msra.mxu0 %v975
        %1183 = vmatprep.subr.bf16.mxu0 0
        %1184 = vmatpush1.bf16.msra.mxu0 0
        %1185 = vmatprep.subr.bf16.mxu0 0
        %1186 = vmatpush1.bf16.msra.mxu0 0
        %1187 = vmatprep.subr.bf16.mxu0 0
        %1188 = vmatpush1.bf16.msra.mxu0 0
        %1189 = vmatprep.subr.bf16.mxu0 0
        %1190 = vmatpush1.bf16.msra.mxu0 0
        %1191 = vmatprep.subr.bf16.mxu0 0
        %1192 = vmatpush1.bf16.msra.mxu0 0
        %1193 = vmatprep.subr.bf16.mxu0 0
        %1194 = vmatpush1.bf16.msra.mxu0 0
        %1195 = vmatprep.subr.bf16.mxu0 0
        %1196 = vmatpush1.bf16.msra.mxu0 0
        %1197 = vmatprep.subr.bf16.mxu0 0
        %1198 = vmatpush1.bf16.msra.mxu0 0
        %1199 = vmatprep.subr.bf16.mxu0 0
        %1200 = vmatpush1.bf16.msra.mxu0 0
        %1201 = vmatprep.subr.bf16.mxu0 0
        %1202 = vmatpush1.bf16.msra.mxu0 0
        %1203 = vmatprep.subr.bf16.mxu0 0
        %1204 = vmatpush1.bf16.msra.mxu0 0
        %1205 = vmatprep.subr.bf16.mxu0 0
        %1206 = vmatpush1.bf16.msra.mxu0 0
        %1207 = vmatprep.subr.bf16.mxu0 0
        %1208 = vmatpush1.bf16.msra.mxu0 0
        %1209 = vmatprep.subr.bf16.mxu0 0
        %1210 = vmatpush1.bf16.msra.mxu0 0
        %1211 = vmatprep.mubr.bf16.mxu0 0
        %1212 = vmatmul.mubr.bf16.gmra.mrb[0].mxu0 %v1005
        %v1213 = vpop.f32.mrb[0].mxu0
        %v1214 = vadd.f32 0.0, %v1213
        %v1215 = vpop.f32.mrb[0].mxu0
        %v1216 = vadd.f32 0.0, %v1215
        %v1217 = vpop.f32.mrb[0].mxu0
        %v1218 = vadd.f32 0.0, %v1217
        %v1219 = vpop.f32.mrb[0].mxu0
        %v1220 = vadd.f32 0.0, %v1219
        %1221 = vdwg.mxu0
        %1222 = vmatprep.subr.bf16.mxu0 %v966
        %1223 = vmatpush1.bf16.msra.mxu0 %v965
        %1224 = vmatprep.subr.bf16.mxu0 %v978
        %1225 = vmatpush1.bf16.msra.mxu0 %v977
        %1226 = vmatprep.subr.bf16.mxu0 0
        %1227 = vmatpush1.bf16.msra.mxu0 0
        %1228 = vmatprep.subr.bf16.mxu0 0
        %1229 = vmatpush1.bf16.msra.mxu0 0
        %1230 = vmatprep.subr.bf16.mxu0 0
        %1231 = vmatpush1.bf16.msra.mxu0 0
        %1232 = vmatprep.subr.bf16.mxu0 0
        %1233 = vmatpush1.bf16.msra.mxu0 0
        %1234 = vmatprep.subr.bf16.mxu0 0
        %1235 = vmatpush1.bf16.msra.mxu0 0
        %1236 = vmatprep.subr.bf16.mxu0 0
        %1237 = vmatpush1.bf16.msra.mxu0 0
        %1238 = vmatprep.subr.bf16.mxu0 0
        %1239 = vmatpush1.bf16.msra.mxu0 0
        %1240 = vmatprep.subr.bf16.mxu0 0
        %1241 = vmatpush1.bf16.msra.mxu0 0
        %1242 = vmatprep.subr.bf16.mxu0 0
        %1243 = vmatpush1.bf16.msra.mxu0 0
        %1244 = vmatprep.subr.bf16.mxu0 0
        %1245 = vmatpush1.bf16.msra.mxu0 0
        %1246 = vmatprep.subr.bf16.mxu0 0
        %1247 = vmatpush1.bf16.msra.mxu0 0
        %1248 = vmatprep.subr.bf16.mxu0 0
        %1249 = vmatpush1.bf16.msra.mxu0 0
        %1250 = vmatprep.subr.bf16.mxu0 0
        %1251 = vmatpush1.bf16.msra.mxu0 0
        %1252 = vmatprep.subr.bf16.mxu0 0
        %1253 = vmatpush1.bf16.msra.mxu0 0
        %1254 = vmatprep.mubr.bf16.mxu0 0
        %1255 = vmatmul.mubr.bf16.gmra.mrb[0].mxu0 %v1005
        %v1256 = vpop.f32.mrb[0].mxu0
        %v1257 = vadd.f32 0.0, %v1256
        %v1258 = vpop.f32.mrb[0].mxu0
        %v1259 = vadd.f32 0.0, %v1258
        %v1260 = vpop.f32.mrb[0].mxu0
        %v1261 = vadd.f32 0.0, %v1260
        %v1262 = vpop.f32.mrb[0].mxu0
        %v1263 = vadd.f32 0.0, %v1262
        %1264 = vdwg.mxu0
        %v1265 = vpack.c.bf16 %v1042, %v1042
        %v1266 = vpack.c.bf16 %v1044, %v1044
        %v1267 = vpack.c.bf16 %v1085, %v1085
        %v1268 = vpack.c.bf16 %v1087, %v1087
        %v1269 = vpack.c.bf16 %v1128, %v1128
        %v1270 = vpack.c.bf16 %v1130, %v1130
        %v1271 = vpack.c.bf16 %v1171, %v1171
        %v1272 = vpack.c.bf16 %v1173, %v1173
        %v1273 = vpack.c.bf16 %v1214, %v1214
        %v1274 = vpack.c.bf16 %v1216, %v1216
        %v1275 = vpack.c.bf16 %v1257, %v1257
        %v1276 = vpack.c.bf16 %v1259, %v1259
        %v1277 = vpack.c.bf16 %v1046, %v1046
        %v1278 = vpack.c.bf16 %v1048, %v1048
        %v1279 = vpack.c.bf16 %v1089, %v1089
        %v1280 = vpack.c.bf16 %v1091, %v1091
        %v1281 = vpack.c.bf16 %v1132, %v1132
        %v1282 = vpack.c.bf16 %v1134, %v1134
        %v1283 = vpack.c.bf16 %v1175, %v1175
        %v1284 = vpack.c.bf16 %v1177, %v1177
        %v1285 = vpack.c.bf16 %v1218, %v1218
        %v1286 = vpack.c.bf16 %v1220, %v1220
        %v1287 = vpack.c.bf16 %v1261, %v1261
        %v1288 = vpack.c.bf16 %v1263, %v1263
        %v1289 = vlaneseq
        %v1290 = vshrl.u32 %v1289, 7
        %v1291 = vlaneseq
        %v1292 = vand.u32 %v1291, 127
        %vm1293 = vcmp.le.s32.totalorder %v1292, %v1290
        %v1294 = vsel %vm1293, 0.0, -1e+30
        %1295 = vmatprep.subr.bf16.mxu0 0
        %1296 = vmatpush1.bf16.xpose.msra.mxu0 %v1269
        %1297 = vmatprep.subr.bf16.mxu0 0
        %1298 = vmatpush1.bf16.xpose.msra.mxu0 0
        %1299 = vmatprep.subr.bf16.mxu0 0
        %1300 = vmatpush1.bf16.xpose.msra.mxu0 0
        %1301 = vmatprep.subr.bf16.mxu0 0
        %1302 = vmatpush1.bf16.xpose.msra.mxu0 0
        %1303 = vmatprep.subr.bf16.mxu0 0
        %1304 = vmatpush1.bf16.xpose.msra.mxu0 0
        %1305 = vmatprep.subr.bf16.mxu0 0
        %1306 = vmatpush1.bf16.xpose.msra.mxu0 0
        %1307 = vmatprep.subr.bf16.mxu0 0
        %1308 = vmatpush1.bf16.xpose.msra.mxu0 0
        %1309 = vmatprep.subr.bf16.mxu0 0
        %1310 = vmatpush1.bf16.xpose.msra.mxu0 0
        %1311 = vmatprep.subr.bf16.mxu0 0
        %1312 = vmatpush1.bf16.xpose.msra.mxu0 0
        %1313 = vmatprep.subr.bf16.mxu0 0
        %1314 = vmatpush1.bf16.xpose.msra.mxu0 0
        %1315 = vmatprep.subr.bf16.mxu0 0
        %1316 = vmatpush1.bf16.xpose.msra.mxu0 0
        %1317 = vmatprep.subr.bf16.mxu0 0
        %1318 = vmatpush1.bf16.xpose.msra.mxu0 0
        %1319 = vmatprep.subr.bf16.mxu0 0
        %1320 = vmatpush1.bf16.xpose.msra.mxu0 0
        %1321 = vmatprep.subr.bf16.mxu0 0
        %1322 = vmatpush1.bf16.xpose.msra.mxu0 0
        %1323 = vmatprep.subr.bf16.mxu0 0
        %1324 = vmatpush1.bf16.xpose.msra.mxu0 0
        %1325 = vmatprep.subr.bf16.mxu0 0
        %1326 = vmatpush1.bf16.xpose.msra.mxu0 0
        %1327 = vmatprep.mubr.bf16.mxu0 0
        %1328 = vmatmul.mubr.bf16.gmra.mrb[0].mxu0 %v1265
        %v1329 = vpop.f32.mrb[0].mxu0
        %v1330 = vadd.f32 %v1294, %v1329
        %v1331 = vpop.f32.mrb[0].mxu0
        %v1332 = vpop.f32.mrb[0].mxu0
        %v1333 = vpop.f32.mrb[0].mxu0
        %1334 = vdwg.mxu0
        %1335 = vmatprep.subr.bf16.mxu0 0
        %1336 = vmatpush1.bf16.xpose.msra.mxu0 %v1281
        %1337 = vmatprep.subr.bf16.mxu0 0
        %1338 = vmatpush1.bf16.xpose.msra.mxu0 0
        %1339 = vmatprep.subr.bf16.mxu0 0
        %1340 = vmatpush1.bf16.xpose.msra.mxu0 0
        %1341 = vmatprep.subr.bf16.mxu0 0
        %1342 = vmatpush1.bf16.xpose.msra.mxu0 0
        %1343 = vmatprep.subr.bf16.mxu0 0
        %1344 = vmatpush1.bf16.xpose.msra.mxu0 0
        %1345 = vmatprep.subr.bf16.mxu0 0
        %1346 = vmatpush1.bf16.xpose.msra.mxu0 0
        %1347 = vmatprep.subr.bf16.mxu0 0
        %1348 = vmatpush1.bf16.xpose.msra.mxu0 0
        %1349 = vmatprep.subr.bf16.mxu0 0
        %1350 = vmatpush1.bf16.xpose.msra.mxu0 0
        %1351 = vmatprep.subr.bf16.mxu0 0
        %1352 = vmatpush1.bf16.xpose.msra.mxu0 0
        %1353 = vmatprep.subr.bf16.mxu0 0
        %1354 = vmatpush1.bf16.xpose.msra.mxu0 0
        %1355 = vmatprep.subr.bf16.mxu0 0
        %1356 = vmatpush1.bf16.xpose.msra.mxu0 0
        %1357 = vmatprep.subr.bf16.mxu0 0
        %1358 = vmatpush1.bf16.xpose.msra.mxu0 0
        %1359 = vmatprep.subr.bf16.mxu0 0
        %1360 = vmatpush1.bf16.xpose.msra.mxu0 0
        %1361 = vmatprep.subr.bf16.mxu0 0
        %1362 = vmatpush1.bf16.xpose.msra.mxu0 0
        %1363 = vmatprep.subr.bf16.mxu0 0
        %1364 = vmatpush1.bf16.xpose.msra.mxu0 0
        %1365 = vmatprep.subr.bf16.mxu0 0
        %1366 = vmatpush1.bf16.xpose.msra.mxu0 0
        %1367 = vmatprep.mubr.bf16.mxu0 0
        %1368 = vmatmul.mubr.bf16.gmra.mrb[0].mxu0 %v1277
        %v1369 = vpop.f32.mrb[0].mxu0
        %v1370 = vadd.f32 %v1294, %v1369
        %v1371 = vpop.f32.mrb[0].mxu0
        %v1372 = vpop.f32.mrb[0].mxu0
        %v1373 = vpop.f32.mrb[0].mxu0
        %1374 = vdwg.mxu0
        %vm1375 = vcmask 64512
        %v1376 = vsel %vm1375, %v1330, -inf
        %1377 = vmax.xlane.f32.xlu0 %v1376
        %v1378 = vpop.xlane.xlu0 %1377
        %v1379 = vsel %vm1375, %v1370, -inf
        %1380 = vmax.xlane.f32.xlu0 %v1379
        %v1381 = vpop.xlane.xlu0 %1380
        %v1382 = vsub.f32 %v1330, %v1378
        %v1383 = vsub.f32 %v1370, %v1381
        %v1384 = vmul.f32 %v1382, 1.442695
        %v1385 = vpow.pop %v1384
        %v1386 = vmul.f32 %v1383, 1.442695
        %v1387 = vpow.pop %v1386
        %v1388 = vsel %vm1375, %v1385, 0.0
        %1389 = vadd.xlane.f32.xlu0 %v1388
        %v1390 = vpop.xlane.xlu0 %1389
        %v1391 = vsel %vm1375, %v1387, 0.0
        %1392 = vadd.xlane.f32.xlu0 %v1391
        %v1393 = vpop.xlane.xlu0 %1392
        %v1394 = vrcp.pop %v1390
        %v1395 = vmul.f32 %v1385, %v1394
        %v1396 = vrcp.pop %v1393
        %v1397 = vmul.f32 %v1387, %v1396
        %1398 = vst.msk [vmem:[%s842] sm:$0xff] %vm1375, %v1395
        %1399 = vst.msk [vmem:[%s842 + $0x20] sm:$0xff] %vm1375, %v1397
        %v1400 = vpack.c.bf16 %v1395, %v1395
        %v1401 = vpack.c.bf16 %v1397, %v1397
        %v1403 = vsel %vm1375, %v1400, 0
        %vm1405 = vcmask 1043456
        %v1407 = vsel %vm1405, %v1273, 0
        %1409 = vmatprep.subr.bf16.mxu0 0
        %1410 = vmatpush1.bf16.msra.mxu0 %v1407
        %1411 = vmatprep.subr.bf16.mxu0 0
        %1412 = vmatpush1.bf16.msra.mxu0 0
        %1413 = vmatprep.subr.bf16.mxu0 0
        %1414 = vmatpush1.bf16.msra.mxu0 0
        %1415 = vmatprep.subr.bf16.mxu0 0
        %1416 = vmatpush1.bf16.msra.mxu0 0
        %1417 = vmatprep.subr.bf16.mxu0 0
        %1418 = vmatpush1.bf16.msra.mxu0 0
        %1419 = vmatprep.subr.bf16.mxu0 0
        %1420 = vmatpush1.bf16.msra.mxu0 0
        %1421 = vmatprep.subr.bf16.mxu0 0
        %1422 = vmatpush1.bf16.msra.mxu0 0
        %1423 = vmatprep.subr.bf16.mxu0 0
        %1424 = vmatpush1.bf16.msra.mxu0 0
        %1425 = vmatprep.subr.bf16.mxu0 0
        %1426 = vmatpush1.bf16.msra.mxu0 0
        %1427 = vmatprep.subr.bf16.mxu0 0
        %1428 = vmatpush1.bf16.msra.mxu0 0
        %1429 = vmatprep.subr.bf16.mxu0 0
        %1430 = vmatpush1.bf16.msra.mxu0 0
        %1431 = vmatprep.subr.bf16.mxu0 0
        %1432 = vmatpush1.bf16.msra.mxu0 0
        %1433 = vmatprep.subr.bf16.mxu0 0
        %1434 = vmatpush1.bf16.msra.mxu0 0
        %1435 = vmatprep.subr.bf16.mxu0 0
        %1436 = vmatpush1.bf16.msra.mxu0 0
        %1437 = vmatprep.subr.bf16.mxu0 0
        %1438 = vmatpush1.bf16.msra.mxu0 0
        %1439 = vmatprep.subr.bf16.mxu0 0
        %1440 = vmatpush1.bf16.msra.mxu0 0
        %1441 = vmatprep.mubr.bf16.mxu0 0
        %1442 = vmatmul.mubr.bf16.gmra.mrb[0].mxu0 %v1403
        %v1443 = vpop.f32.mrb[0].mxu0
        %v1444 = vadd.f32 0.0, %v1443
        %v1445 = vpop.f32.mrb[0].mxu0
        %v1446 = vpop.f32.mrb[0].mxu0
        %v1447 = vpop.f32.mrb[0].mxu0
        %1448 = vdwg.mxu0
        %v1450 = vsel %vm1375, %v1401, 0
        %v1453 = vsel %vm1405, %v1285, 0
        %1455 = vmatprep.subr.bf16.mxu0 0
        %1456 = vmatpush1.bf16.msra.mxu0 %v1453
        %1457 = vmatprep.subr.bf16.mxu0 0
        %1458 = vmatpush1.bf16.msra.mxu0 0
        %1459 = vmatprep.subr.bf16.mxu0 0
        %1460 = vmatpush1.bf16.msra.mxu0 0
        %1461 = vmatprep.subr.bf16.mxu0 0
        %1462 = vmatpush1.bf16.msra.mxu0 0
        %1463 = vmatprep.subr.bf16.mxu0 0
        %1464 = vmatpush1.bf16.msra.mxu0 0
        %1465 = vmatprep.subr.bf16.mxu0 0
        %1466 = vmatpush1.bf16.msra.mxu0 0
        %1467 = vmatprep.subr.bf16.mxu0 0
        %1468 = vmatpush1.bf16.msra.mxu0 0
        %1469 = vmatprep.subr.bf16.mxu0 0
        %1470 = vmatpush1.bf16.msra.mxu0 0
        %1471 = vmatprep.subr.bf16.mxu0 0
        %1472 = vmatpush1.bf16.msra.mxu0 0
        %1473 = vmatprep.subr.bf16.mxu0 0
        %1474 = vmatpush1.bf16.msra.mxu0 0
        %1475 = vmatprep.subr.bf16.mxu0 0
        %1476 = vmatpush1.bf16.msra.mxu0 0
        %1477 = vmatprep.subr.bf16.mxu0 0
        %1478 = vmatpush1.bf16.msra.mxu0 0
        %1479 = vmatprep.subr.bf16.mxu0 0
        %1480 = vmatpush1.bf16.msra.mxu0 0
        %1481 = vmatprep.subr.bf16.mxu0 0
        %1482 = vmatpush1.bf16.msra.mxu0 0
        %1483 = vmatprep.subr.bf16.mxu0 0
        %1484 = vmatpush1.bf16.msra.mxu0 0
        %1485 = vmatprep.subr.bf16.mxu0 0
        %1486 = vmatpush1.bf16.msra.mxu0 0
        %1487 = vmatprep.mubr.bf16.mxu0 0
        %1488 = vmatmul.mubr.bf16.gmra.mrb[0].mxu0 %v1450
        %v1489 = vpop.f32.mrb[0].mxu0
        %v1490 = vadd.f32 0.0, %v1489
        %v1491 = vpop.f32.mrb[0].mxu0
        %v1492 = vpop.f32.mrb[0].mxu0
        %v1493 = vpop.f32.mrb[0].mxu0
        %1494 = vdwg.mxu0
        %v1495 = vpack.c.bf16 %v1444, %v1444
        %v1496 = vpack.c.bf16 %v1490, %v1490
        %1497 = vst [vmem:[#allocation2] sm:$0xf] %v1495
        %1498 = vst [vmem:[#allocation2 + $0x10] sm:$0xf] %v1496
        %1499 = vmatprep.subr.bf16.mxu0 0
        %1500 = vmatpush1.bf16.xpose.msra.mxu0 %v1270
        %1501 = vmatprep.subr.bf16.mxu0 0
        %1502 = vmatpush1.bf16.xpose.msra.mxu0 0
        %1503 = vmatprep.subr.bf16.mxu0 0
        %1504 = vmatpush1.bf16.xpose.msra.mxu0 0
        %1505 = vmatprep.subr.bf16.mxu0 0
        %1506 = vmatpush1.bf16.xpose.msra.mxu0 0
        %1507 = vmatprep.subr.bf16.mxu0 0
        %1508 = vmatpush1.bf16.xpose.msra.mxu0 0
        %1509 = vmatprep.subr.bf16.mxu0 0
        %1510 = vmatpush1.bf16.xpose.msra.mxu0 0
        %1511 = vmatprep.subr.bf16.mxu0 0
        %1512 = vmatpush1.bf16.xpose.msra.mxu0 0
        %1513 = vmatprep.subr.bf16.mxu0 0
        %1514 = vmatpush1.bf16.xpose.msra.mxu0 0
        %1515 = vmatprep.subr.bf16.mxu0 0
        %1516 = vmatpush1.bf16.xpose.msra.mxu0 0
        %1517 = vmatprep.subr.bf16.mxu0 0
        %1518 = vmatpush1.bf16.xpose.msra.mxu0 0
        %1519 = vmatprep.subr.bf16.mxu0 0
        %1520 = vmatpush1.bf16.xpose.msra.mxu0 0
        %1521 = vmatprep.subr.bf16.mxu0 0
        %1522 = vmatpush1.bf16.xpose.msra.mxu0 0
        %1523 = vmatprep.subr.bf16.mxu0 0
        %1524 = vmatpush1.bf16.xpose.msra.mxu0 0
        %1525 = vmatprep.subr.bf16.mxu0 0
        %1526 = vmatpush1.bf16.xpose.msra.mxu0 0
        %1527 = vmatprep.subr.bf16.mxu0 0
        %1528 = vmatpush1.bf16.xpose.msra.mxu0 0
        %1529 = vmatprep.subr.bf16.mxu0 0
        %1530 = vmatpush1.bf16.xpose.msra.mxu0 0
        %1531 = vmatprep.mubr.bf16.mxu0 0
        %1532 = vmatmul.mubr.bf16.gmra.mrb[0].mxu0 %v1266
        %v1533 = vpop.f32.mrb[0].mxu0
        %v1534 = vadd.f32 %v1294, %v1533
        %v1535 = vpop.f32.mrb[0].mxu0
        %v1536 = vpop.f32.mrb[0].mxu0
        %v1537 = vpop.f32.mrb[0].mxu0
        %1538 = vdwg.mxu0
        %1539 = vmatprep.subr.bf16.mxu0 0
        %1540 = vmatpush1.bf16.xpose.msra.mxu0 %v1282
        %1541 = vmatprep.subr.bf16.mxu0 0
        %1542 = vmatpush1.bf16.xpose.msra.mxu0 0
        %1543 = vmatprep.subr.bf16.mxu0 0
        %1544 = vmatpush1.bf16.xpose.msra.mxu0 0
        %1545 = vmatprep.subr.bf16.mxu0 0
        %1546 = vmatpush1.bf16.xpose.msra.mxu0 0
        %1547 = vmatprep.subr.bf16.mxu0 0
        %1548 = vmatpush1.bf16.xpose.msra.mxu0 0
        %1549 = vmatprep.subr.bf16.mxu0 0
        %1550 = vmatpush1.bf16.xpose.msra.mxu0 0
        %1551 = vmatprep.subr.bf16.mxu0 0
        %1552 = vmatpush1.bf16.xpose.msra.mxu0 0
        %1553 = vmatprep.subr.bf16.mxu0 0
        %1554 = vmatpush1.bf16.xpose.msra.mxu0 0
        %1555 = vmatprep.subr.bf16.mxu0 0
        %1556 = vmatpush1.bf16.xpose.msra.mxu0 0
        %1557 = vmatprep.subr.bf16.mxu0 0
        %1558 = vmatpush1.bf16.xpose.msra.mxu0 0
        %1559 = vmatprep.subr.bf16.mxu0 0
        %1560 = vmatpush1.bf16.xpose.msra.mxu0 0
        %1561 = vmatprep.subr.bf16.mxu0 0
        %1562 = vmatpush1.bf16.xpose.msra.mxu0 0
        %1563 = vmatprep.subr.bf16.mxu0 0
        %1564 = vmatpush1.bf16.xpose.msra.mxu0 0
        %1565 = vmatprep.subr.bf16.mxu0 0
        %1566 = vmatpush1.bf16.xpose.msra.mxu0 0
        %1567 = vmatprep.subr.bf16.mxu0 0
        %1568 = vmatpush1.bf16.xpose.msra.mxu0 0
        %1569 = vmatprep.subr.bf16.mxu0 0
        %1570 = vmatpush1.bf16.xpose.msra.mxu0 0
        %1571 = vmatprep.mubr.bf16.mxu0 0
        %1572 = vmatmul.mubr.bf16.gmra.mrb[0].mxu0 %v1278
        %v1573 = vpop.f32.mrb[0].mxu0
        %v1574 = vadd.f32 %v1294, %v1573
        %v1575 = vpop.f32.mrb[0].mxu0
        %v1576 = vpop.f32.mrb[0].mxu0
        %v1577 = vpop.f32.mrb[0].mxu0
        %1578 = vdwg.mxu0
        %v1579 = vsel %vm1375, %v1534, -inf
        %1580 = vmax.xlane.f32.xlu0 %v1579
        %v1581 = vpop.xlane.xlu0 %1580
        %v1582 = vsel %vm1375, %v1574, -inf
        %1583 = vmax.xlane.f32.xlu0 %v1582
        %v1584 = vpop.xlane.xlu0 %1583
        %v1585 = vsub.f32 %v1534, %v1581
        %v1586 = vsub.f32 %v1574, %v1584
        %v1587 = vmul.f32 %v1585, 1.442695
        %v1588 = vpow.pop %v1587
        %v1589 = vmul.f32 %v1586, 1.442695
        %v1590 = vpow.pop %v1589
        %v1591 = vsel %vm1375, %v1588, 0.0
        %1592 = vadd.xlane.f32.xlu0 %v1591
        %v1593 = vpop.xlane.xlu0 %1592
        %v1594 = vsel %vm1375, %v1590, 0.0
        %1595 = vadd.xlane.f32.xlu0 %v1594
        %v1596 = vpop.xlane.xlu0 %1595
        %v1597 = vrcp.pop %v1593
        %v1598 = vmul.f32 %v1588, %v1597
        %v1599 = vrcp.pop %v1596
        %v1600 = vmul.f32 %v1590, %v1599
        %s1601 = scalar_lea.vmem %s842, 8 [#allocation24]
        %1602 = vst.msk [vmem:[%s1601] sm:$0xff] %vm1375, %v1598
        %1603 = vst.msk [vmem:[%s1601 + $0x20] sm:$0xff] %vm1375, %v1600
        %v1604 = vpack.c.bf16 %v1598, %v1598
        %v1605 = vpack.c.bf16 %v1600, %v1600
        %v1607 = vsel %vm1375, %v1604, 0
        %v1610 = vsel %vm1405, %v1274, 0
        %1612 = vmatprep.subr.bf16.mxu0 0
        %1613 = vmatpush1.bf16.msra.mxu0 %v1610
        %1614 = vmatprep.subr.bf16.mxu0 0
        %1615 = vmatpush1.bf16.msra.mxu0 0
        %1616 = vmatprep.subr.bf16.mxu0 0
        %1617 = vmatpush1.bf16.msra.mxu0 0
        %1618 = vmatprep.subr.bf16.mxu0 0
        %1619 = vmatpush1.bf16.msra.mxu0 0
        %1620 = vmatprep.subr.bf16.mxu0 0
        %1621 = vmatpush1.bf16.msra.mxu0 0
        %1622 = vmatprep.subr.bf16.mxu0 0
        %1623 = vmatpush1.bf16.msra.mxu0 0
        %1624 = vmatprep.subr.bf16.mxu0 0
        %1625 = vmatpush1.bf16.msra.mxu0 0
        %1626 = vmatprep.subr.bf16.mxu0 0
        %1627 = vmatpush1.bf16.msra.mxu0 0
        %1628 = vmatprep.subr.bf16.mxu0 0
        %1629 = vmatpush1.bf16.msra.mxu0 0
        %1630 = vmatprep.subr.bf16.mxu0 0
        %1631 = vmatpush1.bf16.msra.mxu0 0
        %1632 = vmatprep.subr.bf16.mxu0 0
        %1633 = vmatpush1.bf16.msra.mxu0 0
        %1634 = vmatprep.subr.bf16.mxu0 0
        %1635 = vmatpush1.bf16.msra.mxu0 0
        %1636 = vmatprep.subr.bf16.mxu0 0
        %1637 = vmatpush1.bf16.msra.mxu0 0
        %1638 = vmatprep.subr.bf16.mxu0 0
        %1639 = vmatpush1.bf16.msra.mxu0 0
        %1640 = vmatprep.subr.bf16.mxu0 0
        %1641 = vmatpush1.bf16.msra.mxu0 0
        %1642 = vmatprep.subr.bf16.mxu0 0
        %1643 = vmatpush1.bf16.msra.mxu0 0
        %1644 = vmatprep.mubr.bf16.mxu0 0
        %1645 = vmatmul.mubr.bf16.gmra.mrb[0].mxu0 %v1607
        %v1646 = vpop.f32.mrb[0].mxu0
        %v1647 = vadd.f32 0.0, %v1646
        %v1648 = vpop.f32.mrb[0].mxu0
        %v1649 = vpop.f32.mrb[0].mxu0
        %v1650 = vpop.f32.mrb[0].mxu0
        %1651 = vdwg.mxu0
        %v1653 = vsel %vm1375, %v1605, 0
        %v1656 = vsel %vm1405, %v1286, 0
        %1658 = vmatprep.subr.bf16.mxu0 0
        %1659 = vmatpush1.bf16.msra.mxu0 %v1656
        %1660 = vmatprep.subr.bf16.mxu0 0
        %1661 = vmatpush1.bf16.msra.mxu0 0
        %1662 = vmatprep.subr.bf16.mxu0 0
        %1663 = vmatpush1.bf16.msra.mxu0 0
        %1664 = vmatprep.subr.bf16.mxu0 0
        %1665 = vmatpush1.bf16.msra.mxu0 0
        %1666 = vmatprep.subr.bf16.mxu0 0
        %1667 = vmatpush1.bf16.msra.mxu0 0
        %1668 = vmatprep.subr.bf16.mxu0 0
        %1669 = vmatpush1.bf16.msra.mxu0 0
        %1670 = vmatprep.subr.bf16.mxu0 0
        %1671 = vmatpush1.bf16.msra.mxu0 0
        %1672 = vmatprep.subr.bf16.mxu0 0
        %1673 = vmatpush1.bf16.msra.mxu0 0
        %1674 = vmatprep.subr.bf16.mxu0 0
        %1675 = vmatpush1.bf16.msra.mxu0 0
        %1676 = vmatprep.subr.bf16.mxu0 0
        %1677 = vmatpush1.bf16.msra.mxu0 0
        %1678 = vmatprep.subr.bf16.mxu0 0
        %1679 = vmatpush1.bf16.msra.mxu0 0
        %1680 = vmatprep.subr.bf16.mxu0 0
        %1681 = vmatpush1.bf16.msra.mxu0 0
        %1682 = vmatprep.subr.bf16.mxu0 0
        %1683 = vmatpush1.bf16.msra.mxu0 0
        %1684 = vmatprep.subr.bf16.mxu0 0
        %1685 = vmatpush1.bf16.msra.mxu0 0
        %1686 = vmatprep.subr.bf16.mxu0 0
        %1687 = vmatpush1.bf16.msra.mxu0 0
        %1688 = vmatprep.subr.bf16.mxu0 0
        %1689 = vmatpush1.bf16.msra.mxu0 0
        %1690 = vmatprep.mubr.bf16.mxu0 0
        %1691 = vmatmul.mubr.bf16.gmra.mrb[0].mxu0 %v1653
        %v1692 = vpop.f32.mrb[0].mxu0
        %v1693 = vadd.f32 0.0, %v1692
        %v1694 = vpop.f32.mrb[0].mxu0
        %v1695 = vpop.f32.mrb[0].mxu0
        %v1696 = vpop.f32.mrb[0].mxu0
        %1697 = vdwg.mxu0
        %v1698 = vpack.c.bf16 %v1647, %v1647
        %v1699 = vpack.c.bf16 %v1693, %v1693
        %1700 = vst [vmem:[#allocation2 + $0x4] sm:$0xf] %v1698
        %1701 = vst [vmem:[#allocation2 + $0x14] sm:$0xf] %v1699
        %1702 = vmatprep.subr.bf16.mxu0 0
        %1703 = vmatpush1.bf16.xpose.msra.mxu0 %v1271
        %1704 = vmatprep.subr.bf16.mxu0 0
        %1705 = vmatpush1.bf16.xpose.msra.mxu0 0
        %1706 = vmatprep.subr.bf16.mxu0 0
        %1707 = vmatpush1.bf16.xpose.msra.mxu0 0
        %1708 = vmatprep.subr.bf16.mxu0 0
        %1709 = vmatpush1.bf16.xpose.msra.mxu0 0
        %1710 = vmatprep.subr.bf16.mxu0 0
        %1711 = vmatpush1.bf16.xpose.msra.mxu0 0
        %1712 = vmatprep.subr.bf16.mxu0 0
        %1713 = vmatpush1.bf16.xpose.msra.mxu0 0
        %1714 = vmatprep.subr.bf16.mxu0 0
        %1715 = vmatpush1.bf16.xpose.msra.mxu0 0
        %1716 = vmatprep.subr.bf16.mxu0 0
        %1717 = vmatpush1.bf16.xpose.msra.mxu0 0
        %1718 = vmatprep.subr.bf16.mxu0 0
        %1719 = vmatpush1.bf16.xpose.msra.mxu0 0
        %1720 = vmatprep.subr.bf16.mxu0 0
        %1721 = vmatpush1.bf16.xpose.msra.mxu0 0
        %1722 = vmatprep.subr.bf16.mxu0 0
        %1723 = vmatpush1.bf16.xpose.msra.mxu0 0
        %1724 = vmatprep.subr.bf16.mxu0 0
        %1725 = vmatpush1.bf16.xpose.msra.mxu0 0
        %1726 = vmatprep.subr.bf16.mxu0 0
        %1727 = vmatpush1.bf16.xpose.msra.mxu0 0
        %1728 = vmatprep.subr.bf16.mxu0 0
        %1729 = vmatpush1.bf16.xpose.msra.mxu0 0
        %1730 = vmatprep.subr.bf16.mxu0 0
        %1731 = vmatpush1.bf16.xpose.msra.mxu0 0
        %1732 = vmatprep.subr.bf16.mxu0 0
        %1733 = vmatpush1.bf16.xpose.msra.mxu0 0
        %1734 = vmatprep.mubr.bf16.mxu0 0
        %1735 = vmatmul.mubr.bf16.gmra.mrb[0].mxu0 %v1267
        %v1736 = vpop.f32.mrb[0].mxu0
        %v1737 = vadd.f32 %v1294, %v1736
        %v1738 = vpop.f32.mrb[0].mxu0
        %v1739 = vpop.f32.mrb[0].mxu0
        %v1740 = vpop.f32.mrb[0].mxu0
        %1741 = vdwg.mxu0
        %1742 = vmatprep.subr.bf16.mxu0 0
        %1743 = vmatpush1.bf16.xpose.msra.mxu0 %v1283
        %1744 = vmatprep.subr.bf16.mxu0 0
        %1745 = vmatpush1.bf16.xpose.msra.mxu0 0
        %1746 = vmatprep.subr.bf16.mxu0 0
        %1747 = vmatpush1.bf16.xpose.msra.mxu0 0
        %1748 = vmatprep.subr.bf16.mxu0 0
        %1749 = vmatpush1.bf16.xpose.msra.mxu0 0
        %1750 = vmatprep.subr.bf16.mxu0 0
        %1751 = vmatpush1.bf16.xpose.msra.mxu0 0
        %1752 = vmatprep.subr.bf16.mxu0 0
        %1753 = vmatpush1.bf16.xpose.msra.mxu0 0
        %1754 = vmatprep.subr.bf16.mxu0 0
        %1755 = vmatpush1.bf16.xpose.msra.mxu0 0
        %1756 = vmatprep.subr.bf16.mxu0 0
        %1757 = vmatpush1.bf16.xpose.msra.mxu0 0
        %1758 = vmatprep.subr.bf16.mxu0 0
        %1759 = vmatpush1.bf16.xpose.msra.mxu0 0
        %1760 = vmatprep.subr.bf16.mxu0 0
        %1761 = vmatpush1.bf16.xpose.msra.mxu0 0
        %1762 = vmatprep.subr.bf16.mxu0 0
        %1763 = vmatpush1.bf16.xpose.msra.mxu0 0
        %1764 = vmatprep.subr.bf16.mxu0 0
        %1765 = vmatpush1.bf16.xpose.msra.mxu0 0
        %1766 = vmatprep.subr.bf16.mxu0 0
        %1767 = vmatpush1.bf16.xpose.msra.mxu0 0
        %1768 = vmatprep.subr.bf16.mxu0 0
        %1769 = vmatpush1.bf16.xpose.msra.mxu0 0
        %1770 = vmatprep.subr.bf16.mxu0 0
        %1771 = vmatpush1.bf16.xpose.msra.mxu0 0
        %1772 = vmatprep.subr.bf16.mxu0 0
        %1773 = vmatpush1.bf16.xpose.msra.mxu0 0
        %1774 = vmatprep.mubr.bf16.mxu0 0
        %1775 = vmatmul.mubr.bf16.gmra.mrb[0].mxu0 %v1279
        %v1776 = vpop.f32.mrb[0].mxu0
        %v1777 = vadd.f32 %v1294, %v1776
        %v1778 = vpop.f32.mrb[0].mxu0
        %v1779 = vpop.f32.mrb[0].mxu0
        %v1780 = vpop.f32.mrb[0].mxu0
        %1781 = vdwg.mxu0
        %v1782 = vsel %vm1375, %v1737, -inf
        %1783 = vmax.xlane.f32.xlu0 %v1782
        %v1784 = vpop.xlane.xlu0 %1783
        %v1785 = vsel %vm1375, %v1777, -inf
        %1786 = vmax.xlane.f32.xlu0 %v1785
        %v1787 = vpop.xlane.xlu0 %1786
        %v1788 = vsub.f32 %v1737, %v1784
        %v1789 = vsub.f32 %v1777, %v1787
        %v1790 = vmul.f32 %v1788, 1.442695
        %v1791 = vpow.pop %v1790
        %v1792 = vmul.f32 %v1789, 1.442695
        %v1793 = vpow.pop %v1792
        %v1794 = vsel %vm1375, %v1791, 0.0
        %1795 = vadd.xlane.f32.xlu0 %v1794
        %v1796 = vpop.xlane.xlu0 %1795
        %v1797 = vsel %vm1375, %v1793, 0.0
        %1798 = vadd.xlane.f32.xlu0 %v1797
        %v1799 = vpop.xlane.xlu0 %1798
        %v1800 = vrcp.pop %v1796
        %v1801 = vmul.f32 %v1791, %v1800
        %v1802 = vrcp.pop %v1799
        %v1803 = vmul.f32 %v1793, %v1802
        %s1804 = scalar_lea.vmem %s842, 16 [#allocation24]
        %1805 = vst.msk [vmem:[%s1804] sm:$0xff] %vm1375, %v1801
        %1806 = vst.msk [vmem:[%s1804 + $0x20] sm:$0xff] %vm1375, %v1803
        %v1807 = vpack.c.bf16 %v1801, %v1801
        %v1808 = vpack.c.bf16 %v1803, %v1803
        %v1810 = vsel %vm1375, %v1807, 0
        %v1813 = vsel %vm1405, %v1275, 0
        %1815 = vmatprep.subr.bf16.mxu0 0
        %1816 = vmatpush1.bf16.msra.mxu0 %v1813
        %1817 = vmatprep.subr.bf16.mxu0 0
        %1818 = vmatpush1.bf16.msra.mxu0 0
        %1819 = vmatprep.subr.bf16.mxu0 0
        %1820 = vmatpush1.bf16.msra.mxu0 0
        %1821 = vmatprep.subr.bf16.mxu0 0
        %1822 = vmatpush1.bf16.msra.mxu0 0
        %1823 = vmatprep.subr.bf16.mxu0 0
        %1824 = vmatpush1.bf16.msra.mxu0 0
        %1825 = vmatprep.subr.bf16.mxu0 0
        %1826 = vmatpush1.bf16.msra.mxu0 0
        %1827 = vmatprep.subr.bf16.mxu0 0
        %1828 = vmatpush1.bf16.msra.mxu0 0
        %1829 = vmatprep.subr.bf16.mxu0 0
        %1830 = vmatpush1.bf16.msra.mxu0 0
        %1831 = vmatprep.subr.bf16.mxu0 0
        %1832 = vmatpush1.bf16.msra.mxu0 0
        %1833 = vmatprep.subr.bf16.mxu0 0
        %1834 = vmatpush1.bf16.msra.mxu0 0
        %1835 = vmatprep.subr.bf16.mxu0 0
        %1836 = vmatpush1.bf16.msra.mxu0 0
        %1837 = vmatprep.subr.bf16.mxu0 0
        %1838 = vmatpush1.bf16.msra.mxu0 0
        %1839 = vmatprep.subr.bf16.mxu0 0
        %1840 = vmatpush1.bf16.msra.mxu0 0
        %1841 = vmatprep.subr.bf16.mxu0 0
        %1842 = vmatpush1.bf16.msra.mxu0 0
        %1843 = vmatprep.subr.bf16.mxu0 0
        %1844 = vmatpush1.bf16.msra.mxu0 0
        %1845 = vmatprep.subr.bf16.mxu0 0
        %1846 = vmatpush1.bf16.msra.mxu0 0
        %1847 = vmatprep.mubr.bf16.mxu0 0
        %1848 = vmatmul.mubr.bf16.gmra.mrb[0].mxu0 %v1810
        %v1849 = vpop.f32.mrb[0].mxu0
        %v1850 = vadd.f32 0.0, %v1849
        %v1851 = vpop.f32.mrb[0].mxu0
        %v1852 = vpop.f32.mrb[0].mxu0
        %v1853 = vpop.f32.mrb[0].mxu0
        %1854 = vdwg.mxu0
        %v1856 = vsel %vm1375, %v1808, 0
        %v1859 = vsel %vm1405, %v1287, 0
        %1861 = vmatprep.subr.bf16.mxu0 0
        %1862 = vmatpush1.bf16.msra.mxu0 %v1859
        %1863 = vmatprep.subr.bf16.mxu0 0
        %1864 = vmatpush1.bf16.msra.mxu0 0
        %1865 = vmatprep.subr.bf16.mxu0 0
        %1866 = vmatpush1.bf16.msra.mxu0 0
        %1867 = vmatprep.subr.bf16.mxu0 0
        %1868 = vmatpush1.bf16.msra.mxu0 0
        %1869 = vmatprep.subr.bf16.mxu0 0
        %1870 = vmatpush1.bf16.msra.mxu0 0
        %1871 = vmatprep.subr.bf16.mxu0 0
        %1872 = vmatpush1.bf16.msra.mxu0 0
        %1873 = vmatprep.subr.bf16.mxu0 0
        %1874 = vmatpush1.bf16.msra.mxu0 0
        %1875 = vmatprep.subr.bf16.mxu0 0
        %1876 = vmatpush1.bf16.msra.mxu0 0
        %1877 = vmatprep.subr.bf16.mxu0 0
        %1878 = vmatpush1.bf16.msra.mxu0 0
        %1879 = vmatprep.subr.bf16.mxu0 0
        %1880 = vmatpush1.bf16.msra.mxu0 0
        %1881 = vmatprep.subr.bf16.mxu0 0
        %1882 = vmatpush1.bf16.msra.mxu0 0
        %1883 = vmatprep.subr.bf16.mxu0 0
        %1884 = vmatpush1.bf16.msra.mxu0 0
        %1885 = vmatprep.subr.bf16.mxu0 0
        %1886 = vmatpush1.bf16.msra.mxu0 0
        %1887 = vmatprep.subr.bf16.mxu0 0
        %1888 = vmatpush1.bf16.msra.mxu0 0
        %1889 = vmatprep.subr.bf16.mxu0 0
        %1890 = vmatpush1.bf16.msra.mxu0 0
        %1891 = vmatprep.subr.bf16.mxu0 0
        %1892 = vmatpush1.bf16.msra.mxu0 0
        %1893 = vmatprep.mubr.bf16.mxu0 0
        %1894 = vmatmul.mubr.bf16.gmra.mrb[0].mxu0 %v1856
        %v1895 = vpop.f32.mrb[0].mxu0
        %v1896 = vadd.f32 0.0, %v1895
        %v1897 = vpop.f32.mrb[0].mxu0
        %v1898 = vpop.f32.mrb[0].mxu0
        %v1899 = vpop.f32.mrb[0].mxu0
        %1900 = vdwg.mxu0
        %v1901 = vpack.c.bf16 %v1850, %v1850
        %v1902 = vpack.c.bf16 %v1896, %v1896
        %1903 = vst [vmem:[#allocation2 + $0x8] sm:$0xf] %v1901
        %1904 = vst [vmem:[#allocation2 + $0x18] sm:$0xf] %v1902
        %1905 = vmatprep.subr.bf16.mxu0 0
        %1906 = vmatpush1.bf16.xpose.msra.mxu0 %v1272
        %1907 = vmatprep.subr.bf16.mxu0 0
        %1908 = vmatpush1.bf16.xpose.msra.mxu0 0
        %1909 = vmatprep.subr.bf16.mxu0 0
        %1910 = vmatpush1.bf16.xpose.msra.mxu0 0
        %1911 = vmatprep.subr.bf16.mxu0 0
        %1912 = vmatpush1.bf16.xpose.msra.mxu0 0
        %1913 = vmatprep.subr.bf16.mxu0 0
        %1914 = vmatpush1.bf16.xpose.msra.mxu0 0
        %1915 = vmatprep.subr.bf16.mxu0 0
        %1916 = vmatpush1.bf16.xpose.msra.mxu0 0
        %1917 = vmatprep.subr.bf16.mxu0 0
        %1918 = vmatpush1.bf16.xpose.msra.mxu0 0
        %1919 = vmatprep.subr.bf16.mxu0 0
        %1920 = vmatpush1.bf16.xpose.msra.mxu0 0
        %1921 = vmatprep.subr.bf16.mxu0 0
        %1922 = vmatpush1.bf16.xpose.msra.mxu0 0
        %1923 = vmatprep.subr.bf16.mxu0 0
        %1924 = vmatpush1.bf16.xpose.msra.mxu0 0
        %1925 = vmatprep.subr.bf16.mxu0 0
        %1926 = vmatpush1.bf16.xpose.msra.mxu0 0
        %1927 = vmatprep.subr.bf16.mxu0 0
        %1928 = vmatpush1.bf16.xpose.msra.mxu0 0
        %1929 = vmatprep.subr.bf16.mxu0 0
        %1930 = vmatpush1.bf16.xpose.msra.mxu0 0
        %1931 = vmatprep.subr.bf16.mxu0 0
        %1932 = vmatpush1.bf16.xpose.msra.mxu0 0
        %1933 = vmatprep.subr.bf16.mxu0 0
        %1934 = vmatpush1.bf16.xpose.msra.mxu0 0
        %1935 = vmatprep.subr.bf16.mxu0 0
        %1936 = vmatpush1.bf16.xpose.msra.mxu0 0
        %1937 = vmatprep.mubr.bf16.mxu0 0
        %1938 = vmatmul.mubr.bf16.gmra.mrb[0].mxu0 %v1268
        %v1939 = vpop.f32.mrb[0].mxu0
        %v1940 = vadd.f32 %v1294, %v1939
        %v1941 = vpop.f32.mrb[0].mxu0
        %v1942 = vpop.f32.mrb[0].mxu0
        %v1943 = vpop.f32.mrb[0].mxu0
        %1944 = vdwg.mxu0
        %1945 = vmatprep.subr.bf16.mxu0 0
        %1946 = vmatpush1.bf16.xpose.msra.mxu0 %v1284
        %1947 = vmatprep.subr.bf16.mxu0 0
        %1948 = vmatpush1.bf16.xpose.msra.mxu0 0
        %1949 = vmatprep.subr.bf16.mxu0 0
        %1950 = vmatpush1.bf16.xpose.msra.mxu0 0
        %1951 = vmatprep.subr.bf16.mxu0 0
        %1952 = vmatpush1.bf16.xpose.msra.mxu0 0
        %1953 = vmatprep.subr.bf16.mxu0 0
        %1954 = vmatpush1.bf16.xpose.msra.mxu0 0
        %1955 = vmatprep.subr.bf16.mxu0 0
        %1956 = vmatpush1.bf16.xpose.msra.mxu0 0
        %1957 = vmatprep.subr.bf16.mxu0 0
        %1958 = vmatpush1.bf16.xpose.msra.mxu0 0
        %1959 = vmatprep.subr.bf16.mxu0 0
        %1960 = vmatpush1.bf16.xpose.msra.mxu0 0
        %1961 = vmatprep.subr.bf16.mxu0 0
        %1962 = vmatpush1.bf16.xpose.msra.mxu0 0
        %1963 = vmatprep.subr.bf16.mxu0 0
        %1964 = vmatpush1.bf16.xpose.msra.mxu0 0
        %1965 = vmatprep.subr.bf16.mxu0 0
        %1966 = vmatpush1.bf16.xpose.msra.mxu0 0
        %1967 = vmatprep.subr.bf16.mxu0 0
        %1968 = vmatpush1.bf16.xpose.msra.mxu0 0
        %1969 = vmatprep.subr.bf16.mxu0 0
        %1970 = vmatpush1.bf16.xpose.msra.mxu0 0
        %1971 = vmatprep.subr.bf16.mxu0 0
        %1972 = vmatpush1.bf16.xpose.msra.mxu0 0
        %1973 = vmatprep.subr.bf16.mxu0 0
        %1974 = vmatpush1.bf16.xpose.msra.mxu0 0
        %1975 = vmatprep.subr.bf16.mxu0 0
        %1976 = vmatpush1.bf16.xpose.msra.mxu0 0
        %1977 = vmatprep.mubr.bf16.mxu0 0
        %1978 = vmatmul.mubr.bf16.gmra.mrb[0].mxu0 %v1280
        %v1979 = vpop.f32.mrb[0].mxu0
        %v1980 = vadd.f32 %v1294, %v1979
        %v1981 = vpop.f32.mrb[0].mxu0
        %v1982 = vpop.f32.mrb[0].mxu0
        %v1983 = vpop.f32.mrb[0].mxu0
        %1984 = vdwg.mxu0
        %v1985 = vsel %vm1375, %v1940, -inf
        %1986 = vmax.xlane.f32.xlu0 %v1985
        %v1987 = vpop.xlane.xlu0 %1986
        %v1988 = vsel %vm1375, %v1980, -inf
        %1989 = vmax.xlane.f32.xlu0 %v1988
        %v1990 = vpop.xlane.xlu0 %1989
        %v1991 = vsub.f32 %v1940, %v1987
        %v1992 = vsub.f32 %v1980, %v1990
        %v1993 = vmul.f32 %v1991, 1.442695
        %v1994 = vpow.pop %v1993
        %v1995 = vmul.f32 %v1992, 1.442695
        %v1996 = vpow.pop %v1995
        %v1997 = vsel %vm1375, %v1994, 0.0
        %1998 = vadd.xlane.f32.xlu0 %v1997
        %v1999 = vpop.xlane.xlu0 %1998
        %v2000 = vsel %vm1375, %v1996, 0.0
        %2001 = vadd.xlane.f32.xlu0 %v2000
        %v2002 = vpop.xlane.xlu0 %2001
        %v2003 = vrcp.pop %v1999
        %v2004 = vmul.f32 %v1994, %v2003
        %v2005 = vrcp.pop %v2002
        %v2006 = vmul.f32 %v1996, %v2005
        %s2007 = scalar_lea.vmem %s842, 24 [#allocation24]
        %2008 = vst.msk [vmem:[%s2007] sm:$0xff] %vm1375, %v2004
        %2009 = vst.msk [vmem:[%s2007 + $0x20] sm:$0xff] %vm1375, %v2006
        %v2010 = vpack.c.bf16 %v2004, %v2004
        %v2011 = vpack.c.bf16 %v2006, %v2006
        %v2013 = vsel %vm1375, %v2010, 0
        %v2016 = vsel %vm1405, %v1276, 0
        %2018 = vmatprep.subr.bf16.mxu0 0
        %2019 = vmatpush1.bf16.msra.mxu0 %v2016
        %2020 = vmatprep.subr.bf16.mxu0 0
        %2021 = vmatpush1.bf16.msra.mxu0 0
        %2022 = vmatprep.subr.bf16.mxu0 0
        %2023 = vmatpush1.bf16.msra.mxu0 0
        %2024 = vmatprep.subr.bf16.mxu0 0
        %2025 = vmatpush1.bf16.msra.mxu0 0
        %2026 = vmatprep.subr.bf16.mxu0 0
        %2027 = vmatpush1.bf16.msra.mxu0 0
        %2028 = vmatprep.subr.bf16.mxu0 0
        %2029 = vmatpush1.bf16.msra.mxu0 0
        %2030 = vmatprep.subr.bf16.mxu0 0
        %2031 = vmatpush1.bf16.msra.mxu0 0
        %2032 = vmatprep.subr.bf16.mxu0 0
        %2033 = vmatpush1.bf16.msra.mxu0 0
        %2034 = vmatprep.subr.bf16.mxu0 0
        %2035 = vmatpush1.bf16.msra.mxu0 0
        %2036 = vmatprep.subr.bf16.mxu0 0
        %2037 = vmatpush1.bf16.msra.mxu0 0
        %2038 = vmatprep.subr.bf16.mxu0 0
        %2039 = vmatpush1.bf16.msra.mxu0 0
        %2040 = vmatprep.subr.bf16.mxu0 0
        %2041 = vmatpush1.bf16.msra.mxu0 0
        %2042 = vmatprep.subr.bf16.mxu0 0
        %2043 = vmatpush1.bf16.msra.mxu0 0
        %2044 = vmatprep.subr.bf16.mxu0 0
        %2045 = vmatpush1.bf16.msra.mxu0 0
        %2046 = vmatprep.subr.bf16.mxu0 0
        %2047 = vmatpush1.bf16.msra.mxu0 0
        %2048 = vmatprep.subr.bf16.mxu0 0
        %2049 = vmatpush1.bf16.msra.mxu0 0
        %2050 = vmatprep.mubr.bf16.mxu0 0
        %2051 = vmatmul.mubr.bf16.gmra.mrb[0].mxu0 %v2013
        %v2052 = vpop.f32.mrb[0].mxu0
        %v2053 = vadd.f32 0.0, %v2052
        %v2054 = vpop.f32.mrb[0].mxu0
        %v2055 = vpop.f32.mrb[0].mxu0
        %v2056 = vpop.f32.mrb[0].mxu0
        %2057 = vdwg.mxu0
        %v2059 = vsel %vm1375, %v2011, 0
        %v2062 = vsel %vm1405, %v1288, 0
        %2064 = vmatprep.subr.bf16.mxu0 0
        %2065 = vmatpush1.bf16.msra.mxu0 %v2062
        %2066 = vmatprep.subr.bf16.mxu0 0
        %2067 = vmatpush1.bf16.msra.mxu0 0
        %2068 = vmatprep.subr.bf16.mxu0 0
        %2069 = vmatpush1.bf16.msra.mxu0 0
        %2070 = vmatprep.subr.bf16.mxu0 0
        %2071 = vmatpush1.bf16.msra.mxu0 0
        %2072 = vmatprep.subr.bf16.mxu0 0
        %2073 = vmatpush1.bf16.msra.mxu0 0
        %2074 = vmatprep.subr.bf16.mxu0 0
        %2075 = vmatpush1.bf16.msra.mxu0 0
        %2076 = vmatprep.subr.bf16.mxu0 0
        %2077 = vmatpush1.bf16.msra.mxu0 0
        %2078 = vmatprep.subr.bf16.mxu0 0
        %2079 = vmatpush1.bf16.msra.mxu0 0
        %2080 = vmatprep.subr.bf16.mxu0 0
        %2081 = vmatpush1.bf16.msra.mxu0 0
        %2082 = vmatprep.subr.bf16.mxu0 0
        %2083 = vmatpush1.bf16.msra.mxu0 0
        %2084 = vmatprep.subr.bf16.mxu0 0
        %2085 = vmatpush1.bf16.msra.mxu0 0
        %2086 = vmatprep.subr.bf16.mxu0 0
        %2087 = vmatpush1.bf16.msra.mxu0 0
        %2088 = vmatprep.subr.bf16.mxu0 0
        %2089 = vmatpush1.bf16.msra.mxu0 0
        %2090 = vmatprep.subr.bf16.mxu0 0
        %2091 = vmatpush1.bf16.msra.mxu0 0
        %2092 = vmatprep.subr.bf16.mxu0 0
        %2093 = vmatpush1.bf16.msra.mxu0 0
        %2094 = vmatprep.subr.bf16.mxu0 0
        %2095 = vmatpush1.bf16.msra.mxu0 0
        %2096 = vmatprep.mubr.bf16.mxu0 0
        %2097 = vmatmul.mubr.bf16.gmra.mrb[0].mxu0 %v2059
        %v2098 = vpop.f32.mrb[0].mxu0
        %v2099 = vadd.f32 0.0, %v2098
        %v2100 = vpop.f32.mrb[0].mxu0
        %v2101 = vpop.f32.mrb[0].mxu0
        %v2102 = vpop.f32.mrb[0].mxu0
        %2103 = vdwg.mxu0
        %v2104 = vpack.c.bf16 %v2053, %v2053
        %v2105 = vpack.c.bf16 %v2099, %v2099
        %2106 = vst [vmem:[#allocation2 + $0xc] sm:$0xf] %v2104
        %2107 = vst [vmem:[#allocation2 + $0x1c] sm:$0xf] %v2105
        %v2108 = vld [vmem:[#allocation2] sm:$0xff]
        %v2109 = vld [vmem:[#allocation2 + $0x8] sm:$0xff]
        %v2110 = vld [vmem:[#allocation2 + $0x10] sm:$0xff]
        %v2111 = vld [vmem:[#allocation2 + $0x18] sm:$0xff]
        %v2112 = vld [vmem:[%s683] sm:$0xf]
        %v2113 = vld [vmem:[%s683 + $0x4] sm:$0xf]
        %v2114 = vld [vmem:[%s683 + $0x8] sm:$0xf]
        %v2115 = vld [vmem:[%s683 + $0xc] sm:$0xf]
        %v2116 = vld [vmem:[%s683 + $0x10] sm:$0xf]
        %v2117 = vld [vmem:[%s683 + $0x14] sm:$0xf]
        %v2118 = vld [vmem:[%s683 + $0x18] sm:$0xf]
        %v2119 = vld [vmem:[%s683 + $0x1c] sm:$0xf]
        %v2120 = vld [vmem:[%s683 + $0x20] sm:$0xf]
        %v2121 = vld [vmem:[%s683 + $0x24] sm:$0xf]
        %v2122 = vld [vmem:[%s683 + $0x28] sm:$0xf]
        %v2123 = vld [vmem:[%s683 + $0x2c] sm:$0xf]
        %v2124 = vld [vmem:[%s683 + $0x30] sm:$0xf]
        %v2125 = vld [vmem:[%s683 + $0x34] sm:$0xf]
        %v2126 = vld [vmem:[%s683 + $0x38] sm:$0xf]
        %v2127 = vld [vmem:[%s683 + $0x3c] sm:$0xf]
        %v2128 = vld [vmem:[%s683 + $0x40] sm:$0xf]
        %v2129 = vld [vmem:[%s683 + $0x44] sm:$0xf]
        %v2130 = vld [vmem:[%s683 + $0x48] sm:$0xf]
        %v2131 = vld [vmem:[%s683 + $0x4c] sm:$0xf]
        %v2132 = vld [vmem:[%s683 + $0x50] sm:$0xf]
        %v2133 = vld [vmem:[%s683 + $0x54] sm:$0xf]
        %v2134 = vld [vmem:[%s683 + $0x58] sm:$0xf]
        %v2135 = vld [vmem:[%s683 + $0x5c] sm:$0xf]
        %v2136 = vld [vmem:[%s683 + $0x60] sm:$0xf]
        %v2137 = vld [vmem:[%s683 + $0x64] sm:$0xf]
        %v2138 = vld [vmem:[%s683 + $0x68] sm:$0xf]
        %v2139 = vld [vmem:[%s683 + $0x6c] sm:$0xf]
        %v2140 = vld [vmem:[%s683 + $0x70] sm:$0xf]
        %v2141 = vld [vmem:[%s683 + $0x74] sm:$0xf]
        %v2142 = vld [vmem:[%s683 + $0x78] sm:$0xf]
        %v2143 = vld [vmem:[%s683 + $0x7c] sm:$0xf]
        %v2144 = vld [vmem:[%s683 + $0x80] sm:$0xf]
        %v2145 = vld [vmem:[%s683 + $0x84] sm:$0xf]
        %v2146 = vld [vmem:[%s683 + $0x88] sm:$0xf]
        %v2147 = vld [vmem:[%s683 + $0x8c] sm:$0xf]
        %v2148 = vld [vmem:[%s683 + $0x90] sm:$0xf]
        %v2149 = vld [vmem:[%s683 + $0x94] sm:$0xf]
        %v2150 = vld [vmem:[%s683 + $0x98] sm:$0xf]
        %v2151 = vld [vmem:[%s683 + $0x9c] sm:$0xf]
        %v2152 = vld [vmem:[%s683 + $0xa0] sm:$0xf]
        %v2153 = vld [vmem:[%s683 + $0xa4] sm:$0xf]
        %v2154 = vld [vmem:[%s683 + $0xa8] sm:$0xf]
        %v2155 = vld [vmem:[%s683 + $0xac] sm:$0xf]
        %v2156 = vld [vmem:[%s683 + $0xb0] sm:$0xf]
        %v2157 = vld [vmem:[%s683 + $0xb4] sm:$0xf]
        %v2158 = vld [vmem:[%s683 + $0xb8] sm:$0xf]
        %v2159 = vld [vmem:[%s683 + $0xbc] sm:$0xf]
        %v2160 = vld [vmem:[%s683 + $0xc0] sm:$0xf]
        %v2161 = vld [vmem:[%s683 + $0xc4] sm:$0xf]
        %v2162 = vld [vmem:[%s683 + $0xc8] sm:$0xf]
        %v2163 = vld [vmem:[%s683 + $0xcc] sm:$0xf]
        %v2164 = vld [vmem:[%s683 + $0xd0] sm:$0xf]
        %v2165 = vld [vmem:[%s683 + $0xd4] sm:$0xf]
        %v2166 = vld [vmem:[%s683 + $0xd8] sm:$0xf]
        %v2167 = vld [vmem:[%s683 + $0xdc] sm:$0xf]
        %v2168 = vld [vmem:[%s683 + $0xe0] sm:$0xf]
        %v2169 = vld [vmem:[%s683 + $0xe4] sm:$0xf]
        %v2170 = vld [vmem:[%s683 + $0xe8] sm:$0xf]
        %v2171 = vld [vmem:[%s683 + $0xec] sm:$0xf]
        %v2172 = vld [vmem:[%s683 + $0xf0] sm:$0xf]
        %v2173 = vld [vmem:[%s683 + $0xf4] sm:$0xf]
        %v2174 = vld [vmem:[%s683 + $0xf8] sm:$0xf]
        %v2175 = vld [vmem:[%s683 + $0xfc] sm:$0xf]
        %v2176 = vld [vmem:[%s691] sm:$0x1]
        %v2178 = vlaneseq
        %v2179 = vshrl.u32 %v2178, 7
        %v2180 = vsub.s32 0, %v2179
        %v2181 = vrot.slane %v2176, %v2180
        %v2187 = vunpack.c.l.b16 %v2108
        %v2188 = vunpack.c.h.b16 %v2108
        %v2189 = vunpack.c.l.b16 %v2109
        %v2190 = vunpack.c.h.b16 %v2109
        %v2191 = vunpack.c.l.b16 %v2110
        %v2192 = vunpack.c.h.b16 %v2110
        %v2193 = vunpack.c.l.b16 %v2111
        %v2194 = vunpack.c.h.b16 %v2111
        %v2195 = vpack.c.b16 %v2191, %v2187
        %v2196 = vpack.c.b16 %v2192, %v2188
        %v2197 = vpack.c.b16 %v2193, %v2189
        %v2198 = vpack.c.b16 %v2194, %v2190
        %v2267 = vunpack.c.l.b16 %v2112
        %v2268 = vunpack.c.l.b16 %v2113
        %v2269 = vunpack.c.l.b16 %v2114
        %v2270 = vunpack.c.l.b16 %v2115
        %v2271 = vunpack.c.l.b16 %v2116
        %v2272 = vunpack.c.l.b16 %v2117
        %v2273 = vunpack.c.l.b16 %v2118
        %v2274 = vunpack.c.l.b16 %v2119
        %v2275 = vunpack.c.l.b16 %v2120
        %v2276 = vunpack.c.l.b16 %v2121
        %v2277 = vunpack.c.l.b16 %v2122
        %v2278 = vunpack.c.l.b16 %v2123
        %v2279 = vunpack.c.l.b16 %v2124
        %v2280 = vunpack.c.l.b16 %v2125
        %v2281 = vunpack.c.l.b16 %v2126
        %v2282 = vunpack.c.l.b16 %v2127
        %v2283 = vunpack.c.l.b16 %v2128
        %v2284 = vunpack.c.l.b16 %v2129
        %v2285 = vunpack.c.l.b16 %v2130
        %v2286 = vunpack.c.l.b16 %v2131
        %v2287 = vunpack.c.l.b16 %v2132
        %v2288 = vunpack.c.l.b16 %v2133
        %v2289 = vunpack.c.l.b16 %v2134
        %v2290 = vunpack.c.l.b16 %v2135
        %v2291 = vunpack.c.l.b16 %v2136
        %v2292 = vunpack.c.l.b16 %v2137
        %v2293 = vunpack.c.l.b16 %v2138
        %v2294 = vunpack.c.l.b16 %v2139
        %v2295 = vunpack.c.l.b16 %v2140
        %v2296 = vunpack.c.l.b16 %v2141
        %v2297 = vunpack.c.l.b16 %v2142
        %v2298 = vunpack.c.l.b16 %v2143
        %v2299 = vunpack.c.l.b16 %v2144
        %v2300 = vunpack.c.l.b16 %v2145
        %v2301 = vunpack.c.l.b16 %v2146
        %v2302 = vunpack.c.l.b16 %v2147
        %v2303 = vunpack.c.l.b16 %v2148
        %v2304 = vunpack.c.l.b16 %v2149
        %v2305 = vunpack.c.l.b16 %v2150
        %v2306 = vunpack.c.l.b16 %v2151
        %v2307 = vunpack.c.l.b16 %v2152
        %v2308 = vunpack.c.l.b16 %v2153
        %v2309 = vunpack.c.l.b16 %v2154
        %v2310 = vunpack.c.l.b16 %v2155
        %v2311 = vunpack.c.l.b16 %v2156
        %v2312 = vunpack.c.l.b16 %v2157
        %v2313 = vunpack.c.l.b16 %v2158
        %v2314 = vunpack.c.l.b16 %v2159
        %v2315 = vunpack.c.l.b16 %v2160
        %v2316 = vunpack.c.l.b16 %v2161
        %v2317 = vunpack.c.l.b16 %v2162
        %v2318 = vunpack.c.l.b16 %v2163
        %v2319 = vunpack.c.l.b16 %v2164
        %v2320 = vunpack.c.l.b16 %v2165
        %v2321 = vunpack.c.l.b16 %v2166
        %v2322 = vunpack.c.l.b16 %v2167
        %v2323 = vunpack.c.l.b16 %v2168
        %v2324 = vunpack.c.l.b16 %v2169
        %v2325 = vunpack.c.l.b16 %v2170
        %v2326 = vunpack.c.l.b16 %v2171
        %v2327 = vunpack.c.l.b16 %v2172
        %v2328 = vunpack.c.l.b16 %v2173
        %v2329 = vunpack.c.l.b16 %v2174
        %v2330 = vunpack.c.l.b16 %v2175
        %v2331 = vpack.c.b16 %v2268, %v2267
        %v2332 = vpack.c.b16 %v2270, %v2269
        %v2333 = vpack.c.b16 %v2272, %v2271
        %v2334 = vpack.c.b16 %v2274, %v2273
        %v2335 = vpack.c.b16 %v2276, %v2275
        %v2336 = vpack.c.b16 %v2278, %v2277
        %v2337 = vpack.c.b16 %v2280, %v2279
        %v2338 = vpack.c.b16 %v2282, %v2281
        %v2339 = vpack.c.b16 %v2284, %v2283
        %v2340 = vpack.c.b16 %v2286, %v2285
        %v2341 = vpack.c.b16 %v2288, %v2287
        %v2342 = vpack.c.b16 %v2290, %v2289
        %v2343 = vpack.c.b16 %v2292, %v2291
        %v2344 = vpack.c.b16 %v2294, %v2293
        %v2345 = vpack.c.b16 %v2296, %v2295
        %v2346 = vpack.c.b16 %v2298, %v2297
        %v2347 = vpack.c.b16 %v2300, %v2299
        %v2348 = vpack.c.b16 %v2302, %v2301
        %v2349 = vpack.c.b16 %v2304, %v2303
        %v2350 = vpack.c.b16 %v2306, %v2305
        %v2351 = vpack.c.b16 %v2308, %v2307
        %v2352 = vpack.c.b16 %v2310, %v2309
        %v2353 = vpack.c.b16 %v2312, %v2311
        %v2354 = vpack.c.b16 %v2314, %v2313
        %v2355 = vpack.c.b16 %v2316, %v2315
        %v2356 = vpack.c.b16 %v2318, %v2317
        %v2357 = vpack.c.b16 %v2320, %v2319
        %v2358 = vpack.c.b16 %v2322, %v2321
        %v2359 = vpack.c.b16 %v2324, %v2323
        %v2360 = vpack.c.b16 %v2326, %v2325
        %v2361 = vpack.c.b16 %v2328, %v2327
        %v2362 = vpack.c.b16 %v2330, %v2329
        %2395 = vmatprep.subr.bf16.mxu0 0
        %2396 = vmatpush1.bf16.msra.mxu0 %v2331
        %2397 = vmatprep.subr.bf16.mxu0 0
        %2398 = vmatpush1.bf16.msra.mxu0 %v2332
        %2399 = vmatprep.subr.bf16.mxu0 0
        %2400 = vmatpush1.bf16.msra.mxu0 %v2333
        %2401 = vmatprep.subr.bf16.mxu0 0
        %2402 = vmatpush1.bf16.msra.mxu0 %v2334
        %2403 = vmatprep.subr.bf16.mxu0 0
        %2404 = vmatpush1.bf16.msra.mxu0 %v2335
        %2405 = vmatprep.subr.bf16.mxu0 0
        %2406 = vmatpush1.bf16.msra.mxu0 %v2336
        %2407 = vmatprep.subr.bf16.mxu0 0
        %2408 = vmatpush1.bf16.msra.mxu0 %v2337
        %2409 = vmatprep.subr.bf16.mxu0 0
        %2410 = vmatpush1.bf16.msra.mxu0 %v2338
        %2411 = vmatprep.subr.bf16.mxu0 0
        %2412 = vmatpush1.bf16.msra.mxu0 %v2339
        %2413 = vmatprep.subr.bf16.mxu0 0
        %2414 = vmatpush1.bf16.msra.mxu0 %v2340
        %2415 = vmatprep.subr.bf16.mxu0 0
        %2416 = vmatpush1.bf16.msra.mxu0 %v2341
        %2417 = vmatprep.subr.bf16.mxu0 0
        %2418 = vmatpush1.bf16.msra.mxu0 %v2342
        %2419 = vmatprep.subr.bf16.mxu0 0
        %2420 = vmatpush1.bf16.msra.mxu0 %v2343
        %2421 = vmatprep.subr.bf16.mxu0 0
        %2422 = vmatpush1.bf16.msra.mxu0 %v2344
        %2423 = vmatprep.subr.bf16.mxu0 0
        %2424 = vmatpush1.bf16.msra.mxu0 %v2345
        %2425 = vmatprep.subr.bf16.mxu0 0
        %2426 = vmatpush1.bf16.msra.mxu0 %v2346
        %2427 = vmatprep.mubr.bf16.mxu0 %v2196
        %2428 = vmatmul.mubr.bf16.gmra.mrb[0].mxu0 %v2195
        %v2429 = vpop.f32.mrb[0].mxu0
        %v2430 = vadd.f32 %v2181, %v2429
        %v2431 = vpop.f32.mrb[0].mxu0
        %v2432 = vpop.f32.mrb[0].mxu0
        %v2433 = vadd.f32 %v2181, %v2432
        %v2434 = vpop.f32.mrb[0].mxu0
        %2435 = vdwg.mxu0
        %2436 = vmatprep.subr.bf16.mxu0 0
        %2437 = vmatpush1.bf16.msra.mxu0 %v2347
        %2438 = vmatprep.subr.bf16.mxu0 0
        %2439 = vmatpush1.bf16.msra.mxu0 %v2348
        %2440 = vmatprep.subr.bf16.mxu0 0
        %2441 = vmatpush1.bf16.msra.mxu0 %v2349
        %2442 = vmatprep.subr.bf16.mxu0 0
        %2443 = vmatpush1.bf16.msra.mxu0 %v2350
        %2444 = vmatprep.subr.bf16.mxu0 0
        %2445 = vmatpush1.bf16.msra.mxu0 %v2351
        %2446 = vmatprep.subr.bf16.mxu0 0
        %2447 = vmatpush1.bf16.msra.mxu0 %v2352
        %2448 = vmatprep.subr.bf16.mxu0 0
        %2449 = vmatpush1.bf16.msra.mxu0 %v2353
        %2450 = vmatprep.subr.bf16.mxu0 0
        %2451 = vmatpush1.bf16.msra.mxu0 %v2354
        %2452 = vmatprep.subr.bf16.mxu0 0
        %2453 = vmatpush1.bf16.msra.mxu0 %v2355
        %2454 = vmatprep.subr.bf16.mxu0 0
        %2455 = vmatpush1.bf16.msra.mxu0 %v2356
        %2456 = vmatprep.subr.bf16.mxu0 0
        %2457 = vmatpush1.bf16.msra.mxu0 %v2357
        %2458 = vmatprep.subr.bf16.mxu0 0
        %2459 = vmatpush1.bf16.msra.mxu0 %v2358
        %2460 = vmatprep.subr.bf16.mxu0 0
        %2461 = vmatpush1.bf16.msra.mxu0 %v2359
        %2462 = vmatprep.subr.bf16.mxu0 0
        %2463 = vmatpush1.bf16.msra.mxu0 %v2360
        %2464 = vmatprep.subr.bf16.mxu0 0
        %2465 = vmatpush1.bf16.msra.mxu0 %v2361
        %2466 = vmatprep.subr.bf16.mxu0 0
        %2467 = vmatpush1.bf16.msra.mxu0 %v2362
        %2468 = vmatprep.mubr.bf16.mxu0 %v2198
        %2469 = vmatmul.mubr.bf16.gmra.mrb[0].mxu0 %v2197
        %v2470 = vpop.f32.mrb[0].mxu0
        %v2471 = vadd.f32 %v2430, %v2470
        %v2472 = vpop.f32.mrb[0].mxu0
        %v2473 = vpop.f32.mrb[0].mxu0
        %v2474 = vadd.f32 %v2433, %v2473
        %v2475 = vpop.f32.mrb[0].mxu0
        %2476 = vdwg.mxu0
        %v2477 = vadd.f32 %v856, %v2471
        %v2478 = vadd.f32 %v857, %v2474
        %v2479 = vld [vmem:[%s733] sm:$0x1]
        %v2480 = vld [vmem:[%s741] sm:$0x1]
        %v2481 = vsel %vm1003, %v2477, 0.0
        %2482 = vadd.xlane.f32.xlu0 %v2481
        %v2483 = vpop.xlane.xlu0 %2482
        %v2484 = vsel %vm1003, %v2478, 0.0
        %2485 = vadd.xlane.f32.xlu0 %v2484
        %v2486 = vpop.xlane.xlu0 %2485
        %v2487 = vrcp.pop 32.0
        %v2488 = vmul.f32 %v2483, %v2487
        %v2489 = vmul.f32 %v2486, %v2487
        %v2490 = vsub.f32 %v2477, %v2488
        %v2491 = vsub.f32 %v2478, %v2489
        %v2492 = vmul.f32 %v2490, %v2490
        %v2493 = vmul.f32 %v2491, %v2491
        %v2494 = vsel %vm1003, %v2492, 0.0
        %2495 = vadd.xlane.f32.xlu0 %v2494
        %v2496 = vpop.xlane.xlu0 %2495
        %v2497 = vsel %vm1003, %v2493, 0.0
        %2498 = vadd.xlane.f32.xlu0 %v2497
        %v2499 = vpop.xlane.xlu0 %2498
        %v2500 = vmul.f32 %v2496, %v2487
        %v2501 = vmul.f32 %v2499, %v2487
        %v2502 = vadd.f32 %v2500, 1e-05
        %v2503 = vadd.f32 %v2501, 1e-05
        %v2504 = vrsqrt.pop %v2502
        %v2505 = vrsqrt.pop %v2503
        %v2506 = vmul.f32 %v2490, %v2504
        %v2507 = vmul.f32 %v2491, %v2505
        %v2509 = vlaneseq
        %v2510 = vshrl.u32 %v2509, 7
        %v2511 = vsub.s32 0, %v2510
        %v2512 = vrot.slane %v2479, %v2511
        %v2514 = vmul.f32 %v2506, %v2512
        %v2515 = vmul.f32 %v2507, %v2512
        %v2517 = vlaneseq
        %v2518 = vshrl.u32 %v2517, 7
        %v2519 = vsub.s32 0, %v2518
        %v2520 = vrot.slane %v2480, %v2519
        %v2522 = vadd.f32 %v2514, %v2520
        %v2523 = vadd.f32 %v2515, %v2520
        %v2524 = vpack.c.bf16 %v2523, %v2522
        %v2525 = vld [vmem:[%s700] sm:$0xf]
        %v2526 = vld [vmem:[%s700 + $0x4] sm:$0xf]
        %v2527 = vld [vmem:[%s700 + $0x8] sm:$0xf]
        %v2528 = vld [vmem:[%s700 + $0xc] sm:$0xf]
        %v2529 = vld [vmem:[%s708] sm:$0x1]
        %v2531 = vlaneseq
        %v2532 = vshrl.u32 %v2531, 7
        %v2533 = vsub.s32 0, %v2532
        %v2534 = vrot.slane %v2529, %v2533
        %v2540 = vunpack.c.l.b16 %v2525
        %v2541 = vunpack.c.l.b16 %v2526
        %v2542 = vunpack.c.l.b16 %v2527
        %v2543 = vunpack.c.l.b16 %v2528
        %v2544 = vpack.c.b16 %v2541, %v2540
        %v2545 = vpack.c.b16 %v2543, %v2542
        %v2549 = vsel %vm1003, %v2524, 0
        %2551 = vmatprep.subr.bf16.mxu0 0
        %2552 = vmatpush1.bf16.msra.mxu0 %v2544
        %2553 = vmatprep.subr.bf16.mxu0 0
        %2554 = vmatpush1.bf16.msra.mxu0 %v2545
        %2555 = vmatprep.subr.bf16.mxu0 0
        %2556 = vmatpush1.bf16.msra.mxu0 0
        %2557 = vmatprep.subr.bf16.mxu0 0
        %2558 = vmatpush1.bf16.msra.mxu0 0
        %2559 = vmatprep.subr.bf16.mxu0 0
        %2560 = vmatpush1.bf16.msra.mxu0 0
        %2561 = vmatprep.subr.bf16.mxu0 0
        %2562 = vmatpush1.bf16.msra.mxu0 0
        %2563 = vmatprep.subr.bf16.mxu0 0
        %2564 = vmatpush1.bf16.msra.mxu0 0
        %2565 = vmatprep.subr.bf16.mxu0 0
        %2566 = vmatpush1.bf16.msra.mxu0 0
        %2567 = vmatprep.subr.bf16.mxu0 0
        %2568 = vmatpush1.bf16.msra.mxu0 0
        %2569 = vmatprep.subr.bf16.mxu0 0
        %2570 = vmatpush1.bf16.msra.mxu0 0
        %2571 = vmatprep.subr.bf16.mxu0 0
        %2572 = vmatpush1.bf16.msra.mxu0 0
        %2573 = vmatprep.subr.bf16.mxu0 0
        %2574 = vmatpush1.bf16.msra.mxu0 0
        %2575 = vmatprep.subr.bf16.mxu0 0
        %2576 = vmatpush1.bf16.msra.mxu0 0
        %2577 = vmatprep.subr.bf16.mxu0 0
        %2578 = vmatpush1.bf16.msra.mxu0 0
        %2579 = vmatprep.subr.bf16.mxu0 0
        %2580 = vmatpush1.bf16.msra.mxu0 0
        %2581 = vmatprep.subr.bf16.mxu0 0
        %2582 = vmatpush1.bf16.msra.mxu0 0
        %2583 = vmatprep.mubr.bf16.mxu0 0
        %2584 = vmatmul.mubr.bf16.gmra.mrb[0].mxu0 %v2549
        %v2585 = vpop.f32.mrb[0].mxu0
        %v2586 = vadd.f32 %v2534, %v2585
        %v2587 = vpop.f32.mrb[0].mxu0
        %v2588 = vpop.f32.mrb[0].mxu0
        %v2589 = vadd.f32 %v2534, %v2588
        %v2590 = vpop.f32.mrb[0].mxu0
        %2591 = vdwg.mxu0
        %v2592 = vmax.f32 %v2586, 0.0
        %v2593 = vmax.f32 %v2589, 0.0
        %v2594 = vpack.c.bf16 %v2593, %v2592
        %v2595 = vld [vmem:[%s717] sm:$0xf]
        %v2596 = vld [vmem:[%s717 + $0x4] sm:$0xf]
        %v2597 = vld [vmem:[%s717 + $0x8] sm:$0xf]
        %v2598 = vld [vmem:[%s717 + $0xc] sm:$0xf]
        %v2599 = vld [vmem:[%s717 + $0x10] sm:$0xf]
        %v2600 = vld [vmem:[%s717 + $0x14] sm:$0xf]
        %v2601 = vld [vmem:[%s717 + $0x18] sm:$0xf]
        %v2602 = vld [vmem:[%s717 + $0x1c] sm:$0xf]
        %v2603 = vld [vmem:[%s717 + $0x20] sm:$0xf]
        %v2604 = vld [vmem:[%s717 + $0x24] sm:$0xf]
        %v2605 = vld [vmem:[%s717 + $0x28] sm:$0xf]
        %v2606 = vld [vmem:[%s717 + $0x2c] sm:$0xf]
        %v2607 = vld [vmem:[%s717 + $0x30] sm:$0xf]
        %v2608 = vld [vmem:[%s717 + $0x34] sm:$0xf]
        %v2609 = vld [vmem:[%s717 + $0x38] sm:$0xf]
        %v2610 = vld [vmem:[%s717 + $0x3c] sm:$0xf]
        %v2611 = vld [vmem:[%s725] sm:$0x1]
        %v2613 = vlaneseq
        %v2614 = vshrl.u32 %v2613, 7
        %v2615 = vsub.s32 0, %v2614
        %v2616 = vrot.slane %v2611, %v2615
        %v2634 = vunpack.c.l.b16 %v2595
        %v2635 = vunpack.c.l.b16 %v2596
        %v2636 = vunpack.c.l.b16 %v2597
        %v2637 = vunpack.c.l.b16 %v2598
        %v2638 = vunpack.c.l.b16 %v2599
        %v2639 = vunpack.c.l.b16 %v2600
        %v2640 = vunpack.c.l.b16 %v2601
        %v2641 = vunpack.c.l.b16 %v2602
        %v2642 = vunpack.c.l.b16 %v2603
        %v2643 = vunpack.c.l.b16 %v2604
        %v2644 = vunpack.c.l.b16 %v2605
        %v2645 = vunpack.c.l.b16 %v2606
        %v2646 = vunpack.c.l.b16 %v2607
        %v2647 = vunpack.c.l.b16 %v2608
        %v2648 = vunpack.c.l.b16 %v2609
        %v2649 = vunpack.c.l.b16 %v2610
        %v2650 = vpack.c.b16 %v2635, %v2634
        %v2651 = vpack.c.b16 %v2637, %v2636
        %v2652 = vpack.c.b16 %v2639, %v2638
        %v2653 = vpack.c.b16 %v2641, %v2640
        %v2654 = vpack.c.b16 %v2643, %v2642
        %v2655 = vpack.c.b16 %v2645, %v2644
        %v2656 = vpack.c.b16 %v2647, %v2646
        %v2657 = vpack.c.b16 %v2649, %v2648
        %2666 = vmatprep.subr.bf16.mxu0 0
        %2667 = vmatpush1.bf16.msra.mxu0 %v2650
        %2668 = vmatprep.subr.bf16.mxu0 0
        %2669 = vmatpush1.bf16.msra.mxu0 %v2651
        %2670 = vmatprep.subr.bf16.mxu0 0
        %2671 = vmatpush1.bf16.msra.mxu0 %v2652
        %2672 = vmatprep.subr.bf16.mxu0 0
        %2673 = vmatpush1.bf16.msra.mxu0 %v2653
        %2674 = vmatprep.subr.bf16.mxu0 0
        %2675 = vmatpush1.bf16.msra.mxu0 %v2654
        %2676 = vmatprep.subr.bf16.mxu0 0
        %2677 = vmatpush1.bf16.msra.mxu0 %v2655
        %2678 = vmatprep.subr.bf16.mxu0 0
        %2679 = vmatpush1.bf16.msra.mxu0 %v2656
        %2680 = vmatprep.subr.bf16.mxu0 0
        %2681 = vmatpush1.bf16.msra.mxu0 %v2657
        %2682 = vmatprep.subr.bf16.mxu0 0
        %2683 = vmatpush1.bf16.msra.mxu0 0
        %2684 = vmatprep.subr.bf16.mxu0 0
        %2685 = vmatpush1.bf16.msra.mxu0 0
        %2686 = vmatprep.subr.bf16.mxu0 0
        %2687 = vmatpush1.bf16.msra.mxu0 0
        %2688 = vmatprep.subr.bf16.mxu0 0
        %2689 = vmatpush1.bf16.msra.mxu0 0
        %2690 = vmatprep.subr.bf16.mxu0 0
        %2691 = vmatpush1.bf16.msra.mxu0 0
        %2692 = vmatprep.subr.bf16.mxu0 0
        %2693 = vmatpush1.bf16.msra.mxu0 0
        %2694 = vmatprep.subr.bf16.mxu0 0
        %2695 = vmatpush1.bf16.msra.mxu0 0
        %2696 = vmatprep.subr.bf16.mxu0 0
        %2697 = vmatpush1.bf16.msra.mxu0 0
        %2698 = vmatprep.mubr.bf16.mxu0 0
        %2699 = vmatmul.mubr.bf16.gmra.mrb[0].mxu0 %v2594
        %v2700 = vpop.f32.mrb[0].mxu0
        %v2701 = vadd.f32 %v2616, %v2700
        %v2702 = vpop.f32.mrb[0].mxu0
        %v2703 = vpop.f32.mrb[0].mxu0
        %v2704 = vadd.f32 %v2616, %v2703
        %v2705 = vpop.f32.mrb[0].mxu0
        %2706 = vdwg.mxu0
        %v2707 = vadd.f32 %v2522, %v2701
        %v2708 = vadd.f32 %v2523, %v2704
        %v2709 = vld [vmem:[%s749] sm:$0x1]
        %v2710 = vld [vmem:[%s757] sm:$0x1]
        %v2711 = vsel %vm1003, %v2707, 0.0
        %2712 = vadd.xlane.f32.xlu0 %v2711
        %v2713 = vpop.xlane.xlu0 %2712
        %v2714 = vsel %vm1003, %v2708, 0.0
        %2715 = vadd.xlane.f32.xlu0 %v2714
        %v2716 = vpop.xlane.xlu0 %2715
        %v2717 = vmul.f32 %v2713, %v2487
        %v2718 = vmul.f32 %v2716, %v2487
        %v2719 = vsub.f32 %v2707, %v2717
        %v2720 = vsub.f32 %v2708, %v2718
        %v2721 = vmul.f32 %v2719, %v2719
        %v2722 = vmul.f32 %v2720, %v2720
        %v2723 = vsel %vm1003, %v2721, 0.0
        %2724 = vadd.xlane.f32.xlu0 %v2723
        %v2725 = vpop.xlane.xlu0 %2724
        %v2726 = vsel %vm1003, %v2722, 0.0
        %2727 = vadd.xlane.f32.xlu0 %v2726
        %v2728 = vpop.xlane.xlu0 %2727
        %v2729 = vmul.f32 %v2725, %v2487
        %v2730 = vmul.f32 %v2728, %v2487
        %v2731 = vadd.f32 %v2729, 1e-05
        %v2732 = vadd.f32 %v2730, 1e-05
        %v2733 = vrsqrt.pop %v2731
        %v2734 = vrsqrt.pop %v2732
        %v2735 = vmul.f32 %v2719, %v2733
        %v2736 = vmul.f32 %v2720, %v2734
        %v2738 = vlaneseq
        %v2739 = vshrl.u32 %v2738, 7
        %v2740 = vsub.s32 0, %v2739
        %v2741 = vrot.slane %v2709, %v2740
        %v2743 = vmul.f32 %v2735, %v2741
        %v2744 = vmul.f32 %v2736, %v2741
        %v2746 = vlaneseq
        %v2747 = vshrl.u32 %v2746, 7
        %v2748 = vsub.s32 0, %v2747
        %v2749 = vrot.slane %v2710, %v2748
        %v2751 = vadd.f32 %v2743, %v2749
        %v2752 = vadd.f32 %v2744, %v2749
        %2753 = vst.msk [vmem:[#allocation23] sm:$0xff] %vm1003, %v2751
        %2754 = vst.msk [vmem:[#allocation23 + $0x8] sm:$0xff] %vm1003, %v2752
        %s2755 = sand.u32 %s408, 1
        %s2756 = scalar_lea.sflag [#allocation25], %s2755
        %s2757 = sand.u32 %s408, 1
        %s2758 = smul.addr %s2757, 64
        %s2759 = scalar_lea.vmem [#allocation24], %s2758
        // Predicated region
        $region121: #{tpu_custom_call.1} parent=67 // pred_check
          %p2760 = pneg %p390
        $region122: #{tpu_custom_call.1} parent=67 // pred_check_branch
          %2762 = sbr.rel (%p2760) target = $region124
        $region123: #{tpu_custom_call.1} parent=67 // pred_region
          %s2763 = smul.u32 2, %s52
          %s2765 = ssub.s32 256, 256
          %2766 = vsyncadd [#allocation5], %s2765
          %s2767 = smul.addr %s2763, 128
          %s2768 = scalar_lea.hbm %s12, %s2767
          %s2769 = sshll.u32 [#allocation23], 4
          %s2770 = int_to_ptr.vmem [resolvable:$true] %s2769
          %2775 = dma.vmem_to_hbm [thread:$0]  %s2770, 256, %s2768, [#allocation5], 128, 128, 8
        $region124: #{tpu_custom_call.1} parent=67 // pred_fallthru
          _
        // Predicated region
        $region125: #{tpu_custom_call.1} parent=67 // pred_check
          %p2776 = pneg %p418
        $region126: #{tpu_custom_call.1} parent=67 // pred_check_branch
          %2778 = sbr.rel (%p2776) target = $region128
        $region127: #{tpu_custom_call.1} parent=67 // pred_region
          #allocation27 [shape = 'u32[6]{0}', space=smem, size = 0x18, scoped, tag = 'DMA stride descriptor']
          %s2779 = smul.u32 2, %s52
          %s2781 = ssub.s32 1024, 1024
          %2782 = vsyncadd %s2756, %s2781
          %s2783 = smul.addr %s53, 4
          %s2784 = smul.addr %s2779, 8
          %s2785 = sadd.s32 %s2783, %s2784
          %s2786 = smul.addr %s2785, 128
          %s2787 = scalar_lea.hbm %s13, %s2786
          %s2789 = sshll.u32 1, 14
          %s2790 = sxor.u32 4294967295, %s2789
          %s2793 = sshll.u32 7, 18
          %s2794 = sxor.u32 4294967295, %s2793
          %s2795 = sand.u32 0, %s2794
          %s2797 = sor.u32 %s2795, 0
          %s2799 = sshll.u32 3, 24
          %s2800 = sxor.u32 4294967295, %s2799
          %s2801 = sand.u32 %s2797, %s2800
          %s2803 = sor.u32 %s2801, 0
          %s2804 = sshll.u32 %s2759, 4
          %s2805 = int_to_ptr.vmem [resolvable:$true] %s2804
          %2811 = sst [smem:[#allocation27]] 512
          %s2812 = scalar_lea.smem [#allocation27], 1
          %2813 = sst [smem:[%s2812]] 1024
          %s2814 = scalar_lea.smem [#allocation27], 2
          %2815 = sst [smem:[%s2814]] 4
          %s2816 = scalar_lea.smem [#allocation27], 3
          %2817 = sst [smem:[%s2816]] 128
          %s2818 = scalar_lea.smem [#allocation27], 4
          %2819 = sst [smem:[%s2818]] 128
          %s2820 = scalar_lea.smem [#allocation27], 5
          %2821 = sst [smem:[%s2820]] 8
          %2823 = dma.general %s2805, 1024, %s2787, %s2756, [#allocation26], [#allocation27], %s2803, 0
        $region128: #{tpu_custom_call.1} parent=67 // pred_fallthru
          _
        // Predicated region
        $region129: #{tpu_custom_call.1} parent=67 // pred_check
          %p2824 = pneg %p390
        $region130: #{tpu_custom_call.1} parent=67 // pred_check_branch
          %2826 = sbr.rel (%p2824) target = $region132
        $region131: #{tpu_custom_call.1} parent=67 // pred_region
          %2827 = dma.done [#allocation5], 256
        $region132: #{tpu_custom_call.1} parent=67 // pred_fallthru
          _
      $region68: #{tpu_custom_call.1} parent=5 // pred_fallthru
        _
      %p2828 = scmp.le.s32.totalorder 2, %s43
      // Predicated region
      $region133: #{tpu_custom_call.1} parent=5 // pred_check
        %p2829 = pneg %p2828
      $region134: #{tpu_custom_call.1} parent=5 // pred_check_branch
        %2831 = sbr.rel (%p2829) target = $region136
      $region135: #{tpu_custom_call.1} parent=5 // pred_region
        %s2832 = ssub.s32 %s43, 2
        // Predicated region
        $region137: #{tpu_custom_call.1} parent=135 // pred_check
          %p2833 = pneg %p424
        $region138: #{tpu_custom_call.1} parent=135 // pred_check_branch
          %2835 = sbr.rel (%p2833) target = $region140
        $region139: #{tpu_custom_call.1} parent=135 // pred_region
          %s2836 = sand.u32 %s409, 1
          %s2837 = scalar_lea.sflag [#allocation25], %s2836
          %s2838 = sand.u32 %s409, 1
          %s2839 = smul.addr %s2838, 64
          %s2840 = scalar_lea.vmem [#allocation24], %s2839
          %2841 = dma.done %s2837, 1024
        $region140: #{tpu_custom_call.1} parent=135 // pred_fallthru
          _
      $region136: #{tpu_custom_call.1} parent=5 // pred_fallthru
        _
    $region6: #{tpu_custom_call.1} parent=1 // loop_footer
      %s47 = sadd.s32 1, %s43
    $region7: #{tpu_custom_call.1} parent=1 // loop_footer_branch
      %42 = sbr.rel target = $region3
    $region8: #{tpu_custom_call.1} parent=1 // loop_exit
      _
    %2842 = vsyncpa [#allocation4], 1
    %s2843 = scalar_lea.sflag [#allocation4], 1
    %2844 = vsyncpa %s2843, 1
    %2845 = vsyncpa [#allocation7], 1
    %s2846 = scalar_lea.sflag [#allocation7], 1
    %2847 = vsyncpa %s2846, 1
    %2848 = vsyncpa [#allocation10], 1
    %s2849 = scalar_lea.sflag [#allocation10], 1
    %2850 = vsyncpa %s2849, 1
    %2851 = vsyncpa [#allocation13], 1
    %s2852 = scalar_lea.sflag [#allocation13], 1
    %2853 = vsyncpa %s2852, 1
    %2854 = vsyncpa [#allocation16], 1
    %s2855 = scalar_lea.sflag [#allocation16], 1
    %2856 = vsyncpa %s2855, 1
    %2857 = vsyncpa [#allocation19], 1
    %s2858 = scalar_lea.sflag [#allocation19], 1
    %2859 = vsyncpa %s2858, 1
    %2860 = vsyncpa [#allocation22], 1
    %s2861 = scalar_lea.sflag [#allocation22], 1
    %2862 = vsyncpa %s2861, 1
    %2863 = vsyncpa [#allocation5], 1
    %s2864 = scalar_lea.sflag [#allocation5], 1
    %2865 = vsyncpa %s2864, 1
    %2866 = vsyncpa [#allocation25], 1
    %s2867 = scalar_lea.sflag [#allocation25], 1
    %2868 = vsyncpa %s2867, 1

</llo_original>
